<compile_context>
chip_gen: v6e
topology: v6e:2x2x1
jax: 0.10.0
libtpu: 0.0.40
codegen_flags: <defaults>
</compile_context>

<pallas_src>
import jax
import jax.numpy as jnp
from jax import lax
from jax.experimental import pallas as pl
from jax.experimental.pallas import tpu as pltpu

_OUT_S = 8     # sublane extent of the per-block partial-loss tile
_OUT_L = 128   # lane extent of the per-block partial-loss tile (lane-dense)


def _log_sigmoid(x):
    # numerically stable: log(sigmoid(x)) = min(x, 0) - log1p(exp(-|x|))
    return jnp.minimum(x, 0.0) - jnp.log1p(jnp.exp(-jnp.abs(x)))


def _make_kernel(block_b, vocab, num_neg):
    def kernel(c_ids_ref, o_ids_ref, n_ids_ref, table_ref, out_ref):
        f32 = jnp.float32
        tbl = table_ref[...].astype(f32)                               # (V, E)

        # lane iota over the vocabulary, shared by every one-hot build
        iota_v = lax.broadcasted_iota(jnp.int32, (block_b, vocab), 1)

        # ---- fused embedding gather on the MXU: onehot(center) @ table -----
        c_onehot = (c_ids_ref[...] == iota_v).astype(f32)              # (B_blk, V)
        c = jnp.dot(c_onehot, tbl, preferred_element_type=f32)         # (B_blk, E)

        # ---- all pairwise scores in one MXU pass: c @ table.T ---------------
        scores = lax.dot_general(c, tbl, (((1,), (1,)), ((), ())),
                                 preferred_element_type=f32)           # (B_blk, V)

        # ---- positive pair: select outside-word column, log-sigmoid ---------
        o_onehot = (o_ids_ref[...] == iota_v).astype(f32)
        pos_score = jnp.sum(o_onehot * scores, axis=1, keepdims=True)  # (B_blk, 1)
        loss_rows = -_log_sigmoid(pos_score)

        # ---- negatives: K static one-hot selections (VPU mul + lane reduce) -
        neg_ids = n_ids_ref[...]                                       # (B_blk, K)
        for k in range(num_neg):                                       # K small, static unroll
            nk = neg_ids[:, k:k + 1]                                   # (B_blk, 1)
            sel = (nk == iota_v).astype(f32)
            neg_score = jnp.sum(sel * scores, axis=1, keepdims=True)   # (B_blk, 1)
            loss_rows = loss_rows - _log_sigmoid(-neg_score)

        # lane-dense, unmasked full-tile store of the per-block partial sum
        block_loss = jnp.sum(loss_rows)
        out_ref[...] = jnp.full((1, _OUT_S, _OUT_L), block_loss, f32)

    return kernel


def skipgram_word2vec_loss(embedding, center_words, outside_words, neg_ids,
                           *, block_b=128):
    """embedding: (V, E) f32; center/outside: (B,) int; neg_ids: (B, K) int."""
    V, E = embedding.shape
    B = center_words.shape[0]
    K = neg_ids.shape[1]

    block_b = min(block_b, B)
    # TODO(synk): a ragged last block (B % block_b != 0) would need masking.
    assert B % block_b == 0, "batch must be a multiple of block_b"
    num_blocks = B // block_b

    c2 = center_words.reshape(B, 1).astype(jnp.int32)
    o2 = outside_words.reshape(B, 1).astype(jnp.int32)
    n2 = neg_ids.reshape(B, K).astype(jnp.int32)

    # Generation-aware VMEM budget: working set (double-buffered table, lane-
    # padded index blocks, in-register temporaries) with 2x headroom, clamped
    # to 48 MiB so it is always safe under v7x's 64 MiB while not artificially
    # capping v5e/v6e when block_b is swept upward.
    est_bytes = 4 * (2 * V * E
                     + 2 * block_b * (2 + K) * 128
                     + block_b * E
                     + 6 * block_b * V
                     + 2 * _OUT_S * _OUT_L)
    vmem_limit = int(min(max(2 * est_bytes, 4 << 20), 48 << 20))

    cost = pl.CostEstimate(
        flops=B * (4 * V * E + 4 * (K + 1) * V),
        transcendentals=2 * B * (K + 1),
        bytes_accessed=4 * (V * E + B * (K + 2) + num_blocks * _OUT_S * _OUT_L),
    )

    partials = pl.pallas_call(
        _make_kernel(block_b, V, K),
        out_shape=jax.ShapeDtypeStruct((num_blocks, _OUT_S, _OUT_L), jnp.float32),
        grid=(num_blocks,),
        in_specs=[
            pl.BlockSpec((block_b, 1), lambda i: (i, 0)),   # center ids
            pl.BlockSpec((block_b, 1), lambda i: (i, 0)),   # outside ids
            pl.BlockSpec((block_b, K), lambda i: (i, 0)),   # negative ids
            # whole table resident in VMEM (constant block index -> no re-DMA)
            pl.BlockSpec((V, E), lambda i: (0, 0)),
        ],
        out_specs=pl.BlockSpec((1, _OUT_S, _OUT_L), lambda i: (i, 0, 0)),
        compiler_params=pltpu.CompilerParams(
            dimension_semantics=("parallel",),   # independent blocks -> 2 TCs on v7x
            vmem_limit_bytes=vmem_limit,
        ),
        cost_estimate=cost,
    )(c2, o2, n2, embedding)

    # every element of a block's tile holds the same partial sum; pick [0, 0]
    return jnp.sum(partials[:, 0, 0]) / B


def _reference_loss(embedding, center_words, outside_words, neg_ids):
    em_center = jnp.take(embedding, center_words, axis=0)
    em_outside = jnp.take(embedding, outside_words, axis=0)
    em_neg = jnp.take(embedding, neg_ids, axis=0)
    pos = jnp.sum(em_center * em_outside, axis=1)
    true_loss = -jax.nn.log_sigmoid(pos)
    neg_dot = -jnp.sum(em_neg * em_center[:, None, :], axis=-1)
    noise_loss = -jnp.sum(jax.nn.log_sigmoid(neg_dot), axis=1)
    return jnp.mean(true_loss + noise_loss)


if __name__ == "__main__":
    VOCAB = 64
    EMBED = 128
    BATCH = 256
    NEG = 10        # negative_samples
    BLOCK_B = 128   # rows per grid step -> 2 blocks (even: balances v7x's 2 TCs)

    key = jax.random.PRNGKey(0)
    k_emb, k_c, k_o, k_neg = jax.random.split(key, 4)

    # nn.Embedding(vocab, embed) with weight.data.uniform_(-1, 1)
    embedding = jax.random.uniform(
        k_emb, (VOCAB, EMBED), dtype=jnp.float32, minval=-1.0, maxval=1.0
    )

    center_words = jax.random.randint(k_c, (BATCH,), 0, VOCAB, dtype=jnp.int32)
    outside_words = jax.random.randint(k_o, (BATCH,), 0, VOCAB, dtype=jnp.int32)

    # TODO(synk): torch.multinomial(noise_dist) has no exact Pallas equivalent;
    # negative sampling is done with jax.random.categorical over the same
    # uniform noise distribution (sampling with replacement).
    noise_dist = jnp.ones((VOCAB,), dtype=jnp.float32)
    neg_ids = jax.random.categorical(
        k_neg, jnp.log(noise_dist), shape=(BATCH, NEG)
    ).astype(jnp.int32)

    loss = skipgram_word2vec_loss(
        embedding, center_words, outside_words, neg_ids, block_b=BLOCK_B
    )
    loss = jax.block_until_ready(loss)

    ref = _reference_loss(embedding, center_words, outside_words, neg_ids)
    # MXU matmuls accumulate in a different order than the elementwise
    # reference; allow a small tolerance.
    assert jnp.allclose(loss, ref, rtol=1e-4, atol=1e-4), (loss, ref)

    print("KERNEL_OK")
</pallas_src>

<mosaic_0001>
module attributes {stable_mosaic.version = 11 : i64} {
  func.func @kernel(%arg0: i32, %arg1: memref<128x1xi32, #tpu.memory_space<vmem>>, %arg2: memref<128x1xi32, #tpu.memory_space<vmem>>, %arg3: memref<128x10xi32, #tpu.memory_space<vmem>>, %arg4: memref<64x128xf32, #tpu.memory_space<vmem>>, %arg5: memref<1x8x128xf32, #tpu.memory_space<vmem>>) attributes {dimension_semantics = [#tpu.dimension_semantics<parallel>], iteration_bounds = array<i64: 2>, scalar_prefetch = 0 : i64, scratch_operands = 0 : i64, tpu.core_type = #tpu.core_type<tc>, window_params = [{transform_indices = @transform_0, window_bounds = array<i64: 128, 1>}, {transform_indices = @transform_1, window_bounds = array<i64: 128, 1>}, {transform_indices = @transform_2, window_bounds = array<i64: 128, 10>}, {pipeline_mode = #tpu.pipeline_mode<synchronous>, transform_indices = @transform_3, window_bounds = array<i64: 64, 128>}, {transform_indices = @transform_4, window_bounds = array<i64: 1, 8, 128>}]} {
    %c0 = arith.constant 0 : index
    %c0_0 = arith.constant 0 : index
    %0 = vector.load %arg4[%c0, %c0_0] : memref<64x128xf32, #tpu.memory_space<vmem>>, vector<64x128xf32>
    %1 = tpu.iota {dimensions = array<i32: 1>} : vector<128x64xi32>
    %c0_1 = arith.constant 0 : index
    %c0_2 = arith.constant 0 : index
    %2 = vector.load %arg1[%c0_1, %c0_2] : memref<128x1xi32, #tpu.memory_space<vmem>>, vector<128x1xi32>
    %3 = vector.broadcast %2 : vector<128x1xi32> to vector<128x64xi32>
    %4 = arith.cmpi eq, %3, %1 : vector<128x64xi32>
    %5 = arith.extui %4 : vector<128x64xi1> to vector<128x64xi32>
    %6 = arith.sitofp %5 : vector<128x64xi32> to vector<128x64xf32>
    %cst = arith.constant dense<0.000000e+00> : vector<128x128xf32>
    %7 = tpu.matmul %6, %0, %cst {dimension_numbers = #tpu.dot_dimension_numbers<[1], [0], [0], [1], [0, 0, 1, 1], [], []>} : vector<128x64xf32>, vector<64x128xf32>, vector<128x128xf32> -> vector<128x128xf32>
    %cst_3 = arith.constant dense<0.000000e+00> : vector<128x64xf32>
    %8 = tpu.matmul %7, %0, %cst_3 {dimension_numbers = #tpu.dot_dimension_numbers<[1], [1], [0], [0], [0, 0, 1, 0], [], []>} : vector<128x128xf32>, vector<64x128xf32>, vector<128x64xf32> -> vector<128x64xf32>
    %c0_4 = arith.constant 0 : index
    %c0_5 = arith.constant 0 : index
    %9 = vector.load %arg2[%c0_4, %c0_5] : memref<128x1xi32, #tpu.memory_space<vmem>>, vector<128x1xi32>
    %10 = vector.broadcast %9 : vector<128x1xi32> to vector<128x64xi32>
    %11 = arith.cmpi eq, %10, %1 : vector<128x64xi32>
    %12 = arith.extui %11 : vector<128x64xi1> to vector<128x64xi32>
    %13 = arith.sitofp %12 : vector<128x64xi32> to vector<128x64xf32>
    %14 = arith.mulf %13, %8 : vector<128x64xf32>
    %cst_6 = arith.constant dense<0.000000e+00> : vector<128xf32>
    %15 = vector.multi_reduction <add>, %14, %cst_6 [1] : vector<128x64xf32> to vector<128xf32>
    %16 = vector.shape_cast %15 : vector<128xf32> to vector<128x1xf32>
    %cst_7 = arith.constant 0.000000e+00 : f32
    %17 = vector.broadcast %cst_7 : f32 to vector<128x1xf32>
    %18 = arith.minimumf %16, %17 : vector<128x1xf32>
    %19 = math.absf %16 : vector<128x1xf32>
    %cst_8 = arith.constant 0.000000e+00 : f32
    %20 = vector.broadcast %cst_8 : f32 to vector<128x1xf32>
    %21 = arith.subf %20, %19 : vector<128x1xf32>
    %22 = math.exp %21 : vector<128x1xf32>
    %23 = math.log1p %22 : vector<128x1xf32>
    %24 = arith.subf %18, %23 : vector<128x1xf32>
    %cst_9 = arith.constant 0.000000e+00 : f32
    %25 = vector.broadcast %cst_9 : f32 to vector<128x1xf32>
    %26 = arith.subf %25, %24 : vector<128x1xf32>
    %c0_10 = arith.constant 0 : index
    %c0_11 = arith.constant 0 : index
    %27 = vector.load %arg3[%c0_10, %c0_11] : memref<128x10xi32, #tpu.memory_space<vmem>>, vector<128x10xi32>
    %28 = vector.extract_strided_slice %27 {offsets = [0, 0], sizes = [128, 1], strides = [1, 1]} : vector<128x10xi32> to vector<128x1xi32>
    %29 = vector.broadcast %28 : vector<128x1xi32> to vector<128x64xi32>
    %30 = arith.cmpi eq, %29, %1 : vector<128x64xi32>
    %31 = arith.extui %30 : vector<128x64xi1> to vector<128x64xi32>
    %32 = arith.sitofp %31 : vector<128x64xi32> to vector<128x64xf32>
    %33 = arith.mulf %32, %8 : vector<128x64xf32>
    %cst_12 = arith.constant dense<0.000000e+00> : vector<128xf32>
    %34 = vector.multi_reduction <add>, %33, %cst_12 [1] : vector<128x64xf32> to vector<128xf32>
    %35 = vector.shape_cast %34 : vector<128xf32> to vector<128x1xf32>
    %cst_13 = arith.constant 0.000000e+00 : f32
    %36 = vector.broadcast %cst_13 : f32 to vector<128x1xf32>
    %37 = arith.subf %36, %35 : vector<128x1xf32>
    %cst_14 = arith.constant 0.000000e+00 : f32
    %38 = vector.broadcast %cst_14 : f32 to vector<128x1xf32>
    %39 = arith.minimumf %37, %38 : vector<128x1xf32>
    %40 = math.absf %37 : vector<128x1xf32>
    %cst_15 = arith.constant 0.000000e+00 : f32
    %41 = vector.broadcast %cst_15 : f32 to vector<128x1xf32>
    %42 = arith.subf %41, %40 : vector<128x1xf32>
    %43 = math.exp %42 : vector<128x1xf32>
    %44 = math.log1p %43 : vector<128x1xf32>
    %45 = arith.subf %39, %44 : vector<128x1xf32>
    %46 = arith.subf %26, %45 : vector<128x1xf32>
    %47 = vector.extract_strided_slice %27 {offsets = [0, 1], sizes = [128, 1], strides = [1, 1]} : vector<128x10xi32> to vector<128x1xi32>
    %48 = vector.broadcast %47 : vector<128x1xi32> to vector<128x64xi32>
    %49 = arith.cmpi eq, %48, %1 : vector<128x64xi32>
    %50 = arith.extui %49 : vector<128x64xi1> to vector<128x64xi32>
    %51 = arith.sitofp %50 : vector<128x64xi32> to vector<128x64xf32>
    %52 = arith.mulf %51, %8 : vector<128x64xf32>
    %cst_16 = arith.constant dense<0.000000e+00> : vector<128xf32>
    %53 = vector.multi_reduction <add>, %52, %cst_16 [1] : vector<128x64xf32> to vector<128xf32>
    %54 = vector.shape_cast %53 : vector<128xf32> to vector<128x1xf32>
    %cst_17 = arith.constant 0.000000e+00 : f32
    %55 = vector.broadcast %cst_17 : f32 to vector<128x1xf32>
    %56 = arith.subf %55, %54 : vector<128x1xf32>
    %cst_18 = arith.constant 0.000000e+00 : f32
    %57 = vector.broadcast %cst_18 : f32 to vector<128x1xf32>
    %58 = arith.minimumf %56, %57 : vector<128x1xf32>
    %59 = math.absf %56 : vector<128x1xf32>
    %cst_19 = arith.constant 0.000000e+00 : f32
    %60 = vector.broadcast %cst_19 : f32 to vector<128x1xf32>
    %61 = arith.subf %60, %59 : vector<128x1xf32>
    %62 = math.exp %61 : vector<128x1xf32>
    %63 = math.log1p %62 : vector<128x1xf32>
    %64 = arith.subf %58, %63 : vector<128x1xf32>
    %65 = arith.subf %46, %64 : vector<128x1xf32>
    %66 = vector.extract_strided_slice %27 {offsets = [0, 2], sizes = [128, 1], strides = [1, 1]} : vector<128x10xi32> to vector<128x1xi32>
    %67 = vector.broadcast %66 : vector<128x1xi32> to vector<128x64xi32>
    %68 = arith.cmpi eq, %67, %1 : vector<128x64xi32>
    %69 = arith.extui %68 : vector<128x64xi1> to vector<128x64xi32>
    %70 = arith.sitofp %69 : vector<128x64xi32> to vector<128x64xf32>
    %71 = arith.mulf %70, %8 : vector<128x64xf32>
    %cst_20 = arith.constant dense<0.000000e+00> : vector<128xf32>
    %72 = vector.multi_reduction <add>, %71, %cst_20 [1] : vector<128x64xf32> to vector<128xf32>
    %73 = vector.shape_cast %72 : vector<128xf32> to vector<128x1xf32>
    %cst_21 = arith.constant 0.000000e+00 : f32
    %74 = vector.broadcast %cst_21 : f32 to vector<128x1xf32>
    %75 = arith.subf %74, %73 : vector<128x1xf32>
    %cst_22 = arith.constant 0.000000e+00 : f32
    %76 = vector.broadcast %cst_22 : f32 to vector<128x1xf32>
    %77 = arith.minimumf %75, %76 : vector<128x1xf32>
    %78 = math.absf %75 : vector<128x1xf32>
    %cst_23 = arith.constant 0.000000e+00 : f32
    %79 = vector.broadcast %cst_23 : f32 to vector<128x1xf32>
    %80 = arith.subf %79, %78 : vector<128x1xf32>
    %81 = math.exp %80 : vector<128x1xf32>
    %82 = math.log1p %81 : vector<128x1xf32>
    %83 = arith.subf %77, %82 : vector<128x1xf32>
    %84 = arith.subf %65, %83 : vector<128x1xf32>
    %85 = vector.extract_strided_slice %27 {offsets = [0, 3], sizes = [128, 1], strides = [1, 1]} : vector<128x10xi32> to vector<128x1xi32>
    %86 = vector.broadcast %85 : vector<128x1xi32> to vector<128x64xi32>
    %87 = arith.cmpi eq, %86, %1 : vector<128x64xi32>
    %88 = arith.extui %87 : vector<128x64xi1> to vector<128x64xi32>
    %89 = arith.sitofp %88 : vector<128x64xi32> to vector<128x64xf32>
    %90 = arith.mulf %89, %8 : vector<128x64xf32>
    %cst_24 = arith.constant dense<0.000000e+00> : vector<128xf32>
    %91 = vector.multi_reduction <add>, %90, %cst_24 [1] : vector<128x64xf32> to vector<128xf32>
    %92 = vector.shape_cast %91 : vector<128xf32> to vector<128x1xf32>
    %cst_25 = arith.constant 0.000000e+00 : f32
    %93 = vector.broadcast %cst_25 : f32 to vector<128x1xf32>
    %94 = arith.subf %93, %92 : vector<128x1xf32>
    %cst_26 = arith.constant 0.000000e+00 : f32
    %95 = vector.broadcast %cst_26 : f32 to vector<128x1xf32>
    %96 = arith.minimumf %94, %95 : vector<128x1xf32>
    %97 = math.absf %94 : vector<128x1xf32>
    %cst_27 = arith.constant 0.000000e+00 : f32
    %98 = vector.broadcast %cst_27 : f32 to vector<128x1xf32>
    %99 = arith.subf %98, %97 : vector<128x1xf32>
    %100 = math.exp %99 : vector<128x1xf32>
    %101 = math.log1p %100 : vector<128x1xf32>
    %102 = arith.subf %96, %101 : vector<128x1xf32>
    %103 = arith.subf %84, %102 : vector<128x1xf32>
    %104 = vector.extract_strided_slice %27 {offsets = [0, 4], sizes = [128, 1], strides = [1, 1]} : vector<128x10xi32> to vector<128x1xi32>
    %105 = vector.broadcast %104 : vector<128x1xi32> to vector<128x64xi32>
    %106 = arith.cmpi eq, %105, %1 : vector<128x64xi32>
    %107 = arith.extui %106 : vector<128x64xi1> to vector<128x64xi32>
    %108 = arith.sitofp %107 : vector<128x64xi32> to vector<128x64xf32>
    %109 = arith.mulf %108, %8 : vector<128x64xf32>
    %cst_28 = arith.constant dense<0.000000e+00> : vector<128xf32>
    %110 = vector.multi_reduction <add>, %109, %cst_28 [1] : vector<128x64xf32> to vector<128xf32>
    %111 = vector.shape_cast %110 : vector<128xf32> to vector<128x1xf32>
    %cst_29 = arith.constant 0.000000e+00 : f32
    %112 = vector.broadcast %cst_29 : f32 to vector<128x1xf32>
    %113 = arith.subf %112, %111 : vector<128x1xf32>
    %cst_30 = arith.constant 0.000000e+00 : f32
    %114 = vector.broadcast %cst_30 : f32 to vector<128x1xf32>
    %115 = arith.minimumf %113, %114 : vector<128x1xf32>
    %116 = math.absf %113 : vector<128x1xf32>
    %cst_31 = arith.constant 0.000000e+00 : f32
    %117 = vector.broadcast %cst_31 : f32 to vector<128x1xf32>
    %118 = arith.subf %117, %116 : vector<128x1xf32>
    %119 = math.exp %118 : vector<128x1xf32>
    %120 = math.log1p %119 : vector<128x1xf32>
    %121 = arith.subf %115, %120 : vector<128x1xf32>
    %122 = arith.subf %103, %121 : vector<128x1xf32>
    %123 = vector.extract_strided_slice %27 {offsets = [0, 5], sizes = [128, 1], strides = [1, 1]} : vector<128x10xi32> to vector<128x1xi32>
    %124 = vector.broadcast %123 : vector<128x1xi32> to vector<128x64xi32>
    %125 = arith.cmpi eq, %124, %1 : vector<128x64xi32>
    %126 = arith.extui %125 : vector<128x64xi1> to vector<128x64xi32>
    %127 = arith.sitofp %126 : vector<128x64xi32> to vector<128x64xf32>
    %128 = arith.mulf %127, %8 : vector<128x64xf32>
    %cst_32 = arith.constant dense<0.000000e+00> : vector<128xf32>
    %129 = vector.multi_reduction <add>, %128, %cst_32 [1] : vector<128x64xf32> to vector<128xf32>
    %130 = vector.shape_cast %129 : vector<128xf32> to vector<128x1xf32>
    %cst_33 = arith.constant 0.000000e+00 : f32
    %131 = vector.broadcast %cst_33 : f32 to vector<128x1xf32>
    %132 = arith.subf %131, %130 : vector<128x1xf32>
    %cst_34 = arith.constant 0.000000e+00 : f32
    %133 = vector.broadcast %cst_34 : f32 to vector<128x1xf32>
    %134 = arith.minimumf %132, %133 : vector<128x1xf32>
    %135 = math.absf %132 : vector<128x1xf32>
    %cst_35 = arith.constant 0.000000e+00 : f32
    %136 = vector.broadcast %cst_35 : f32 to vector<128x1xf32>
    %137 = arith.subf %136, %135 : vector<128x1xf32>
    %138 = math.exp %137 : vector<128x1xf32>
    %139 = math.log1p %138 : vector<128x1xf32>
    %140 = arith.subf %134, %139 : vector<128x1xf32>
    %141 = arith.subf %122, %140 : vector<128x1xf32>
    %142 = vector.extract_strided_slice %27 {offsets = [0, 6], sizes = [128, 1], strides = [1, 1]} : vector<128x10xi32> to vector<128x1xi32>
    %143 = vector.broadcast %142 : vector<128x1xi32> to vector<128x64xi32>
    %144 = arith.cmpi eq, %143, %1 : vector<128x64xi32>
    %145 = arith.extui %144 : vector<128x64xi1> to vector<128x64xi32>
    %146 = arith.sitofp %145 : vector<128x64xi32> to vector<128x64xf32>
    %147 = arith.mulf %146, %8 : vector<128x64xf32>
    %cst_36 = arith.constant dense<0.000000e+00> : vector<128xf32>
    %148 = vector.multi_reduction <add>, %147, %cst_36 [1] : vector<128x64xf32> to vector<128xf32>
    %149 = vector.shape_cast %148 : vector<128xf32> to vector<128x1xf32>
    %cst_37 = arith.constant 0.000000e+00 : f32
    %150 = vector.broadcast %cst_37 : f32 to vector<128x1xf32>
    %151 = arith.subf %150, %149 : vector<128x1xf32>
    %cst_38 = arith.constant 0.000000e+00 : f32
    %152 = vector.broadcast %cst_38 : f32 to vector<128x1xf32>
    %153 = arith.minimumf %151, %152 : vector<128x1xf32>
    %154 = math.absf %151 : vector<128x1xf32>
    %cst_39 = arith.constant 0.000000e+00 : f32
    %155 = vector.broadcast %cst_39 : f32 to vector<128x1xf32>
    %156 = arith.subf %155, %154 : vector<128x1xf32>
    %157 = math.exp %156 : vector<128x1xf32>
    %158 = math.log1p %157 : vector<128x1xf32>
    %159 = arith.subf %153, %158 : vector<128x1xf32>
    %160 = arith.subf %141, %159 : vector<128x1xf32>
    %161 = vector.extract_strided_slice %27 {offsets = [0, 7], sizes = [128, 1], strides = [1, 1]} : vector<128x10xi32> to vector<128x1xi32>
    %162 = vector.broadcast %161 : vector<128x1xi32> to vector<128x64xi32>
    %163 = arith.cmpi eq, %162, %1 : vector<128x64xi32>
    %164 = arith.extui %163 : vector<128x64xi1> to vector<128x64xi32>
    %165 = arith.sitofp %164 : vector<128x64xi32> to vector<128x64xf32>
    %166 = arith.mulf %165, %8 : vector<128x64xf32>
    %cst_40 = arith.constant dense<0.000000e+00> : vector<128xf32>
    %167 = vector.multi_reduction <add>, %166, %cst_40 [1] : vector<128x64xf32> to vector<128xf32>
    %168 = vector.shape_cast %167 : vector<128xf32> to vector<128x1xf32>
    %cst_41 = arith.constant 0.000000e+00 : f32
    %169 = vector.broadcast %cst_41 : f32 to vector<128x1xf32>
    %170 = arith.subf %169, %168 : vector<128x1xf32>
    %cst_42 = arith.constant 0.000000e+00 : f32
    %171 = vector.broadcast %cst_42 : f32 to vector<128x1xf32>
    %172 = arith.minimumf %170, %171 : vector<128x1xf32>
    %173 = math.absf %170 : vector<128x1xf32>
    %cst_43 = arith.constant 0.000000e+00 : f32
    %174 = vector.broadcast %cst_43 : f32 to vector<128x1xf32>
    %175 = arith.subf %174, %173 : vector<128x1xf32>
    %176 = math.exp %175 : vector<128x1xf32>
    %177 = math.log1p %176 : vector<128x1xf32>
    %178 = arith.subf %172, %177 : vector<128x1xf32>
    %179 = arith.subf %160, %178 : vector<128x1xf32>
    %180 = vector.extract_strided_slice %27 {offsets = [0, 8], sizes = [128, 1], strides = [1, 1]} : vector<128x10xi32> to vector<128x1xi32>
    %181 = vector.broadcast %180 : vector<128x1xi32> to vector<128x64xi32>
    %182 = arith.cmpi eq, %181, %1 : vector<128x64xi32>
    %183 = arith.extui %182 : vector<128x64xi1> to vector<128x64xi32>
    %184 = arith.sitofp %183 : vector<128x64xi32> to vector<128x64xf32>
    %185 = arith.mulf %184, %8 : vector<128x64xf32>
    %cst_44 = arith.constant dense<0.000000e+00> : vector<128xf32>
    %186 = vector.multi_reduction <add>, %185, %cst_44 [1] : vector<128x64xf32> to vector<128xf32>
    %187 = vector.shape_cast %186 : vector<128xf32> to vector<128x1xf32>
    %cst_45 = arith.constant 0.000000e+00 : f32
    %188 = vector.broadcast %cst_45 : f32 to vector<128x1xf32>
    %189 = arith.subf %188, %187 : vector<128x1xf32>
    %cst_46 = arith.constant 0.000000e+00 : f32
    %190 = vector.broadcast %cst_46 : f32 to vector<128x1xf32>
    %191 = arith.minimumf %189, %190 : vector<128x1xf32>
    %192 = math.absf %189 : vector<128x1xf32>
    %cst_47 = arith.constant 0.000000e+00 : f32
    %193 = vector.broadcast %cst_47 : f32 to vector<128x1xf32>
    %194 = arith.subf %193, %192 : vector<128x1xf32>
    %195 = math.exp %194 : vector<128x1xf32>
    %196 = math.log1p %195 : vector<128x1xf32>
    %197 = arith.subf %191, %196 : vector<128x1xf32>
    %198 = arith.subf %179, %197 : vector<128x1xf32>
    %199 = vector.extract_strided_slice %27 {offsets = [0, 9], sizes = [128, 1], strides = [1, 1]} : vector<128x10xi32> to vector<128x1xi32>
    %200 = vector.broadcast %199 : vector<128x1xi32> to vector<128x64xi32>
    %201 = arith.cmpi eq, %200, %1 : vector<128x64xi32>
    %202 = arith.extui %201 : vector<128x64xi1> to vector<128x64xi32>
    %203 = arith.sitofp %202 : vector<128x64xi32> to vector<128x64xf32>
    %204 = arith.mulf %203, %8 : vector<128x64xf32>
    %cst_48 = arith.constant dense<0.000000e+00> : vector<128xf32>
    %205 = vector.multi_reduction <add>, %204, %cst_48 [1] : vector<128x64xf32> to vector<128xf32>
    %206 = vector.shape_cast %205 : vector<128xf32> to vector<128x1xf32>
    %cst_49 = arith.constant 0.000000e+00 : f32
    %207 = vector.broadcast %cst_49 : f32 to vector<128x1xf32>
    %208 = arith.subf %207, %206 : vector<128x1xf32>
    %cst_50 = arith.constant 0.000000e+00 : f32
    %209 = vector.broadcast %cst_50 : f32 to vector<128x1xf32>
    %210 = arith.minimumf %208, %209 : vector<128x1xf32>
    %211 = math.absf %208 : vector<128x1xf32>
    %cst_51 = arith.constant 0.000000e+00 : f32
    %212 = vector.broadcast %cst_51 : f32 to vector<128x1xf32>
    %213 = arith.subf %212, %211 : vector<128x1xf32>
    %214 = math.exp %213 : vector<128x1xf32>
    %215 = math.log1p %214 : vector<128x1xf32>
    %216 = arith.subf %210, %215 : vector<128x1xf32>
    %217 = arith.subf %198, %216 : vector<128x1xf32>
    %218 = vector.shape_cast %217 : vector<128x1xf32> to vector<1x128x1xf32>
    %cst_52 = arith.constant dense<0.000000e+00> : vector<1xf32>
    %219 = vector.multi_reduction <add>, %218, %cst_52 [1, 2] : vector<1x128x1xf32> to vector<1xf32>
    %220 = vector.shape_cast %219 : vector<1xf32> to vector<1x1x1xf32>
    %221 = vector.extract %220[0, 0, 0] : f32 from vector<1x1x1xf32>
    %222 = vector.broadcast %221 : f32 to vector<1x8x128xf32>
    %c0_53 = arith.constant 0 : index
    %c0_54 = arith.constant 0 : index
    %c0_55 = arith.constant 0 : index
    %223 = vector.load %arg5[%c0_53, %c0_54, %c0_55] : memref<1x8x128xf32, #tpu.memory_space<vmem>>, vector<1x8x128xf32>
    tpu.vector_store %arg5[%c0_53, %c0_54, %c0_55], %222 {strides = array<i32>} : memref<1x8x128xf32, #tpu.memory_space<vmem>>, vector<1x8x128xf32>,
    return
  }
  func.func @transform_0(%arg0: i32) -> (i32, i32) {
    %c0_i32 = arith.constant 0 : i32
    %c0_i32_0 = arith.constant 0 : i32
    return %arg0, %c0_i32 : i32, i32
  }
  func.func @transform_1(%arg0: i32) -> (i32, i32) {
    %c0_i32 = arith.constant 0 : i32
    %c0_i32_0 = arith.constant 0 : i32
    return %arg0, %c0_i32 : i32, i32
  }
  func.func @transform_2(%arg0: i32) -> (i32, i32) {
    %c0_i32 = arith.constant 0 : i32
    %c0_i32_0 = arith.constant 0 : i32
    return %arg0, %c0_i32 : i32, i32
  }
  func.func @transform_3(%arg0: i32) -> (i32, i32) {
    %c0_i32 = arith.constant 0 : i32
    %c0_i32_0 = arith.constant 0 : i32
    %c0_i32_1 = arith.constant 0 : i32
    return %c0_i32, %c0_i32_0 : i32, i32
  }
  func.func @transform_4(%arg0: i32) -> (i32, i32, i32) {
    %c0_i32 = arith.constant 0 : i32
    %c0_i32_0 = arith.constant 0 : i32
    %c0_i32_1 = arith.constant 0 : i32
    return %arg0, %c0_i32, %c0_i32_0 : i32, i32, i32
  }
}

</mosaic_0001>

<llo_original>
// kernel: tpu_custom_call.1
$region0: #{tpu_custom_call.1}
  #allocation0 [shape = 'u32[]', space=smem, size = 0x4, offset = 0x4, fixed_abs, tag = 'smem constant byte address 0x4 - core index']
  #allocation1 [shape = 'u32[144,128]{1,0:T(1,128)}', space=vmem, size = 0x12000, scoped, tag = 'internal scratch']
  %s0 = inlined_call_operand.vmem [shape: s32[256,1], index: 0, kind: input, shape index: {}]
  %s1 = inlined_call_operand.vmem [shape: s32[256,1], index: 1, kind: input, shape index: {}]
  %s2 = inlined_call_operand.vmem [shape: s32[256,10], index: 2, kind: input, shape index: {}]
  %s3 = inlined_call_operand.vmem [shape: f32[64,128], index: 3, kind: input, shape index: {}]
  %s4 = inlined_call_operand.hbm [shape: f32[2,8,128], index: 4, kind: output, shape index: {}]
  %s5 = sld [smem:[#allocation0]]
  $region49: #{tpu_custom_call.1} parent=0
    _
  %s7 = ssub.s32 1, %s5
  %s8 = scalar_select 0, %s7, %s5
  $region1: #{tpu_custom_call.1} parent=0
    #allocation2 [shape = 'u8[8192]{0}', space=vmem, size = 0x2000, scoped, tag = 'output window, operand 0']
    #allocation3 [shape = 's32[2]{0}', space=sflag, size = 0x8, scoped, tag = 'scoped memory for tpu_custom_call.1']
    %9 = vsyncpa [#allocation3], 0
    %s10 = scalar_lea.sflag [#allocation3], 1
    %11 = vsyncpa %s10, 0
    loop: start=0, step=1, limit=4
    $region2: #{tpu_custom_call.1} parent=1 // loop_pre_header
      _
    $region3: #{tpu_custom_call.1} parent=1 // loop_header
      %s13 = sphi 0, %s17
      %p14 = scmp.ge.s32.totalorder %s13, 4
      %s23 = sphi 0, %s25
      %s26 = sphi 0, %s23
      %s27 = sphi 0, %s26
      %s43 = sphi 0, %s27
      %s49 = sphi 0, %s51
      %s52 = sphi 0, %s49
      %s53 = sphi 0, %s52
      %s69 = sphi 0, %s53
      %s75 = sphi 0, %s77
      %s78 = sphi 0, %s75
      %s79 = sphi 0, %s78
      %s95 = sphi 0, %s79
      %s99 = sphi 0, %s99
      %s101 = sphi 0, %s99
      %s102 = sphi 0, %s101
      %s116 = sphi 0, %s102
      %s122 = sphi 0, %s124
      %s125 = sphi 0, %s122
      %s126 = sphi 0, %s125
      %s142 = sphi 0, %s126
    $region4: #{tpu_custom_call.1} parent=1 // loop_header_branch
      %16 = sbr.rel (%p14) target = $region8
    $region5: #{tpu_custom_call.1} parent=1 // loop_body
      %s18 = ssub.s32 %s13, 1
      %s19 = ssub.s32 %s13, 2
      %s20 = sadd.s32 %s13, 1
      %s21 = ssub.s32 %s13, %s20
      %p22 = scmp.eq.s32.totalorder %s21, 0
      %s24 = sadd.s32 %s23, 1
      %s25 = scalar_select %p22, %s23, %s24
      %p28 = pneg %p22
      %p29 = scmp.eq.s32.totalorder %s13, 1
      %p30 = por %p28, %p29
      %p31 = scmp.ne.s32.totalorder %s23, %s26
      %p32 = scmp.eq.s32.totalorder %s13, 0
      %p33 = por %p31, %p32
      %p34 = scmp.ne.s32.totalorder %s23, %s26
      %p35 = scmp.eq.s32.totalorder %s18, 1
      %p36 = por %p34, %p35
      %p37 = scmp.ne.s32.totalorder %s26, %s27
      %p38 = scmp.eq.s32.totalorder %s18, 0
      %p39 = por %p37, %p38
      %p40 = scmp.ne.s32.totalorder %s26, %s27
      %p41 = scmp.eq.s32.totalorder %s19, 1
      %p42 = por %p40, %p41
      %p44 = scmp.ne.s32.totalorder %s27, %s43
      %p45 = scmp.eq.s32.totalorder %s19, 0
      %p46 = por %p44, %p45
      %s47 = ssub.s32 %s13, %s20
      %p48 = scmp.eq.s32.totalorder %s47, 0
      %s50 = sadd.s32 %s49, 1
      %s51 = scalar_select %p48, %s49, %s50
      %p54 = pneg %p48
      %p55 = scmp.eq.s32.totalorder %s13, 1
      %p56 = por %p54, %p55
      %p57 = scmp.ne.s32.totalorder %s49, %s52
      %p58 = scmp.eq.s32.totalorder %s13, 0
      %p59 = por %p57, %p58
      %p60 = scmp.ne.s32.totalorder %s49, %s52
      %p61 = scmp.eq.s32.totalorder %s18, 1
      %p62 = por %p60, %p61
      %p63 = scmp.ne.s32.totalorder %s52, %s53
      %p64 = scmp.eq.s32.totalorder %s18, 0
      %p65 = por %p63, %p64
      %p66 = scmp.ne.s32.totalorder %s52, %s53
      %p67 = scmp.eq.s32.totalorder %s19, 1
      %p68 = por %p66, %p67
      %p70 = scmp.ne.s32.totalorder %s53, %s69
      %p71 = scmp.eq.s32.totalorder %s19, 0
      %p72 = por %p70, %p71
      %s73 = ssub.s32 %s13, %s20
      %p74 = scmp.eq.s32.totalorder %s73, 0
      %s76 = sadd.s32 %s75, 1
      %s77 = scalar_select %p74, %s75, %s76
      %p80 = pneg %p74
      %p81 = scmp.eq.s32.totalorder %s13, 1
      %p82 = por %p80, %p81
      %p83 = scmp.ne.s32.totalorder %s75, %s78
      %p84 = scmp.eq.s32.totalorder %s13, 0
      %p85 = por %p83, %p84
      %p86 = scmp.ne.s32.totalorder %s75, %s78
      %p87 = scmp.eq.s32.totalorder %s18, 1
      %p88 = por %p86, %p87
      %p89 = scmp.ne.s32.totalorder %s78, %s79
      %p90 = scmp.eq.s32.totalorder %s18, 0
      %p91 = por %p89, %p90
      %p92 = scmp.ne.s32.totalorder %s78, %s79
      %p93 = scmp.eq.s32.totalorder %s19, 1
      %p94 = por %p92, %p93
      %p96 = scmp.ne.s32.totalorder %s79, %s95
      %p97 = scmp.eq.s32.totalorder %s19, 0
      %p98 = por %p96, %p97
      %s100 = sadd.s32 %s99, 1
      %p103 = scmp.eq.s32.totalorder %s13, 1
      %p104 = scmp.ne.s32.totalorder %s99, %s101
      %p105 = scmp.eq.s32.totalorder %s13, 0
      %p106 = por %p104, %p105
      %p107 = scmp.ne.s32.totalorder %s99, %s101
      %p108 = scmp.eq.s32.totalorder %s18, 1
      %p109 = por %p107, %p108
      %p110 = scmp.ne.s32.totalorder %s101, %s102
      %p111 = scmp.eq.s32.totalorder %s18, 0
      %p112 = por %p110, %p111
      %p113 = scmp.ne.s32.totalorder %s101, %s102
      %p114 = scmp.eq.s32.totalorder %s19, 1
      %p115 = por %p113, %p114
      %p117 = scmp.ne.s32.totalorder %s102, %s116
      %p118 = scmp.eq.s32.totalorder %s19, 0
      %p119 = por %p117, %p118
      %s120 = ssub.s32 %s13, %s20
      %p121 = scmp.eq.s32.totalorder %s120, 0
      %s123 = sadd.s32 %s122, 1
      %s124 = scalar_select %p121, %s122, %s123
      %p127 = pneg %p121
      %p128 = scmp.eq.s32.totalorder %s13, 1
      %p129 = por %p127, %p128
      %p130 = scmp.ne.s32.totalorder %s122, %s125
      %p131 = scmp.eq.s32.totalorder %s13, 0
      %p132 = por %p130, %p131
      %p133 = scmp.ne.s32.totalorder %s122, %s125
      %p134 = scmp.eq.s32.totalorder %s18, 1
      %p135 = por %p133, %p134
      %p136 = scmp.ne.s32.totalorder %s125, %s126
      %p137 = scmp.eq.s32.totalorder %s18, 0
      %p138 = por %p136, %p137
      %p139 = scmp.ne.s32.totalorder %s125, %s126
      %p140 = scmp.eq.s32.totalorder %s19, 1
      %p141 = por %p139, %p140
      %p143 = scmp.ne.s32.totalorder %s126, %s142
      %p144 = scmp.eq.s32.totalorder %s19, 0
      %p145 = por %p143, %p144
      %p146 = scmp.le.s32.totalorder 1, %s13
      %p147 = scmp.lt.s32.totalorder %s13, 3
      %p148 = pnand %p146, %p147
      %p149 = pneg %p148
      // Predicated region
      $region9: #{tpu_custom_call.1} parent=5 // pred_check
        _
      $region10: #{tpu_custom_call.1} parent=5 // pred_check_branch
        %151 = sbr.rel (%p148) target = $region12
      $region11: #{tpu_custom_call.1} parent=5 // pred_region
        %s152 = ssub.s32 %s13, 1
        // Predicated region
        $region13: #{tpu_custom_call.1} parent=11 // pred_check
          %p153 = pneg %p112
        $region14: #{tpu_custom_call.1} parent=11 // pred_check_branch
          %155 = sbr.rel (%p153) target = $region16
        $region15: #{tpu_custom_call.1} parent=11 // pred_region
          _
        $region16: #{tpu_custom_call.1} parent=11 // pred_fallthru
          _
      $region12: #{tpu_custom_call.1} parent=5 // pred_fallthru
        _
      %p156 = scmp.lt.s32.totalorder %s13, 2
      // Predicated region
      $region17: #{tpu_custom_call.1} parent=5 // pred_check
        %p157 = pneg %p156
      $region18: #{tpu_custom_call.1} parent=5 // pred_check_branch
        %159 = sbr.rel (%p157) target = $region20
      $region19: #{tpu_custom_call.1} parent=5 // pred_region
        // Predicated region
        $region21: #{tpu_custom_call.1} parent=19 // pred_check
          %p160 = pneg %p33
        $region22: #{tpu_custom_call.1} parent=19 // pred_check_branch
          %162 = sbr.rel (%p160) target = $region24
        $region23: #{tpu_custom_call.1} parent=19 // pred_region
          %s163 = smul.u32 16, %s13
          %p164 = scmp.lt.s32.totalorder %s163, 31
          %s165 = scalar_select %p164, %s163, 31
          %s166 = smul.addr %s165, 8
          %s167 = scalar_lea.vmem %s0, %s166
          %s168 = smul.u32 16, %s13
        $region24: #{tpu_custom_call.1} parent=19 // pred_fallthru
          _
        // Predicated region
        $region25: #{tpu_custom_call.1} parent=19 // pred_check
          %p169 = pneg %p59
        $region26: #{tpu_custom_call.1} parent=19 // pred_check_branch
          %171 = sbr.rel (%p169) target = $region28
        $region27: #{tpu_custom_call.1} parent=19 // pred_region
          %s172 = smul.u32 16, %s13
          %p173 = scmp.lt.s32.totalorder %s172, 31
          %s174 = scalar_select %p173, %s172, 31
          %s175 = smul.addr %s174, 8
          %s176 = scalar_lea.vmem %s1, %s175
          %s177 = smul.u32 16, %s13
        $region28: #{tpu_custom_call.1} parent=19 // pred_fallthru
          _
        // Predicated region
        $region29: #{tpu_custom_call.1} parent=19 // pred_check
          %p178 = pneg %p85
        $region30: #{tpu_custom_call.1} parent=19 // pred_check_branch
          %180 = sbr.rel (%p178) target = $region32
        $region31: #{tpu_custom_call.1} parent=19 // pred_region
          %s181 = smul.u32 16, %s13
          %p182 = scmp.lt.s32.totalorder %s181, 31
          %s183 = scalar_select %p182, %s181, 31
          %s184 = smul.addr %s183, 8
          %s185 = scalar_lea.vmem %s2, %s184
          %s186 = smul.u32 16, %s13
        $region32: #{tpu_custom_call.1} parent=19 // pred_fallthru
          _
      $region20: #{tpu_custom_call.1} parent=5 // pred_fallthru
        _
      %p187 = scmp.le.s32.totalorder 1, %s13
      %p188 = scmp.lt.s32.totalorder %s13, 3
      %p189 = pnand %p187, %p188
      %p190 = pneg %p189
      // Predicated region
      $region33: #{tpu_custom_call.1} parent=5 // pred_check
        _
      $region34: #{tpu_custom_call.1} parent=5 // pred_check_branch
        %192 = sbr.rel (%p189) target = $region36
      $region35: #{tpu_custom_call.1} parent=5 // pred_region
        %s193 = ssub.s32 %s13, 1
        %s194 = smul.u32 16, %s18
        %p195 = scmp.lt.s32.totalorder %s194, 31
        %s196 = scalar_select %p195, %s194, 31
        %s197 = smul.addr %s196, 8
        %s198 = scalar_lea.vmem %s0, %s197
        %p199 = pneg %p39
        %p200 = pneg %p36
        %s201 = smul.u32 16, %s18
        %p202 = scmp.lt.s32.totalorder %s201, 31
        %s203 = scalar_select %p202, %s201, 31
        %s204 = smul.addr %s203, 8
        %s205 = scalar_lea.vmem %s1, %s204
        %p206 = pneg %p65
        %p207 = pneg %p62
        %s208 = smul.u32 16, %s18
        %p209 = scmp.lt.s32.totalorder %s208, 31
        %s210 = scalar_select %p209, %s208, 31
        %s211 = smul.addr %s210, 8
        %s212 = scalar_lea.vmem %s2, %s211
        %p213 = pneg %p91
        %p214 = pneg %p88
        %p215 = pneg %p112
        %p216 = pneg %p109
        %p217 = pneg %p138
        %p218 = pneg %p135
        %s219 = sand.u32 %s125, 1
        %s220 = scalar_lea.sflag [#allocation3], %s219
        %s221 = sand.u32 %s125, 1
        %s222 = smul.addr %s221, 8
        %s223 = scalar_lea.vmem [#allocation2], %s222
        %s224 = smul.u32 16, %s18
        %p225 = scmp.lt.s32.totalorder %s224, 31
        %s226 = scalar_select %p225, %s224, 31
        %s227 = smul.addr %s226, 8
        %s228 = scalar_lea.vmem %s0, %s227
        %s229 = smul.u32 16, %s18
        %s230 = smul.u32 16, %s18
        %p231 = scmp.lt.s32.totalorder %s230, 31
        %s232 = scalar_select %p231, %s230, 31
        %s233 = smul.addr %s232, 8
        %s234 = scalar_lea.vmem %s1, %s233
        %s235 = smul.u32 16, %s18
        %s236 = smul.u32 16, %s18
        %p237 = scmp.lt.s32.totalorder %s236, 31
        %s238 = scalar_select %p237, %s236, 31
        %s239 = smul.addr %s238, 8
        %s240 = scalar_lea.vmem %s2, %s239
        %s241 = smul.u32 16, %s18
        %v242 = vld [vmem:[%s3] sm:$0xff]
        %v243 = vld [vmem:[%s3 + $0x8] sm:$0xff]
        %v244 = vld [vmem:[%s3 + $0x10] sm:$0xff]
        %v245 = vld [vmem:[%s3 + $0x18] sm:$0xff]
        %v246 = vld [vmem:[%s3 + $0x20] sm:$0xff]
        %v247 = vld [vmem:[%s3 + $0x28] sm:$0xff]
        %v248 = vld [vmem:[%s3 + $0x30] sm:$0xff]
        %v249 = vld [vmem:[%s3 + $0x38] sm:$0xff]
        %v250 = vlaneseq
        %v251 = vand.u32 %v250, 127
        %v252 = vld [vmem:[%s228] sm:$0xff]
        %v253 = vld [vmem:[%s228 + $0x8] sm:$0xff]
        %v254 = vld [vmem:[%s228 + $0x10] sm:$0xff]
        %v255 = vld [vmem:[%s228 + $0x18] sm:$0xff]
        %v256 = vld [vmem:[%s228 + $0x20] sm:$0xff]
        %v257 = vld [vmem:[%s228 + $0x28] sm:$0xff]
        %v258 = vld [vmem:[%s228 + $0x30] sm:$0xff]
        %v259 = vld [vmem:[%s228 + $0x38] sm:$0xff]
        %v260 = vld [vmem:[%s228 + $0x40] sm:$0xff]
        %v261 = vld [vmem:[%s228 + $0x48] sm:$0xff]
        %v262 = vld [vmem:[%s228 + $0x50] sm:$0xff]
        %v263 = vld [vmem:[%s228 + $0x58] sm:$0xff]
        %v264 = vld [vmem:[%s228 + $0x60] sm:$0xff]
        %v265 = vld [vmem:[%s228 + $0x68] sm:$0xff]
        %v266 = vld [vmem:[%s228 + $0x70] sm:$0xff]
        %v267 = vld [vmem:[%s228 + $0x78] sm:$0xff]
        %268 = vset.pattern.permute.xlu0 0
        %269 = vperm.xlu0 %268, %v252
        %v270 = vpop.permute.xlu0 %269
        %271 = vset.pattern.permute.xlu0 0
        %272 = vperm.xlu0 %271, %v253
        %v273 = vpop.permute.xlu0 %272
        %274 = vset.pattern.permute.xlu0 0
        %275 = vperm.xlu0 %274, %v254
        %v276 = vpop.permute.xlu0 %275
        %277 = vset.pattern.permute.xlu0 0
        %278 = vperm.xlu0 %277, %v255
        %v279 = vpop.permute.xlu0 %278
        %280 = vset.pattern.permute.xlu0 0
        %281 = vperm.xlu0 %280, %v256
        %v282 = vpop.permute.xlu0 %281
        %283 = vset.pattern.permute.xlu0 0
        %284 = vperm.xlu0 %283, %v257
        %v285 = vpop.permute.xlu0 %284
        %286 = vset.pattern.permute.xlu0 0
        %287 = vperm.xlu0 %286, %v258
        %v288 = vpop.permute.xlu0 %287
        %289 = vset.pattern.permute.xlu0 0
        %290 = vperm.xlu0 %289, %v259
        %v291 = vpop.permute.xlu0 %290
        %292 = vset.pattern.permute.xlu0 0
        %293 = vperm.xlu0 %292, %v260
        %v294 = vpop.permute.xlu0 %293
        %295 = vset.pattern.permute.xlu0 0
        %296 = vperm.xlu0 %295, %v261
        %v297 = vpop.permute.xlu0 %296
        %298 = vset.pattern.permute.xlu0 0
        %299 = vperm.xlu0 %298, %v262
        %v300 = vpop.permute.xlu0 %299
        %301 = vset.pattern.permute.xlu0 0
        %302 = vperm.xlu0 %301, %v263
        %v303 = vpop.permute.xlu0 %302
        %304 = vset.pattern.permute.xlu0 0
        %305 = vperm.xlu0 %304, %v264
        %v306 = vpop.permute.xlu0 %305
        %307 = vset.pattern.permute.xlu0 0
        %308 = vperm.xlu0 %307, %v265
        %v309 = vpop.permute.xlu0 %308
        %310 = vset.pattern.permute.xlu0 0
        %311 = vperm.xlu0 %310, %v266
        %v312 = vpop.permute.xlu0 %311
        %313 = vset.pattern.permute.xlu0 0
        %314 = vperm.xlu0 %313, %v267
        %v315 = vpop.permute.xlu0 %314
        %vm316 = vcmp.eq.s32.totalorder %v270, %v251
        %vm317 = vcmp.eq.s32.totalorder %v273, %v251
        %vm318 = vcmp.eq.s32.totalorder %v276, %v251
        %vm319 = vcmp.eq.s32.totalorder %v279, %v251
        %vm320 = vcmp.eq.s32.totalorder %v282, %v251
        %vm321 = vcmp.eq.s32.totalorder %v285, %v251
        %vm322 = vcmp.eq.s32.totalorder %v288, %v251
        %vm323 = vcmp.eq.s32.totalorder %v291, %v251
        %vm324 = vcmp.eq.s32.totalorder %v294, %v251
        %vm325 = vcmp.eq.s32.totalorder %v297, %v251
        %vm326 = vcmp.eq.s32.totalorder %v300, %v251
        %vm327 = vcmp.eq.s32.totalorder %v303, %v251
        %vm328 = vcmp.eq.s32.totalorder %v306, %v251
        %vm329 = vcmp.eq.s32.totalorder %v309, %v251
        %vm330 = vcmp.eq.s32.totalorder %v312, %v251
        %vm331 = vcmp.eq.s32.totalorder %v315, %v251
        %v332 = vsel %vm316, 1, 0
        %v333 = vsel %vm317, 1, 0
        %v334 = vsel %vm318, 1, 0
        %v335 = vsel %vm319, 1, 0
        %v336 = vsel %vm320, 1, 0
        %v337 = vsel %vm321, 1, 0
        %v338 = vsel %vm322, 1, 0
        %v339 = vsel %vm323, 1, 0
        %v340 = vsel %vm324, 1, 0
        %v341 = vsel %vm325, 1, 0
        %v342 = vsel %vm326, 1, 0
        %v343 = vsel %vm327, 1, 0
        %v344 = vsel %vm328, 1, 0
        %v345 = vsel %vm329, 1, 0
        %v346 = vsel %vm330, 1, 0
        %v347 = vsel %vm331, 1, 0
        %v348 = vcvt.s32.f32 %v332
        %v349 = vcvt.s32.f32 %v333
        %v350 = vcvt.s32.f32 %v334
        %v351 = vcvt.s32.f32 %v335
        %v352 = vcvt.s32.f32 %v336
        %v353 = vcvt.s32.f32 %v337
        %v354 = vcvt.s32.f32 %v338
        %v355 = vcvt.s32.f32 %v339
        %v356 = vcvt.s32.f32 %v340
        %v357 = vcvt.s32.f32 %v341
        %v358 = vcvt.s32.f32 %v342
        %v359 = vcvt.s32.f32 %v343
        %v360 = vcvt.s32.f32 %v344
        %v361 = vcvt.s32.f32 %v345
        %v362 = vcvt.s32.f32 %v346
        %v363 = vcvt.s32.f32 %v347
        %vm364 = vcmask 523264
        %v366 = vsel %vm364, %v348, 0
        %v369 = vsel %vm364, %v349, 0
        %v372 = vsel %vm364, %v350, 0
        %v375 = vsel %vm364, %v351, 0
        %v378 = vsel %vm364, %v352, 0
        %v381 = vsel %vm364, %v353, 0
        %v384 = vsel %vm364, %v354, 0
        %v387 = vsel %vm364, %v355, 0
        %v390 = vsel %vm364, %v356, 0
        %v393 = vsel %vm364, %v357, 0
        %v396 = vsel %vm364, %v358, 0
        %v399 = vsel %vm364, %v359, 0
        %v402 = vsel %vm364, %v360, 0
        %v405 = vsel %vm364, %v361, 0
        %v408 = vsel %vm364, %v362, 0
        %v411 = vsel %vm364, %v363, 0
        %413 = vmatprep.subr.mxu0 0.0
        %414 = vmatpush1.msra.mxu0 0.0
        %415 = vmatprep.subr.mxu0 0.0
        %416 = vmatpush1.msra.mxu0 0.0
        %417 = vmatprep.subr.mxu0 0.0
        %418 = vmatpush1.msra.mxu0 0.0
        %419 = vmatprep.subr.mxu0 0.0
        %420 = vmatpush1.msra.mxu0 0.0
        %421 = vmatprep.subr.mxu0 0.0
        %422 = vmatpush1.msra.mxu0 0.0
        %423 = vmatprep.subr.mxu0 0.0
        %424 = vmatpush1.msra.mxu0 0.0
        %425 = vmatprep.subr.mxu0 0.0
        %426 = vmatpush1.msra.mxu0 0.0
        %427 = vmatprep.subr.mxu0 0.0
        %428 = vmatpush1.msra.mxu0 0.0
        %429 = vmatprep.subr.mxu0 0.0
        %430 = vmatpush1.msra.mxu0 %v249
        %431 = vmatprep.subr.mxu0 0.0
        %432 = vmatpush1.msra.mxu0 %v248
        %433 = vmatprep.subr.mxu0 0.0
        %434 = vmatpush1.msra.mxu0 %v247
        %435 = vmatprep.subr.mxu0 0.0
        %436 = vmatpush1.msra.mxu0 %v246
        %437 = vmatprep.subr.mxu0 0.0
        %438 = vmatpush1.msra.mxu0 %v245
        %439 = vmatprep.subr.mxu0 0.0
        %440 = vmatpush1.msra.mxu0 %v244
        %441 = vmatprep.subr.mxu0 0.0
        %442 = vmatpush1.msra.mxu0 %v243
        %443 = vmatprep.subr.mxu0 0.0
        %444 = vmatpush1.msra.mxu0 %v242
        %445 = vmatprep.subr.mxu0 0.0
        %446 = vmatpush2.msra.mxu0 0.0
        %447 = vmatprep.subr.mxu0 0.0
        %448 = vmatpush2.msra.mxu0 0.0
        %449 = vmatprep.subr.mxu0 0.0
        %450 = vmatpush2.msra.mxu0 0.0
        %451 = vmatprep.subr.mxu0 0.0
        %452 = vmatpush2.msra.mxu0 0.0
        %453 = vmatprep.subr.mxu0 0.0
        %454 = vmatpush2.msra.mxu0 0.0
        %455 = vmatprep.subr.mxu0 0.0
        %456 = vmatpush2.msra.mxu0 0.0
        %457 = vmatprep.subr.mxu0 0.0
        %458 = vmatpush2.msra.mxu0 0.0
        %459 = vmatprep.subr.mxu0 0.0
        %460 = vmatpush2.msra.mxu0 0.0
        %461 = vmatprep.subr.mxu0 0.0
        %462 = vmatpush2.msra.mxu0 0.0
        %463 = vmatprep.subr.mxu0 0.0
        %464 = vmatpush2.msra.mxu0 0.0
        %465 = vmatprep.subr.mxu0 0.0
        %466 = vmatpush2.msra.mxu0 0.0
        %467 = vmatprep.subr.mxu0 0.0
        %468 = vmatpush2.msra.mxu0 0.0
        %469 = vmatprep.subr.mxu0 0.0
        %470 = vmatpush2.msra.mxu0 0.0
        %471 = vmatprep.subr.mxu0 0.0
        %472 = vmatpush2.msra.mxu0 0.0
        %473 = vmatprep.subr.mxu0 0.0
        %474 = vmatpush2.msra.mxu0 0.0
        %475 = vmatprep.subr.mxu0 0.0
        %476 = vmatpush2.msra.mxu0 0.0
        %477 = vmatprep.mubr.f32.mxu0 0.0
        %478 = vmatmul.mubr.f32.gmra.mxu0 %v366
        %v479 = vpop.f32.mrf.mxu0
        %v480 = vadd.f32 0.0, %v479
        %v481 = vpop.f32.mrf.mxu0
        %482 = vmatprep.mubr.f32.mxu0 0.0
        %483 = vmatmul.mubr.f32.gmra.mxu0 %v369
        %v484 = vpop.f32.mrf.mxu0
        %v485 = vadd.f32 0.0, %v484
        %v486 = vpop.f32.mrf.mxu0
        %487 = vmatprep.mubr.f32.mxu0 0.0
        %488 = vmatmul.mubr.f32.gmra.mxu0 %v372
        %v489 = vpop.f32.mrf.mxu0
        %v490 = vadd.f32 0.0, %v489
        %v491 = vpop.f32.mrf.mxu0
        %492 = vmatprep.mubr.f32.mxu0 0.0
        %493 = vmatmul.mubr.f32.gmra.mxu0 %v375
        %v494 = vpop.f32.mrf.mxu0
        %v495 = vadd.f32 0.0, %v494
        %v496 = vpop.f32.mrf.mxu0
        %497 = vmatprep.mubr.f32.mxu0 0.0
        %498 = vmatmul.mubr.f32.gmra.mxu0 %v378
        %v499 = vpop.f32.mrf.mxu0
        %v500 = vadd.f32 0.0, %v499
        %v501 = vpop.f32.mrf.mxu0
        %502 = vmatprep.mubr.f32.mxu0 0.0
        %503 = vmatmul.mubr.f32.gmra.mxu0 %v381
        %v504 = vpop.f32.mrf.mxu0
        %v505 = vadd.f32 0.0, %v504
        %v506 = vpop.f32.mrf.mxu0
        %507 = vmatprep.mubr.f32.mxu0 0.0
        %508 = vmatmul.mubr.f32.gmra.mxu0 %v384
        %v509 = vpop.f32.mrf.mxu0
        %v510 = vadd.f32 0.0, %v509
        %v511 = vpop.f32.mrf.mxu0
        %512 = vmatprep.mubr.f32.mxu0 0.0
        %513 = vmatmul.mubr.f32.gmra.mxu0 %v387
        %v514 = vpop.f32.mrf.mxu0
        %v515 = vadd.f32 0.0, %v514
        %v516 = vpop.f32.mrf.mxu0
        %517 = vmatprep.mubr.f32.mxu0 0.0
        %518 = vmatmul.mubr.f32.gmra.mxu0 %v390
        %v519 = vpop.f32.mrf.mxu0
        %v520 = vadd.f32 0.0, %v519
        %v521 = vpop.f32.mrf.mxu0
        %522 = vmatprep.mubr.f32.mxu0 0.0
        %523 = vmatmul.mubr.f32.gmra.mxu0 %v393
        %v524 = vpop.f32.mrf.mxu0
        %v525 = vadd.f32 0.0, %v524
        %v526 = vpop.f32.mrf.mxu0
        %527 = vmatprep.mubr.f32.mxu0 0.0
        %528 = vmatmul.mubr.f32.gmra.mxu0 %v396
        %v529 = vpop.f32.mrf.mxu0
        %v530 = vadd.f32 0.0, %v529
        %v531 = vpop.f32.mrf.mxu0
        %532 = vmatprep.mubr.f32.mxu0 0.0
        %533 = vmatmul.mubr.f32.gmra.mxu0 %v399
        %v534 = vpop.f32.mrf.mxu0
        %v535 = vadd.f32 0.0, %v534
        %v536 = vpop.f32.mrf.mxu0
        %537 = vmatprep.mubr.f32.mxu0 0.0
        %538 = vmatmul.mubr.f32.gmra.mxu0 %v402
        %v539 = vpop.f32.mrf.mxu0
        %v540 = vadd.f32 0.0, %v539
        %v541 = vpop.f32.mrf.mxu0
        %542 = vmatprep.mubr.f32.mxu0 0.0
        %543 = vmatmul.mubr.f32.gmra.mxu0 %v405
        %v544 = vpop.f32.mrf.mxu0
        %v545 = vadd.f32 0.0, %v544
        %v546 = vpop.f32.mrf.mxu0
        %547 = vmatprep.mubr.f32.mxu0 0.0
        %548 = vmatmul.mubr.f32.gmra.mxu0 %v408
        %v549 = vpop.f32.mrf.mxu0
        %v550 = vadd.f32 0.0, %v549
        %v551 = vpop.f32.mrf.mxu0
        %552 = vmatprep.mubr.f32.mxu0 0.0
        %553 = vmatmul.mubr.f32.gmra.mxu0 %v411
        %v554 = vpop.f32.mrf.mxu0
        %v555 = vadd.f32 0.0, %v554
        %v556 = vpop.f32.mrf.mxu0
        %557 = vdwg.mxu0
        %558 = vmatprep.subr.mxu0 0.0
        %559 = vmatpush1.xpose.msra.mxu0 0.0
        %560 = vmatprep.subr.mxu0 0.0
        %561 = vmatpush1.xpose.msra.mxu0 0.0
        %562 = vmatprep.subr.mxu0 0.0
        %563 = vmatpush1.xpose.msra.mxu0 0.0
        %564 = vmatprep.subr.mxu0 0.0
        %565 = vmatpush1.xpose.msra.mxu0 0.0
        %566 = vmatprep.subr.mxu0 0.0
        %567 = vmatpush1.xpose.msra.mxu0 0.0
        %568 = vmatprep.subr.mxu0 0.0
        %569 = vmatpush1.xpose.msra.mxu0 0.0
        %570 = vmatprep.subr.mxu0 0.0
        %571 = vmatpush1.xpose.msra.mxu0 0.0
        %572 = vmatprep.subr.mxu0 0.0
        %573 = vmatpush1.xpose.msra.mxu0 0.0
        %574 = vmatprep.subr.mxu0 0.0
        %575 = vmatpush1.xpose.msra.mxu0 %v249
        %576 = vmatprep.subr.mxu0 0.0
        %577 = vmatpush1.xpose.msra.mxu0 %v248
        %578 = vmatprep.subr.mxu0 0.0
        %579 = vmatpush1.xpose.msra.mxu0 %v247
        %580 = vmatprep.subr.mxu0 0.0
        %581 = vmatpush1.xpose.msra.mxu0 %v246
        %582 = vmatprep.subr.mxu0 0.0
        %583 = vmatpush1.xpose.msra.mxu0 %v245
        %584 = vmatprep.subr.mxu0 0.0
        %585 = vmatpush1.xpose.msra.mxu0 %v244
        %586 = vmatprep.subr.mxu0 0.0
        %587 = vmatpush1.xpose.msra.mxu0 %v243
        %588 = vmatprep.subr.mxu0 0.0
        %589 = vmatpush1.xpose.msra.mxu0 %v242
        %590 = vmatprep.subr.mxu0 0.0
        %591 = vmatpush2.xpose.msra.mxu0 0.0
        %592 = vmatprep.subr.mxu0 0.0
        %593 = vmatpush2.xpose.msra.mxu0 0.0
        %594 = vmatprep.subr.mxu0 0.0
        %595 = vmatpush2.xpose.msra.mxu0 0.0
        %596 = vmatprep.subr.mxu0 0.0
        %597 = vmatpush2.xpose.msra.mxu0 0.0
        %598 = vmatprep.subr.mxu0 0.0
        %599 = vmatpush2.xpose.msra.mxu0 0.0
        %600 = vmatprep.subr.mxu0 0.0
        %601 = vmatpush2.xpose.msra.mxu0 0.0
        %602 = vmatprep.subr.mxu0 0.0
        %603 = vmatpush2.xpose.msra.mxu0 0.0
        %604 = vmatprep.subr.mxu0 0.0
        %605 = vmatpush2.xpose.msra.mxu0 0.0
        %606 = vmatprep.subr.mxu0 0.0
        %607 = vmatpush2.xpose.msra.mxu0 0.0
        %608 = vmatprep.subr.mxu0 0.0
        %609 = vmatpush2.xpose.msra.mxu0 0.0
        %610 = vmatprep.subr.mxu0 0.0
        %611 = vmatpush2.xpose.msra.mxu0 0.0
        %612 = vmatprep.subr.mxu0 0.0
        %613 = vmatpush2.xpose.msra.mxu0 0.0
        %614 = vmatprep.subr.mxu0 0.0
        %615 = vmatpush2.xpose.msra.mxu0 0.0
        %616 = vmatprep.subr.mxu0 0.0
        %617 = vmatpush2.xpose.msra.mxu0 0.0
        %618 = vmatprep.subr.mxu0 0.0
        %619 = vmatpush2.xpose.msra.mxu0 0.0
        %620 = vmatprep.subr.mxu0 0.0
        %621 = vmatpush2.xpose.msra.mxu0 0.0
        %622 = vmatprep.mubr.f32.mxu0 0.0
        %623 = vmatmul.mubr.f32.gmra.mxu0 %v480
        %v624 = vpop.f32.mrf.mxu0
        %v625 = vadd.f32 0.0, %v624
        %v626 = vpop.f32.mrf.mxu0
        %627 = vmatprep.mubr.f32.mxu0 0.0
        %628 = vmatmul.mubr.f32.gmra.mxu0 %v485
        %v629 = vpop.f32.mrf.mxu0
        %v630 = vadd.f32 0.0, %v629
        %v631 = vpop.f32.mrf.mxu0
        %632 = vmatprep.mubr.f32.mxu0 0.0
        %633 = vmatmul.mubr.f32.gmra.mxu0 %v490
        %v634 = vpop.f32.mrf.mxu0
        %v635 = vadd.f32 0.0, %v634
        %v636 = vpop.f32.mrf.mxu0
        %637 = vmatprep.mubr.f32.mxu0 0.0
        %638 = vmatmul.mubr.f32.gmra.mxu0 %v495
        %v639 = vpop.f32.mrf.mxu0
        %v640 = vadd.f32 0.0, %v639
        %v641 = vpop.f32.mrf.mxu0
        %642 = vmatprep.mubr.f32.mxu0 0.0
        %643 = vmatmul.mubr.f32.gmra.mxu0 %v500
        %v644 = vpop.f32.mrf.mxu0
        %v645 = vadd.f32 0.0, %v644
        %v646 = vpop.f32.mrf.mxu0
        %647 = vmatprep.mubr.f32.mxu0 0.0
        %648 = vmatmul.mubr.f32.gmra.mxu0 %v505
        %v649 = vpop.f32.mrf.mxu0
        %v650 = vadd.f32 0.0, %v649
        %v651 = vpop.f32.mrf.mxu0
        %652 = vmatprep.mubr.f32.mxu0 0.0
        %653 = vmatmul.mubr.f32.gmra.mxu0 %v510
        %v654 = vpop.f32.mrf.mxu0
        %v655 = vadd.f32 0.0, %v654
        %v656 = vpop.f32.mrf.mxu0
        %657 = vmatprep.mubr.f32.mxu0 0.0
        %658 = vmatmul.mubr.f32.gmra.mxu0 %v515
        %v659 = vpop.f32.mrf.mxu0
        %v660 = vadd.f32 0.0, %v659
        %v661 = vpop.f32.mrf.mxu0
        %662 = vmatprep.mubr.f32.mxu0 0.0
        %663 = vmatmul.mubr.f32.gmra.mxu0 %v520
        %v664 = vpop.f32.mrf.mxu0
        %v665 = vadd.f32 0.0, %v664
        %v666 = vpop.f32.mrf.mxu0
        %667 = vmatprep.mubr.f32.mxu0 0.0
        %668 = vmatmul.mubr.f32.gmra.mxu0 %v525
        %v669 = vpop.f32.mrf.mxu0
        %v670 = vadd.f32 0.0, %v669
        %v671 = vpop.f32.mrf.mxu0
        %672 = vmatprep.mubr.f32.mxu0 0.0
        %673 = vmatmul.mubr.f32.gmra.mxu0 %v530
        %v674 = vpop.f32.mrf.mxu0
        %v675 = vadd.f32 0.0, %v674
        %v676 = vpop.f32.mrf.mxu0
        %677 = vmatprep.mubr.f32.mxu0 0.0
        %678 = vmatmul.mubr.f32.gmra.mxu0 %v535
        %v679 = vpop.f32.mrf.mxu0
        %v680 = vadd.f32 0.0, %v679
        %v681 = vpop.f32.mrf.mxu0
        %682 = vmatprep.mubr.f32.mxu0 0.0
        %683 = vmatmul.mubr.f32.gmra.mxu0 %v540
        %v684 = vpop.f32.mrf.mxu0
        %v685 = vadd.f32 0.0, %v684
        %v686 = vpop.f32.mrf.mxu0
        %687 = vmatprep.mubr.f32.mxu0 0.0
        %688 = vmatmul.mubr.f32.gmra.mxu0 %v545
        %v689 = vpop.f32.mrf.mxu0
        %v690 = vadd.f32 0.0, %v689
        %v691 = vpop.f32.mrf.mxu0
        %692 = vmatprep.mubr.f32.mxu0 0.0
        %693 = vmatmul.mubr.f32.gmra.mxu0 %v550
        %v694 = vpop.f32.mrf.mxu0
        %v695 = vadd.f32 0.0, %v694
        %v696 = vpop.f32.mrf.mxu0
        %697 = vmatprep.mubr.f32.mxu0 0.0
        %698 = vmatmul.mubr.f32.gmra.mxu0 %v555
        %v699 = vpop.f32.mrf.mxu0
        %v700 = vadd.f32 0.0, %v699
        %v701 = vpop.f32.mrf.mxu0
        %702 = vdwg.mxu0
        %v703 = vld [vmem:[%s234] sm:$0xff]
        %v704 = vld [vmem:[%s234 + $0x8] sm:$0xff]
        %v705 = vld [vmem:[%s234 + $0x10] sm:$0xff]
        %v706 = vld [vmem:[%s234 + $0x18] sm:$0xff]
        %v707 = vld [vmem:[%s234 + $0x20] sm:$0xff]
        %v708 = vld [vmem:[%s234 + $0x28] sm:$0xff]
        %v709 = vld [vmem:[%s234 + $0x30] sm:$0xff]
        %v710 = vld [vmem:[%s234 + $0x38] sm:$0xff]
        %v711 = vld [vmem:[%s234 + $0x40] sm:$0xff]
        %v712 = vld [vmem:[%s234 + $0x48] sm:$0xff]
        %v713 = vld [vmem:[%s234 + $0x50] sm:$0xff]
        %v714 = vld [vmem:[%s234 + $0x58] sm:$0xff]
        %v715 = vld [vmem:[%s234 + $0x60] sm:$0xff]
        %v716 = vld [vmem:[%s234 + $0x68] sm:$0xff]
        %v717 = vld [vmem:[%s234 + $0x70] sm:$0xff]
        %v718 = vld [vmem:[%s234 + $0x78] sm:$0xff]
        %719 = vset.pattern.permute.xlu0 0
        %720 = vperm.xlu0 %719, %v703
        %v721 = vpop.permute.xlu0 %720
        %722 = vset.pattern.permute.xlu0 0
        %723 = vperm.xlu0 %722, %v704
        %v724 = vpop.permute.xlu0 %723
        %725 = vset.pattern.permute.xlu0 0
        %726 = vperm.xlu0 %725, %v705
        %v727 = vpop.permute.xlu0 %726
        %728 = vset.pattern.permute.xlu0 0
        %729 = vperm.xlu0 %728, %v706
        %v730 = vpop.permute.xlu0 %729
        %731 = vset.pattern.permute.xlu0 0
        %732 = vperm.xlu0 %731, %v707
        %v733 = vpop.permute.xlu0 %732
        %734 = vset.pattern.permute.xlu0 0
        %735 = vperm.xlu0 %734, %v708
        %v736 = vpop.permute.xlu0 %735
        %737 = vset.pattern.permute.xlu0 0
        %738 = vperm.xlu0 %737, %v709
        %v739 = vpop.permute.xlu0 %738
        %740 = vset.pattern.permute.xlu0 0
        %741 = vperm.xlu0 %740, %v710
        %v742 = vpop.permute.xlu0 %741
        %743 = vset.pattern.permute.xlu0 0
        %744 = vperm.xlu0 %743, %v711
        %v745 = vpop.permute.xlu0 %744
        %746 = vset.pattern.permute.xlu0 0
        %747 = vperm.xlu0 %746, %v712
        %v748 = vpop.permute.xlu0 %747
        %749 = vset.pattern.permute.xlu0 0
        %750 = vperm.xlu0 %749, %v713
        %v751 = vpop.permute.xlu0 %750
        %752 = vset.pattern.permute.xlu0 0
        %753 = vperm.xlu0 %752, %v714
        %v754 = vpop.permute.xlu0 %753
        %755 = vset.pattern.permute.xlu0 0
        %756 = vperm.xlu0 %755, %v715
        %v757 = vpop.permute.xlu0 %756
        %758 = vset.pattern.permute.xlu0 0
        %759 = vperm.xlu0 %758, %v716
        %v760 = vpop.permute.xlu0 %759
        %761 = vset.pattern.permute.xlu0 0
        %762 = vperm.xlu0 %761, %v717
        %v763 = vpop.permute.xlu0 %762
        %764 = vset.pattern.permute.xlu0 0
        %765 = vperm.xlu0 %764, %v718
        %v766 = vpop.permute.xlu0 %765
        %vm767 = vcmp.eq.s32.totalorder %v721, %v251
        %vm768 = vcmp.eq.s32.totalorder %v724, %v251
        %vm769 = vcmp.eq.s32.totalorder %v727, %v251
        %vm770 = vcmp.eq.s32.totalorder %v730, %v251
        %vm771 = vcmp.eq.s32.totalorder %v733, %v251
        %vm772 = vcmp.eq.s32.totalorder %v736, %v251
        %vm773 = vcmp.eq.s32.totalorder %v739, %v251
        %vm774 = vcmp.eq.s32.totalorder %v742, %v251
        %vm775 = vcmp.eq.s32.totalorder %v745, %v251
        %vm776 = vcmp.eq.s32.totalorder %v748, %v251
        %vm777 = vcmp.eq.s32.totalorder %v751, %v251
        %vm778 = vcmp.eq.s32.totalorder %v754, %v251
        %vm779 = vcmp.eq.s32.totalorder %v757, %v251
        %vm780 = vcmp.eq.s32.totalorder %v760, %v251
        %vm781 = vcmp.eq.s32.totalorder %v763, %v251
        %vm782 = vcmp.eq.s32.totalorder %v766, %v251
        %v783 = vsel %vm767, 1, 0
        %v784 = vsel %vm768, 1, 0
        %v785 = vsel %vm769, 1, 0
        %v786 = vsel %vm770, 1, 0
        %v787 = vsel %vm771, 1, 0
        %v788 = vsel %vm772, 1, 0
        %v789 = vsel %vm773, 1, 0
        %v790 = vsel %vm774, 1, 0
        %v791 = vsel %vm775, 1, 0
        %v792 = vsel %vm776, 1, 0
        %v793 = vsel %vm777, 1, 0
        %v794 = vsel %vm778, 1, 0
        %v795 = vsel %vm779, 1, 0
        %v796 = vsel %vm780, 1, 0
        %v797 = vsel %vm781, 1, 0
        %v798 = vsel %vm782, 1, 0
        %v799 = vcvt.s32.f32 %v783
        %v800 = vcvt.s32.f32 %v784
        %v801 = vcvt.s32.f32 %v785
        %v802 = vcvt.s32.f32 %v786
        %v803 = vcvt.s32.f32 %v787
        %v804 = vcvt.s32.f32 %v788
        %v805 = vcvt.s32.f32 %v789
        %v806 = vcvt.s32.f32 %v790
        %v807 = vcvt.s32.f32 %v791
        %v808 = vcvt.s32.f32 %v792
        %v809 = vcvt.s32.f32 %v793
        %v810 = vcvt.s32.f32 %v794
        %v811 = vcvt.s32.f32 %v795
        %v812 = vcvt.s32.f32 %v796
        %v813 = vcvt.s32.f32 %v797
        %v814 = vcvt.s32.f32 %v798
        %v815 = vmul.f32 %v799, %v625
        %v816 = vmul.f32 %v800, %v630
        %v817 = vmul.f32 %v801, %v635
        %v818 = vmul.f32 %v802, %v640
        %v819 = vmul.f32 %v803, %v645
        %v820 = vmul.f32 %v804, %v650
        %v821 = vmul.f32 %v805, %v655
        %v822 = vmul.f32 %v806, %v660
        %v823 = vmul.f32 %v807, %v665
        %v824 = vmul.f32 %v808, %v670
        %v825 = vmul.f32 %v809, %v675
        %v826 = vmul.f32 %v810, %v680
        %v827 = vmul.f32 %v811, %v685
        %v828 = vmul.f32 %v812, %v690
        %v829 = vmul.f32 %v813, %v695
        %v830 = vmul.f32 %v814, %v700
        %v831 = vsel %vm364, %v815, 0.0
        %832 = vadd.xlane.f32.xlu0 %v831
        %v833 = vpop.xlane.xlu0 %832
        %v834 = vsel %vm364, %v816, 0.0
        %835 = vadd.xlane.f32.xlu0 %v834
        %v836 = vpop.xlane.xlu0 %835
        %v837 = vsel %vm364, %v817, 0.0
        %838 = vadd.xlane.f32.xlu0 %v837
        %v839 = vpop.xlane.xlu0 %838
        %v840 = vsel %vm364, %v818, 0.0
        %841 = vadd.xlane.f32.xlu0 %v840
        %v842 = vpop.xlane.xlu0 %841
        %v843 = vsel %vm364, %v819, 0.0
        %844 = vadd.xlane.f32.xlu0 %v843
        %v845 = vpop.xlane.xlu0 %844
        %v846 = vsel %vm364, %v820, 0.0
        %847 = vadd.xlane.f32.xlu0 %v846
        %v848 = vpop.xlane.xlu0 %847
        %v849 = vsel %vm364, %v821, 0.0
        %850 = vadd.xlane.f32.xlu0 %v849
        %v851 = vpop.xlane.xlu0 %850
        %v852 = vsel %vm364, %v822, 0.0
        %853 = vadd.xlane.f32.xlu0 %v852
        %v854 = vpop.xlane.xlu0 %853
        %v855 = vsel %vm364, %v823, 0.0
        %856 = vadd.xlane.f32.xlu0 %v855
        %v857 = vpop.xlane.xlu0 %856
        %v858 = vsel %vm364, %v824, 0.0
        %859 = vadd.xlane.f32.xlu0 %v858
        %v860 = vpop.xlane.xlu0 %859
        %v861 = vsel %vm364, %v825, 0.0
        %862 = vadd.xlane.f32.xlu0 %v861
        %v863 = vpop.xlane.xlu0 %862
        %v864 = vsel %vm364, %v826, 0.0
        %865 = vadd.xlane.f32.xlu0 %v864
        %v866 = vpop.xlane.xlu0 %865
        %v867 = vsel %vm364, %v827, 0.0
        %868 = vadd.xlane.f32.xlu0 %v867
        %v869 = vpop.xlane.xlu0 %868
        %v870 = vsel %vm364, %v828, 0.0
        %871 = vadd.xlane.f32.xlu0 %v870
        %v872 = vpop.xlane.xlu0 %871
        %v873 = vsel %vm364, %v829, 0.0
        %874 = vadd.xlane.f32.xlu0 %v873
        %v875 = vpop.xlane.xlu0 %874
        %v876 = vsel %vm364, %v830, 0.0
        %877 = vadd.xlane.f32.xlu0 %v876
        %v878 = vpop.xlane.xlu0 %877
        %v879 = vmin.f32 %v833, 0.0
        %v880 = vmin.f32 %v836, 0.0
        %v881 = vmin.f32 %v839, 0.0
        %v882 = vmin.f32 %v842, 0.0
        %v883 = vmin.f32 %v845, 0.0
        %v884 = vmin.f32 %v848, 0.0
        %v885 = vmin.f32 %v851, 0.0
        %v886 = vmin.f32 %v854, 0.0
        %v887 = vmin.f32 %v857, 0.0
        %v888 = vmin.f32 %v860, 0.0
        %v889 = vmin.f32 %v863, 0.0
        %v890 = vmin.f32 %v866, 0.0
        %v891 = vmin.f32 %v869, 0.0
        %v892 = vmin.f32 %v872, 0.0
        %v893 = vmin.f32 %v875, 0.0
        %v894 = vmin.f32 %v878, 0.0
        %v895 = vand.u32 2147483647, %v833
        %v896 = vand.u32 2147483647, %v836
        %v897 = vand.u32 2147483647, %v839
        %v898 = vand.u32 2147483647, %v842
        %v899 = vand.u32 2147483647, %v845
        %v900 = vand.u32 2147483647, %v848
        %v901 = vand.u32 2147483647, %v851
        %v902 = vand.u32 2147483647, %v854
        %v903 = vand.u32 2147483647, %v857
        %v904 = vand.u32 2147483647, %v860
        %v905 = vand.u32 2147483647, %v863
        %v906 = vand.u32 2147483647, %v866
        %v907 = vand.u32 2147483647, %v869
        %v908 = vand.u32 2147483647, %v872
        %v909 = vand.u32 2147483647, %v875
        %v910 = vand.u32 2147483647, %v878
        %v911 = vsub.f32 0.0, %v895
        %v912 = vsub.f32 0.0, %v896
        %v913 = vsub.f32 0.0, %v897
        %v914 = vsub.f32 0.0, %v898
        %v915 = vsub.f32 0.0, %v899
        %v916 = vsub.f32 0.0, %v900
        %v917 = vsub.f32 0.0, %v901
        %v918 = vsub.f32 0.0, %v902
        %v919 = vsub.f32 0.0, %v903
        %v920 = vsub.f32 0.0, %v904
        %v921 = vsub.f32 0.0, %v905
        %v922 = vsub.f32 0.0, %v906
        %v923 = vsub.f32 0.0, %v907
        %v924 = vsub.f32 0.0, %v908
        %v925 = vsub.f32 0.0, %v909
        %v926 = vsub.f32 0.0, %v910
        %v927 = vmul.f32 %v911, 1.442695
        %v928 = vpow.pop %v927
        %v929 = vmul.f32 %v912, 1.442695
        %v930 = vpow.pop %v929
        %v931 = vmul.f32 %v913, 1.442695
        %v932 = vpow.pop %v931
        %v933 = vmul.f32 %v914, 1.442695
        %v934 = vpow.pop %v933
        %v935 = vmul.f32 %v915, 1.442695
        %v936 = vpow.pop %v935
        %v937 = vmul.f32 %v916, 1.442695
        %v938 = vpow.pop %v937
        %v939 = vmul.f32 %v917, 1.442695
        %v940 = vpow.pop %v939
        %v941 = vmul.f32 %v918, 1.442695
        %v942 = vpow.pop %v941
        %v943 = vmul.f32 %v919, 1.442695
        %v944 = vpow.pop %v943
        %v945 = vmul.f32 %v920, 1.442695
        %v946 = vpow.pop %v945
        %v947 = vmul.f32 %v921, 1.442695
        %v948 = vpow.pop %v947
        %v949 = vmul.f32 %v922, 1.442695
        %v950 = vpow.pop %v949
        %v951 = vmul.f32 %v923, 1.442695
        %v952 = vpow.pop %v951
        %v953 = vmul.f32 %v924, 1.442695
        %v954 = vpow.pop %v953
        %v955 = vmul.f32 %v925, 1.442695
        %v956 = vpow.pop %v955
        %v957 = vmul.f32 %v926, 1.442695
        %v958 = vpow.pop %v957
        %v959 = vadd.f32 %v928, 1.0
        %v960 = vlog2.pop %v959
        %v961 = vmul.f32 %v960, 0.6931472
        %v962 = vmul.f32 -0.5, %v928
        %v963 = vadd.f32 %v962, 1.0
        %v964 = vmul.f32 %v963, %v928
        %v965 = vand.u32 2147483647, %v928
        %vm966 = vcmp.lt.f32.partialorder %v965, 0.0004427343
        %v967 = vsel %vm966, %v964, %v961
        %v968 = vadd.f32 %v930, 1.0
        %v969 = vlog2.pop %v968
        %v970 = vmul.f32 %v969, 0.6931472
        %v971 = vmul.f32 -0.5, %v930
        %v972 = vadd.f32 %v971, 1.0
        %v973 = vmul.f32 %v972, %v930
        %v974 = vand.u32 2147483647, %v930
        %vm975 = vcmp.lt.f32.partialorder %v974, 0.0004427343
        %v976 = vsel %vm975, %v973, %v970
        %v977 = vadd.f32 %v932, 1.0
        %v978 = vlog2.pop %v977
        %v979 = vmul.f32 %v978, 0.6931472
        %v980 = vmul.f32 -0.5, %v932
        %v981 = vadd.f32 %v980, 1.0
        %v982 = vmul.f32 %v981, %v932
        %v983 = vand.u32 2147483647, %v932
        %vm984 = vcmp.lt.f32.partialorder %v983, 0.0004427343
        %v985 = vsel %vm984, %v982, %v979
        %v986 = vadd.f32 %v934, 1.0
        %v987 = vlog2.pop %v986
        %v988 = vmul.f32 %v987, 0.6931472
        %v989 = vmul.f32 -0.5, %v934
        %v990 = vadd.f32 %v989, 1.0
        %v991 = vmul.f32 %v990, %v934
        %v992 = vand.u32 2147483647, %v934
        %vm993 = vcmp.lt.f32.partialorder %v992, 0.0004427343
        %v994 = vsel %vm993, %v991, %v988
        %v995 = vadd.f32 %v936, 1.0
        %v996 = vlog2.pop %v995
        %v997 = vmul.f32 %v996, 0.6931472
        %v998 = vmul.f32 -0.5, %v936
        %v999 = vadd.f32 %v998, 1.0
        %v1000 = vmul.f32 %v999, %v936
        %v1001 = vand.u32 2147483647, %v936
        %vm1002 = vcmp.lt.f32.partialorder %v1001, 0.0004427343
        %v1003 = vsel %vm1002, %v1000, %v997
        %v1004 = vadd.f32 %v938, 1.0
        %v1005 = vlog2.pop %v1004
        %v1006 = vmul.f32 %v1005, 0.6931472
        %v1007 = vmul.f32 -0.5, %v938
        %v1008 = vadd.f32 %v1007, 1.0
        %v1009 = vmul.f32 %v1008, %v938
        %v1010 = vand.u32 2147483647, %v938
        %vm1011 = vcmp.lt.f32.partialorder %v1010, 0.0004427343
        %v1012 = vsel %vm1011, %v1009, %v1006
        %v1013 = vadd.f32 %v940, 1.0
        %v1014 = vlog2.pop %v1013
        %v1015 = vmul.f32 %v1014, 0.6931472
        %v1016 = vmul.f32 -0.5, %v940
        %v1017 = vadd.f32 %v1016, 1.0
        %v1018 = vmul.f32 %v1017, %v940
        %v1019 = vand.u32 2147483647, %v940
        %vm1020 = vcmp.lt.f32.partialorder %v1019, 0.0004427343
        %v1021 = vsel %vm1020, %v1018, %v1015
        %v1022 = vadd.f32 %v942, 1.0
        %v1023 = vlog2.pop %v1022
        %v1024 = vmul.f32 %v1023, 0.6931472
        %v1025 = vmul.f32 -0.5, %v942
        %v1026 = vadd.f32 %v1025, 1.0
        %v1027 = vmul.f32 %v1026, %v942
        %v1028 = vand.u32 2147483647, %v942
        %vm1029 = vcmp.lt.f32.partialorder %v1028, 0.0004427343
        %v1030 = vsel %vm1029, %v1027, %v1024
        %v1031 = vadd.f32 %v944, 1.0
        %v1032 = vlog2.pop %v1031
        %v1033 = vmul.f32 %v1032, 0.6931472
        %v1034 = vmul.f32 -0.5, %v944
        %v1035 = vadd.f32 %v1034, 1.0
        %v1036 = vmul.f32 %v1035, %v944
        %v1037 = vand.u32 2147483647, %v944
        %vm1038 = vcmp.lt.f32.partialorder %v1037, 0.0004427343
        %v1039 = vsel %vm1038, %v1036, %v1033
        %v1040 = vadd.f32 %v946, 1.0
        %v1041 = vlog2.pop %v1040
        %v1042 = vmul.f32 %v1041, 0.6931472
        %v1043 = vmul.f32 -0.5, %v946
        %v1044 = vadd.f32 %v1043, 1.0
        %v1045 = vmul.f32 %v1044, %v946
        %v1046 = vand.u32 2147483647, %v946
        %vm1047 = vcmp.lt.f32.partialorder %v1046, 0.0004427343
        %v1048 = vsel %vm1047, %v1045, %v1042
        %v1049 = vadd.f32 %v948, 1.0
        %v1050 = vlog2.pop %v1049
        %v1051 = vmul.f32 %v1050, 0.6931472
        %v1052 = vmul.f32 -0.5, %v948
        %v1053 = vadd.f32 %v1052, 1.0
        %v1054 = vmul.f32 %v1053, %v948
        %v1055 = vand.u32 2147483647, %v948
        %vm1056 = vcmp.lt.f32.partialorder %v1055, 0.0004427343
        %v1057 = vsel %vm1056, %v1054, %v1051
        %v1058 = vadd.f32 %v950, 1.0
        %v1059 = vlog2.pop %v1058
        %v1060 = vmul.f32 %v1059, 0.6931472
        %v1061 = vmul.f32 -0.5, %v950
        %v1062 = vadd.f32 %v1061, 1.0
        %v1063 = vmul.f32 %v1062, %v950
        %v1064 = vand.u32 2147483647, %v950
        %vm1065 = vcmp.lt.f32.partialorder %v1064, 0.0004427343
        %v1066 = vsel %vm1065, %v1063, %v1060
        %v1067 = vadd.f32 %v952, 1.0
        %v1068 = vlog2.pop %v1067
        %v1069 = vmul.f32 %v1068, 0.6931472
        %v1070 = vmul.f32 -0.5, %v952
        %v1071 = vadd.f32 %v1070, 1.0
        %v1072 = vmul.f32 %v1071, %v952
        %v1073 = vand.u32 2147483647, %v952
        %vm1074 = vcmp.lt.f32.partialorder %v1073, 0.0004427343
        %v1075 = vsel %vm1074, %v1072, %v1069
        %v1076 = vadd.f32 %v954, 1.0
        %v1077 = vlog2.pop %v1076
        %v1078 = vmul.f32 %v1077, 0.6931472
        %v1079 = vmul.f32 -0.5, %v954
        %v1080 = vadd.f32 %v1079, 1.0
        %v1081 = vmul.f32 %v1080, %v954
        %v1082 = vand.u32 2147483647, %v954
        %vm1083 = vcmp.lt.f32.partialorder %v1082, 0.0004427343
        %v1084 = vsel %vm1083, %v1081, %v1078
        %v1085 = vadd.f32 %v956, 1.0
        %v1086 = vlog2.pop %v1085
        %v1087 = vmul.f32 %v1086, 0.6931472
        %v1088 = vmul.f32 -0.5, %v956
        %v1089 = vadd.f32 %v1088, 1.0
        %v1090 = vmul.f32 %v1089, %v956
        %v1091 = vand.u32 2147483647, %v956
        %vm1092 = vcmp.lt.f32.partialorder %v1091, 0.0004427343
        %v1093 = vsel %vm1092, %v1090, %v1087
        %v1094 = vadd.f32 %v958, 1.0
        %v1095 = vlog2.pop %v1094
        %v1096 = vmul.f32 %v1095, 0.6931472
        %v1097 = vmul.f32 -0.5, %v958
        %v1098 = vadd.f32 %v1097, 1.0
        %v1099 = vmul.f32 %v1098, %v958
        %v1100 = vand.u32 2147483647, %v958
        %vm1101 = vcmp.lt.f32.partialorder %v1100, 0.0004427343
        %v1102 = vsel %vm1101, %v1099, %v1096
        %v1103 = vsub.f32 %v879, %v967
        %v1104 = vsub.f32 %v880, %v976
        %v1105 = vsub.f32 %v881, %v985
        %v1106 = vsub.f32 %v882, %v994
        %v1107 = vsub.f32 %v883, %v1003
        %v1108 = vsub.f32 %v884, %v1012
        %v1109 = vsub.f32 %v885, %v1021
        %v1110 = vsub.f32 %v886, %v1030
        %v1111 = vsub.f32 %v887, %v1039
        %v1112 = vsub.f32 %v888, %v1048
        %v1113 = vsub.f32 %v889, %v1057
        %v1114 = vsub.f32 %v890, %v1066
        %v1115 = vsub.f32 %v891, %v1075
        %v1116 = vsub.f32 %v892, %v1084
        %v1117 = vsub.f32 %v893, %v1093
        %v1118 = vsub.f32 %v894, %v1102
        %v1119 = vsub.f32 0.0, %v1103
        %v1120 = vsub.f32 0.0, %v1104
        %v1121 = vsub.f32 0.0, %v1105
        %v1122 = vsub.f32 0.0, %v1106
        %v1123 = vsub.f32 0.0, %v1107
        %v1124 = vsub.f32 0.0, %v1108
        %v1125 = vsub.f32 0.0, %v1109
        %v1126 = vsub.f32 0.0, %v1110
        %v1127 = vsub.f32 0.0, %v1111
        %v1128 = vsub.f32 0.0, %v1112
        %v1129 = vsub.f32 0.0, %v1113
        %v1130 = vsub.f32 0.0, %v1114
        %v1131 = vsub.f32 0.0, %v1115
        %v1132 = vsub.f32 0.0, %v1116
        %v1133 = vsub.f32 0.0, %v1117
        %v1134 = vsub.f32 0.0, %v1118
        %v1135 = vld [vmem:[%s240] sm:$0xff]
        %v1136 = vld [vmem:[%s240 + $0x8] sm:$0xff]
        %v1137 = vld [vmem:[%s240 + $0x10] sm:$0xff]
        %v1138 = vld [vmem:[%s240 + $0x18] sm:$0xff]
        %v1139 = vld [vmem:[%s240 + $0x20] sm:$0xff]
        %v1140 = vld [vmem:[%s240 + $0x28] sm:$0xff]
        %v1141 = vld [vmem:[%s240 + $0x30] sm:$0xff]
        %v1142 = vld [vmem:[%s240 + $0x38] sm:$0xff]
        %v1143 = vld [vmem:[%s240 + $0x40] sm:$0xff]
        %v1144 = vld [vmem:[%s240 + $0x48] sm:$0xff]
        %v1145 = vld [vmem:[%s240 + $0x50] sm:$0xff]
        %v1146 = vld [vmem:[%s240 + $0x58] sm:$0xff]
        %v1147 = vld [vmem:[%s240 + $0x60] sm:$0xff]
        %v1148 = vld [vmem:[%s240 + $0x68] sm:$0xff]
        %v1149 = vld [vmem:[%s240 + $0x70] sm:$0xff]
        %v1150 = vld [vmem:[%s240 + $0x78] sm:$0xff]
        %1151 = vset.pattern.permute.xlu0 0
        %1152 = vperm.xlu0 %1151, %v1135
        %v1153 = vpop.permute.xlu0 %1152
        %1154 = vset.pattern.permute.xlu0 0
        %1155 = vperm.xlu0 %1154, %v1136
        %v1156 = vpop.permute.xlu0 %1155
        %1157 = vset.pattern.permute.xlu0 0
        %1158 = vperm.xlu0 %1157, %v1137
        %v1159 = vpop.permute.xlu0 %1158
        %1160 = vset.pattern.permute.xlu0 0
        %1161 = vperm.xlu0 %1160, %v1138
        %v1162 = vpop.permute.xlu0 %1161
        %1163 = vset.pattern.permute.xlu0 0
        %1164 = vperm.xlu0 %1163, %v1139
        %v1165 = vpop.permute.xlu0 %1164
        %1166 = vset.pattern.permute.xlu0 0
        %1167 = vperm.xlu0 %1166, %v1140
        %v1168 = vpop.permute.xlu0 %1167
        %1169 = vset.pattern.permute.xlu0 0
        %1170 = vperm.xlu0 %1169, %v1141
        %v1171 = vpop.permute.xlu0 %1170
        %1172 = vset.pattern.permute.xlu0 0
        %1173 = vperm.xlu0 %1172, %v1142
        %v1174 = vpop.permute.xlu0 %1173
        %1175 = vset.pattern.permute.xlu0 0
        %1176 = vperm.xlu0 %1175, %v1143
        %v1177 = vpop.permute.xlu0 %1176
        %1178 = vset.pattern.permute.xlu0 0
        %1179 = vperm.xlu0 %1178, %v1144
        %v1180 = vpop.permute.xlu0 %1179
        %1181 = vset.pattern.permute.xlu0 0
        %1182 = vperm.xlu0 %1181, %v1145
        %v1183 = vpop.permute.xlu0 %1182
        %1184 = vset.pattern.permute.xlu0 0
        %1185 = vperm.xlu0 %1184, %v1146
        %v1186 = vpop.permute.xlu0 %1185
        %1187 = vset.pattern.permute.xlu0 0
        %1188 = vperm.xlu0 %1187, %v1147
        %v1189 = vpop.permute.xlu0 %1188
        %1190 = vset.pattern.permute.xlu0 0
        %1191 = vperm.xlu0 %1190, %v1148
        %v1192 = vpop.permute.xlu0 %1191
        %1193 = vset.pattern.permute.xlu0 0
        %1194 = vperm.xlu0 %1193, %v1149
        %v1195 = vpop.permute.xlu0 %1194
        %1196 = vset.pattern.permute.xlu0 0
        %1197 = vperm.xlu0 %1196, %v1150
        %v1198 = vpop.permute.xlu0 %1197
        %vm1199 = vcmp.eq.s32.totalorder %v1153, %v251
        %vm1200 = vcmp.eq.s32.totalorder %v1156, %v251
        %vm1201 = vcmp.eq.s32.totalorder %v1159, %v251
        %vm1202 = vcmp.eq.s32.totalorder %v1162, %v251
        %vm1203 = vcmp.eq.s32.totalorder %v1165, %v251
        %vm1204 = vcmp.eq.s32.totalorder %v1168, %v251
        %vm1205 = vcmp.eq.s32.totalorder %v1171, %v251
        %vm1206 = vcmp.eq.s32.totalorder %v1174, %v251
        %vm1207 = vcmp.eq.s32.totalorder %v1177, %v251
        %vm1208 = vcmp.eq.s32.totalorder %v1180, %v251
        %vm1209 = vcmp.eq.s32.totalorder %v1183, %v251
        %vm1210 = vcmp.eq.s32.totalorder %v1186, %v251
        %vm1211 = vcmp.eq.s32.totalorder %v1189, %v251
        %vm1212 = vcmp.eq.s32.totalorder %v1192, %v251
        %vm1213 = vcmp.eq.s32.totalorder %v1195, %v251
        %vm1214 = vcmp.eq.s32.totalorder %v1198, %v251
        %v1215 = vsel %vm1199, 1, 0
        %v1216 = vsel %vm1200, 1, 0
        %v1217 = vsel %vm1201, 1, 0
        %v1218 = vsel %vm1202, 1, 0
        %v1219 = vsel %vm1203, 1, 0
        %v1220 = vsel %vm1204, 1, 0
        %v1221 = vsel %vm1205, 1, 0
        %v1222 = vsel %vm1206, 1, 0
        %v1223 = vsel %vm1207, 1, 0
        %v1224 = vsel %vm1208, 1, 0
        %v1225 = vsel %vm1209, 1, 0
        %v1226 = vsel %vm1210, 1, 0
        %v1227 = vsel %vm1211, 1, 0
        %v1228 = vsel %vm1212, 1, 0
        %v1229 = vsel %vm1213, 1, 0
        %v1230 = vsel %vm1214, 1, 0
        %v1231 = vcvt.s32.f32 %v1215
        %v1232 = vcvt.s32.f32 %v1216
        %v1233 = vcvt.s32.f32 %v1217
        %v1234 = vcvt.s32.f32 %v1218
        %v1235 = vcvt.s32.f32 %v1219
        %v1236 = vcvt.s32.f32 %v1220
        %v1237 = vcvt.s32.f32 %v1221
        %v1238 = vcvt.s32.f32 %v1222
        %v1239 = vcvt.s32.f32 %v1223
        %v1240 = vcvt.s32.f32 %v1224
        %v1241 = vcvt.s32.f32 %v1225
        %v1242 = vcvt.s32.f32 %v1226
        %v1243 = vcvt.s32.f32 %v1227
        %v1244 = vcvt.s32.f32 %v1228
        %v1245 = vcvt.s32.f32 %v1229
        %v1246 = vcvt.s32.f32 %v1230
        %v1247 = vmul.f32 %v1231, %v625
        %v1248 = vmul.f32 %v1232, %v630
        %v1249 = vmul.f32 %v1233, %v635
        %v1250 = vmul.f32 %v1234, %v640
        %v1251 = vmul.f32 %v1235, %v645
        %v1252 = vmul.f32 %v1236, %v650
        %v1253 = vmul.f32 %v1237, %v655
        %v1254 = vmul.f32 %v1238, %v660
        %v1255 = vmul.f32 %v1239, %v665
        %v1256 = vmul.f32 %v1240, %v670
        %v1257 = vmul.f32 %v1241, %v675
        %v1258 = vmul.f32 %v1242, %v680
        %v1259 = vmul.f32 %v1243, %v685
        %v1260 = vmul.f32 %v1244, %v690
        %v1261 = vmul.f32 %v1245, %v695
        %v1262 = vmul.f32 %v1246, %v700
        %v1263 = vsel %vm364, %v1247, 0.0
        %1264 = vadd.xlane.f32.xlu0 %v1263
        %v1265 = vpop.xlane.xlu0 %1264
        %v1266 = vsel %vm364, %v1248, 0.0
        %1267 = vadd.xlane.f32.xlu0 %v1266
        %v1268 = vpop.xlane.xlu0 %1267
        %v1269 = vsel %vm364, %v1249, 0.0
        %1270 = vadd.xlane.f32.xlu0 %v1269
        %v1271 = vpop.xlane.xlu0 %1270
        %v1272 = vsel %vm364, %v1250, 0.0
        %1273 = vadd.xlane.f32.xlu0 %v1272
        %v1274 = vpop.xlane.xlu0 %1273
        %v1275 = vsel %vm364, %v1251, 0.0
        %1276 = vadd.xlane.f32.xlu0 %v1275
        %v1277 = vpop.xlane.xlu0 %1276
        %v1278 = vsel %vm364, %v1252, 0.0
        %1279 = vadd.xlane.f32.xlu0 %v1278
        %v1280 = vpop.xlane.xlu0 %1279
        %v1281 = vsel %vm364, %v1253, 0.0
        %1282 = vadd.xlane.f32.xlu0 %v1281
        %v1283 = vpop.xlane.xlu0 %1282
        %v1284 = vsel %vm364, %v1254, 0.0
        %1285 = vadd.xlane.f32.xlu0 %v1284
        %v1286 = vpop.xlane.xlu0 %1285
        %v1287 = vsel %vm364, %v1255, 0.0
        %1288 = vadd.xlane.f32.xlu0 %v1287
        %v1289 = vpop.xlane.xlu0 %1288
        %v1290 = vsel %vm364, %v1256, 0.0
        %1291 = vadd.xlane.f32.xlu0 %v1290
        %v1292 = vpop.xlane.xlu0 %1291
        %v1293 = vsel %vm364, %v1257, 0.0
        %1294 = vadd.xlane.f32.xlu0 %v1293
        %v1295 = vpop.xlane.xlu0 %1294
        %v1296 = vsel %vm364, %v1258, 0.0
        %1297 = vadd.xlane.f32.xlu0 %v1296
        %v1298 = vpop.xlane.xlu0 %1297
        %v1299 = vsel %vm364, %v1259, 0.0
        %1300 = vadd.xlane.f32.xlu0 %v1299
        %v1301 = vpop.xlane.xlu0 %1300
        %v1302 = vsel %vm364, %v1260, 0.0
        %1303 = vadd.xlane.f32.xlu0 %v1302
        %v1304 = vpop.xlane.xlu0 %1303
        %v1305 = vsel %vm364, %v1261, 0.0
        %1306 = vadd.xlane.f32.xlu0 %v1305
        %v1307 = vpop.xlane.xlu0 %1306
        %v1308 = vsel %vm364, %v1262, 0.0
        %1309 = vadd.xlane.f32.xlu0 %v1308
        %v1310 = vpop.xlane.xlu0 %1309
        %v1311 = vsub.f32 0.0, %v1265
        %v1312 = vsub.f32 0.0, %v1268
        %v1313 = vsub.f32 0.0, %v1271
        %v1314 = vsub.f32 0.0, %v1274
        %v1315 = vsub.f32 0.0, %v1277
        %v1316 = vsub.f32 0.0, %v1280
        %v1317 = vsub.f32 0.0, %v1283
        %v1318 = vsub.f32 0.0, %v1286
        %v1319 = vsub.f32 0.0, %v1289
        %v1320 = vsub.f32 0.0, %v1292
        %v1321 = vsub.f32 0.0, %v1295
        %v1322 = vsub.f32 0.0, %v1298
        %v1323 = vsub.f32 0.0, %v1301
        %v1324 = vsub.f32 0.0, %v1304
        %v1325 = vsub.f32 0.0, %v1307
        %v1326 = vsub.f32 0.0, %v1310
        %v1327 = vmin.f32 %v1311, 0.0
        %v1328 = vmin.f32 %v1312, 0.0
        %v1329 = vmin.f32 %v1313, 0.0
        %v1330 = vmin.f32 %v1314, 0.0
        %v1331 = vmin.f32 %v1315, 0.0
        %v1332 = vmin.f32 %v1316, 0.0
        %v1333 = vmin.f32 %v1317, 0.0
        %v1334 = vmin.f32 %v1318, 0.0
        %v1335 = vmin.f32 %v1319, 0.0
        %v1336 = vmin.f32 %v1320, 0.0
        %v1337 = vmin.f32 %v1321, 0.0
        %v1338 = vmin.f32 %v1322, 0.0
        %v1339 = vmin.f32 %v1323, 0.0
        %v1340 = vmin.f32 %v1324, 0.0
        %v1341 = vmin.f32 %v1325, 0.0
        %v1342 = vmin.f32 %v1326, 0.0
        %v1343 = vand.u32 2147483647, %v1311
        %v1344 = vand.u32 2147483647, %v1312
        %v1345 = vand.u32 2147483647, %v1313
        %v1346 = vand.u32 2147483647, %v1314
        %v1347 = vand.u32 2147483647, %v1315
        %v1348 = vand.u32 2147483647, %v1316
        %v1349 = vand.u32 2147483647, %v1317
        %v1350 = vand.u32 2147483647, %v1318
        %v1351 = vand.u32 2147483647, %v1319
        %v1352 = vand.u32 2147483647, %v1320
        %v1353 = vand.u32 2147483647, %v1321
        %v1354 = vand.u32 2147483647, %v1322
        %v1355 = vand.u32 2147483647, %v1323
        %v1356 = vand.u32 2147483647, %v1324
        %v1357 = vand.u32 2147483647, %v1325
        %v1358 = vand.u32 2147483647, %v1326
        %v1359 = vsub.f32 0.0, %v1343
        %v1360 = vsub.f32 0.0, %v1344
        %v1361 = vsub.f32 0.0, %v1345
        %v1362 = vsub.f32 0.0, %v1346
        %v1363 = vsub.f32 0.0, %v1347
        %v1364 = vsub.f32 0.0, %v1348
        %v1365 = vsub.f32 0.0, %v1349
        %v1366 = vsub.f32 0.0, %v1350
        %v1367 = vsub.f32 0.0, %v1351
        %v1368 = vsub.f32 0.0, %v1352
        %v1369 = vsub.f32 0.0, %v1353
        %v1370 = vsub.f32 0.0, %v1354
        %v1371 = vsub.f32 0.0, %v1355
        %v1372 = vsub.f32 0.0, %v1356
        %v1373 = vsub.f32 0.0, %v1357
        %v1374 = vsub.f32 0.0, %v1358
        %v1375 = vmul.f32 %v1359, 1.442695
        %v1376 = vpow.pop %v1375
        %v1377 = vmul.f32 %v1360, 1.442695
        %v1378 = vpow.pop %v1377
        %v1379 = vmul.f32 %v1361, 1.442695
        %v1380 = vpow.pop %v1379
        %v1381 = vmul.f32 %v1362, 1.442695
        %v1382 = vpow.pop %v1381
        %v1383 = vmul.f32 %v1363, 1.442695
        %v1384 = vpow.pop %v1383
        %v1385 = vmul.f32 %v1364, 1.442695
        %v1386 = vpow.pop %v1385
        %v1387 = vmul.f32 %v1365, 1.442695
        %v1388 = vpow.pop %v1387
        %v1389 = vmul.f32 %v1366, 1.442695
        %v1390 = vpow.pop %v1389
        %v1391 = vmul.f32 %v1367, 1.442695
        %v1392 = vpow.pop %v1391
        %v1393 = vmul.f32 %v1368, 1.442695
        %v1394 = vpow.pop %v1393
        %v1395 = vmul.f32 %v1369, 1.442695
        %v1396 = vpow.pop %v1395
        %v1397 = vmul.f32 %v1370, 1.442695
        %v1398 = vpow.pop %v1397
        %v1399 = vmul.f32 %v1371, 1.442695
        %v1400 = vpow.pop %v1399
        %v1401 = vmul.f32 %v1372, 1.442695
        %v1402 = vpow.pop %v1401
        %v1403 = vmul.f32 %v1373, 1.442695
        %v1404 = vpow.pop %v1403
        %v1405 = vmul.f32 %v1374, 1.442695
        %v1406 = vpow.pop %v1405
        %v1407 = vadd.f32 %v1376, 1.0
        %v1408 = vlog2.pop %v1407
        %v1409 = vmul.f32 %v1408, 0.6931472
        %v1410 = vmul.f32 -0.5, %v1376
        %v1411 = vadd.f32 %v1410, 1.0
        %v1412 = vmul.f32 %v1411, %v1376
        %v1413 = vand.u32 2147483647, %v1376
        %vm1414 = vcmp.lt.f32.partialorder %v1413, 0.0004427343
        %v1415 = vsel %vm1414, %v1412, %v1409
        %v1416 = vadd.f32 %v1378, 1.0
        %v1417 = vlog2.pop %v1416
        %v1418 = vmul.f32 %v1417, 0.6931472
        %v1419 = vmul.f32 -0.5, %v1378
        %v1420 = vadd.f32 %v1419, 1.0
        %v1421 = vmul.f32 %v1420, %v1378
        %v1422 = vand.u32 2147483647, %v1378
        %vm1423 = vcmp.lt.f32.partialorder %v1422, 0.0004427343
        %v1424 = vsel %vm1423, %v1421, %v1418
        %v1425 = vadd.f32 %v1380, 1.0
        %v1426 = vlog2.pop %v1425
        %v1427 = vmul.f32 %v1426, 0.6931472
        %v1428 = vmul.f32 -0.5, %v1380
        %v1429 = vadd.f32 %v1428, 1.0
        %v1430 = vmul.f32 %v1429, %v1380
        %v1431 = vand.u32 2147483647, %v1380
        %vm1432 = vcmp.lt.f32.partialorder %v1431, 0.0004427343
        %v1433 = vsel %vm1432, %v1430, %v1427
        %v1434 = vadd.f32 %v1382, 1.0
        %v1435 = vlog2.pop %v1434
        %v1436 = vmul.f32 %v1435, 0.6931472
        %v1437 = vmul.f32 -0.5, %v1382
        %v1438 = vadd.f32 %v1437, 1.0
        %v1439 = vmul.f32 %v1438, %v1382
        %v1440 = vand.u32 2147483647, %v1382
        %vm1441 = vcmp.lt.f32.partialorder %v1440, 0.0004427343
        %v1442 = vsel %vm1441, %v1439, %v1436
        %v1443 = vadd.f32 %v1384, 1.0
        %v1444 = vlog2.pop %v1443
        %v1445 = vmul.f32 %v1444, 0.6931472
        %v1446 = vmul.f32 -0.5, %v1384
        %v1447 = vadd.f32 %v1446, 1.0
        %v1448 = vmul.f32 %v1447, %v1384
        %v1449 = vand.u32 2147483647, %v1384
        %vm1450 = vcmp.lt.f32.partialorder %v1449, 0.0004427343
        %v1451 = vsel %vm1450, %v1448, %v1445
        %v1452 = vadd.f32 %v1386, 1.0
        %v1453 = vlog2.pop %v1452
        %v1454 = vmul.f32 %v1453, 0.6931472
        %v1455 = vmul.f32 -0.5, %v1386
        %v1456 = vadd.f32 %v1455, 1.0
        %v1457 = vmul.f32 %v1456, %v1386
        %v1458 = vand.u32 2147483647, %v1386
        %vm1459 = vcmp.lt.f32.partialorder %v1458, 0.0004427343
        %v1460 = vsel %vm1459, %v1457, %v1454
        %v1461 = vadd.f32 %v1388, 1.0
        %v1462 = vlog2.pop %v1461
        %v1463 = vmul.f32 %v1462, 0.6931472
        %v1464 = vmul.f32 -0.5, %v1388
        %v1465 = vadd.f32 %v1464, 1.0
        %v1466 = vmul.f32 %v1465, %v1388
        %v1467 = vand.u32 2147483647, %v1388
        %vm1468 = vcmp.lt.f32.partialorder %v1467, 0.0004427343
        %v1469 = vsel %vm1468, %v1466, %v1463
        %v1470 = vadd.f32 %v1390, 1.0
        %v1471 = vlog2.pop %v1470
        %v1472 = vmul.f32 %v1471, 0.6931472
        %v1473 = vmul.f32 -0.5, %v1390
        %v1474 = vadd.f32 %v1473, 1.0
        %v1475 = vmul.f32 %v1474, %v1390
        %v1476 = vand.u32 2147483647, %v1390
        %vm1477 = vcmp.lt.f32.partialorder %v1476, 0.0004427343
        %v1478 = vsel %vm1477, %v1475, %v1472
        %v1479 = vadd.f32 %v1392, 1.0
        %v1480 = vlog2.pop %v1479
        %v1481 = vmul.f32 %v1480, 0.6931472
        %v1482 = vmul.f32 -0.5, %v1392
        %v1483 = vadd.f32 %v1482, 1.0
        %v1484 = vmul.f32 %v1483, %v1392
        %v1485 = vand.u32 2147483647, %v1392
        %vm1486 = vcmp.lt.f32.partialorder %v1485, 0.0004427343
        %v1487 = vsel %vm1486, %v1484, %v1481
        %v1488 = vadd.f32 %v1394, 1.0
        %v1489 = vlog2.pop %v1488
        %v1490 = vmul.f32 %v1489, 0.6931472
        %v1491 = vmul.f32 -0.5, %v1394
        %v1492 = vadd.f32 %v1491, 1.0
        %v1493 = vmul.f32 %v1492, %v1394
        %v1494 = vand.u32 2147483647, %v1394
        %vm1495 = vcmp.lt.f32.partialorder %v1494, 0.0004427343
        %v1496 = vsel %vm1495, %v1493, %v1490
        %v1497 = vadd.f32 %v1396, 1.0
        %v1498 = vlog2.pop %v1497
        %v1499 = vmul.f32 %v1498, 0.6931472
        %v1500 = vmul.f32 -0.5, %v1396
        %v1501 = vadd.f32 %v1500, 1.0
        %v1502 = vmul.f32 %v1501, %v1396
        %v1503 = vand.u32 2147483647, %v1396
        %vm1504 = vcmp.lt.f32.partialorder %v1503, 0.0004427343
        %v1505 = vsel %vm1504, %v1502, %v1499
        %v1506 = vadd.f32 %v1398, 1.0
        %v1507 = vlog2.pop %v1506
        %v1508 = vmul.f32 %v1507, 0.6931472
        %v1509 = vmul.f32 -0.5, %v1398
        %v1510 = vadd.f32 %v1509, 1.0
        %v1511 = vmul.f32 %v1510, %v1398
        %v1512 = vand.u32 2147483647, %v1398
        %vm1513 = vcmp.lt.f32.partialorder %v1512, 0.0004427343
        %v1514 = vsel %vm1513, %v1511, %v1508
        %v1515 = vadd.f32 %v1400, 1.0
        %v1516 = vlog2.pop %v1515
        %v1517 = vmul.f32 %v1516, 0.6931472
        %v1518 = vmul.f32 -0.5, %v1400
        %v1519 = vadd.f32 %v1518, 1.0
        %v1520 = vmul.f32 %v1519, %v1400
        %v1521 = vand.u32 2147483647, %v1400
        %vm1522 = vcmp.lt.f32.partialorder %v1521, 0.0004427343
        %v1523 = vsel %vm1522, %v1520, %v1517
        %v1524 = vadd.f32 %v1402, 1.0
        %v1525 = vlog2.pop %v1524
        %v1526 = vmul.f32 %v1525, 0.6931472
        %v1527 = vmul.f32 -0.5, %v1402
        %v1528 = vadd.f32 %v1527, 1.0
        %v1529 = vmul.f32 %v1528, %v1402
        %v1530 = vand.u32 2147483647, %v1402
        %vm1531 = vcmp.lt.f32.partialorder %v1530, 0.0004427343
        %v1532 = vsel %vm1531, %v1529, %v1526
        %v1533 = vadd.f32 %v1404, 1.0
        %v1534 = vlog2.pop %v1533
        %v1535 = vmul.f32 %v1534, 0.6931472
        %v1536 = vmul.f32 -0.5, %v1404
        %v1537 = vadd.f32 %v1536, 1.0
        %v1538 = vmul.f32 %v1537, %v1404
        %v1539 = vand.u32 2147483647, %v1404
        %vm1540 = vcmp.lt.f32.partialorder %v1539, 0.0004427343
        %v1541 = vsel %vm1540, %v1538, %v1535
        %v1542 = vadd.f32 %v1406, 1.0
        %v1543 = vlog2.pop %v1542
        %v1544 = vmul.f32 %v1543, 0.6931472
        %v1545 = vmul.f32 -0.5, %v1406
        %v1546 = vadd.f32 %v1545, 1.0
        %v1547 = vmul.f32 %v1546, %v1406
        %v1548 = vand.u32 2147483647, %v1406
        %vm1549 = vcmp.lt.f32.partialorder %v1548, 0.0004427343
        %v1550 = vsel %vm1549, %v1547, %v1544
        %v1551 = vsub.f32 %v1327, %v1415
        %v1552 = vsub.f32 %v1328, %v1424
        %v1553 = vsub.f32 %v1329, %v1433
        %v1554 = vsub.f32 %v1330, %v1442
        %v1555 = vsub.f32 %v1331, %v1451
        %v1556 = vsub.f32 %v1332, %v1460
        %v1557 = vsub.f32 %v1333, %v1469
        %v1558 = vsub.f32 %v1334, %v1478
        %v1559 = vsub.f32 %v1335, %v1487
        %v1560 = vsub.f32 %v1336, %v1496
        %v1561 = vsub.f32 %v1337, %v1505
        %v1562 = vsub.f32 %v1338, %v1514
        %v1563 = vsub.f32 %v1339, %v1523
        %v1564 = vsub.f32 %v1340, %v1532
        %v1565 = vsub.f32 %v1341, %v1541
        %v1566 = vsub.f32 %v1342, %v1550
        %v1567 = vsub.f32 %v1119, %v1551
        %v1568 = vsub.f32 %v1120, %v1552
        %v1569 = vsub.f32 %v1121, %v1553
        %v1570 = vsub.f32 %v1122, %v1554
        %v1571 = vsub.f32 %v1123, %v1555
        %v1572 = vsub.f32 %v1124, %v1556
        %v1573 = vsub.f32 %v1125, %v1557
        %v1574 = vsub.f32 %v1126, %v1558
        %v1575 = vsub.f32 %v1127, %v1559
        %v1576 = vsub.f32 %v1128, %v1560
        %v1577 = vsub.f32 %v1129, %v1561
        %v1578 = vsub.f32 %v1130, %v1562
        %v1579 = vsub.f32 %v1131, %v1563
        %v1580 = vsub.f32 %v1132, %v1564
        %v1581 = vsub.f32 %v1133, %v1565
        %v1582 = vsub.f32 %v1134, %v1566
        %1583 = vset.pattern.permute.xlu0 1
        %1584 = vperm.xlu0 %1583, %v1135
        %v1585 = vpop.permute.xlu0 %1584
        %1586 = vset.pattern.permute.xlu0 1
        %1587 = vperm.xlu0 %1586, %v1136
        %v1588 = vpop.permute.xlu0 %1587
        %1589 = vset.pattern.permute.xlu0 1
        %1590 = vperm.xlu0 %1589, %v1137
        %v1591 = vpop.permute.xlu0 %1590
        %1592 = vset.pattern.permute.xlu0 1
        %1593 = vperm.xlu0 %1592, %v1138
        %v1594 = vpop.permute.xlu0 %1593
        %1595 = vset.pattern.permute.xlu0 1
        %1596 = vperm.xlu0 %1595, %v1139
        %v1597 = vpop.permute.xlu0 %1596
        %1598 = vset.pattern.permute.xlu0 1
        %1599 = vperm.xlu0 %1598, %v1140
        %v1600 = vpop.permute.xlu0 %1599
        %1601 = vset.pattern.permute.xlu0 1
        %1602 = vperm.xlu0 %1601, %v1141
        %v1603 = vpop.permute.xlu0 %1602
        %1604 = vset.pattern.permute.xlu0 1
        %1605 = vperm.xlu0 %1604, %v1142
        %v1606 = vpop.permute.xlu0 %1605
        %1607 = vset.pattern.permute.xlu0 1
        %1608 = vperm.xlu0 %1607, %v1143
        %v1609 = vpop.permute.xlu0 %1608
        %1610 = vset.pattern.permute.xlu0 1
        %1611 = vperm.xlu0 %1610, %v1144
        %v1612 = vpop.permute.xlu0 %1611
        %1613 = vset.pattern.permute.xlu0 1
        %1614 = vperm.xlu0 %1613, %v1145
        %v1615 = vpop.permute.xlu0 %1614
        %1616 = vset.pattern.permute.xlu0 1
        %1617 = vperm.xlu0 %1616, %v1146
        %v1618 = vpop.permute.xlu0 %1617
        %1619 = vset.pattern.permute.xlu0 1
        %1620 = vperm.xlu0 %1619, %v1147
        %v1621 = vpop.permute.xlu0 %1620
        %1622 = vset.pattern.permute.xlu0 1
        %1623 = vperm.xlu0 %1622, %v1148
        %v1624 = vpop.permute.xlu0 %1623
        %1625 = vset.pattern.permute.xlu0 1
        %1626 = vperm.xlu0 %1625, %v1149
        %v1627 = vpop.permute.xlu0 %1626
        %1628 = vset.pattern.permute.xlu0 1
        %1629 = vperm.xlu0 %1628, %v1150
        %v1630 = vpop.permute.xlu0 %1629
        %vm1631 = vcmp.eq.s32.totalorder %v1585, %v251
        %vm1632 = vcmp.eq.s32.totalorder %v1588, %v251
        %vm1633 = vcmp.eq.s32.totalorder %v1591, %v251
        %vm1634 = vcmp.eq.s32.totalorder %v1594, %v251
        %vm1635 = vcmp.eq.s32.totalorder %v1597, %v251
        %vm1636 = vcmp.eq.s32.totalorder %v1600, %v251
        %vm1637 = vcmp.eq.s32.totalorder %v1603, %v251
        %vm1638 = vcmp.eq.s32.totalorder %v1606, %v251
        %vm1639 = vcmp.eq.s32.totalorder %v1609, %v251
        %vm1640 = vcmp.eq.s32.totalorder %v1612, %v251
        %vm1641 = vcmp.eq.s32.totalorder %v1615, %v251
        %vm1642 = vcmp.eq.s32.totalorder %v1618, %v251
        %vm1643 = vcmp.eq.s32.totalorder %v1621, %v251
        %vm1644 = vcmp.eq.s32.totalorder %v1624, %v251
        %vm1645 = vcmp.eq.s32.totalorder %v1627, %v251
        %vm1646 = vcmp.eq.s32.totalorder %v1630, %v251
        %v1647 = vsel %vm1631, 1, 0
        %v1648 = vsel %vm1632, 1, 0
        %v1649 = vsel %vm1633, 1, 0
        %v1650 = vsel %vm1634, 1, 0
        %v1651 = vsel %vm1635, 1, 0
        %v1652 = vsel %vm1636, 1, 0
        %v1653 = vsel %vm1637, 1, 0
        %v1654 = vsel %vm1638, 1, 0
        %v1655 = vsel %vm1639, 1, 0
        %v1656 = vsel %vm1640, 1, 0
        %v1657 = vsel %vm1641, 1, 0
        %v1658 = vsel %vm1642, 1, 0
        %v1659 = vsel %vm1643, 1, 0
        %v1660 = vsel %vm1644, 1, 0
        %v1661 = vsel %vm1645, 1, 0
        %v1662 = vsel %vm1646, 1, 0
        %v1663 = vcvt.s32.f32 %v1647
        %v1664 = vcvt.s32.f32 %v1648
        %v1665 = vcvt.s32.f32 %v1649
        %v1666 = vcvt.s32.f32 %v1650
        %v1667 = vcvt.s32.f32 %v1651
        %v1668 = vcvt.s32.f32 %v1652
        %v1669 = vcvt.s32.f32 %v1653
        %v1670 = vcvt.s32.f32 %v1654
        %v1671 = vcvt.s32.f32 %v1655
        %v1672 = vcvt.s32.f32 %v1656
        %v1673 = vcvt.s32.f32 %v1657
        %v1674 = vcvt.s32.f32 %v1658
        %v1675 = vcvt.s32.f32 %v1659
        %v1676 = vcvt.s32.f32 %v1660
        %v1677 = vcvt.s32.f32 %v1661
        %v1678 = vcvt.s32.f32 %v1662
        %v1679 = vmul.f32 %v1663, %v625
        %v1680 = vmul.f32 %v1664, %v630
        %v1681 = vmul.f32 %v1665, %v635
        %v1682 = vmul.f32 %v1666, %v640
        %v1683 = vmul.f32 %v1667, %v645
        %v1684 = vmul.f32 %v1668, %v650
        %v1685 = vmul.f32 %v1669, %v655
        %v1686 = vmul.f32 %v1670, %v660
        %v1687 = vmul.f32 %v1671, %v665
        %v1688 = vmul.f32 %v1672, %v670
        %v1689 = vmul.f32 %v1673, %v675
        %v1690 = vmul.f32 %v1674, %v680
        %v1691 = vmul.f32 %v1675, %v685
        %v1692 = vmul.f32 %v1676, %v690
        %v1693 = vmul.f32 %v1677, %v695
        %v1694 = vmul.f32 %v1678, %v700
        %v1695 = vsel %vm364, %v1679, 0.0
        %1696 = vadd.xlane.f32.xlu0 %v1695
        %v1697 = vpop.xlane.xlu0 %1696
        %v1698 = vsel %vm364, %v1680, 0.0
        %1699 = vadd.xlane.f32.xlu0 %v1698
        %v1700 = vpop.xlane.xlu0 %1699
        %v1701 = vsel %vm364, %v1681, 0.0
        %1702 = vadd.xlane.f32.xlu0 %v1701
        %v1703 = vpop.xlane.xlu0 %1702
        %v1704 = vsel %vm364, %v1682, 0.0
        %1705 = vadd.xlane.f32.xlu0 %v1704
        %v1706 = vpop.xlane.xlu0 %1705
        %v1707 = vsel %vm364, %v1683, 0.0
        %1708 = vadd.xlane.f32.xlu0 %v1707
        %v1709 = vpop.xlane.xlu0 %1708
        %v1710 = vsel %vm364, %v1684, 0.0
        %1711 = vadd.xlane.f32.xlu0 %v1710
        %v1712 = vpop.xlane.xlu0 %1711
        %v1713 = vsel %vm364, %v1685, 0.0
        %1714 = vadd.xlane.f32.xlu0 %v1713
        %v1715 = vpop.xlane.xlu0 %1714
        %v1716 = vsel %vm364, %v1686, 0.0
        %1717 = vadd.xlane.f32.xlu0 %v1716
        %v1718 = vpop.xlane.xlu0 %1717
        %v1719 = vsel %vm364, %v1687, 0.0
        %1720 = vadd.xlane.f32.xlu0 %v1719
        %v1721 = vpop.xlane.xlu0 %1720
        %v1722 = vsel %vm364, %v1688, 0.0
        %1723 = vadd.xlane.f32.xlu0 %v1722
        %v1724 = vpop.xlane.xlu0 %1723
        %v1725 = vsel %vm364, %v1689, 0.0
        %1726 = vadd.xlane.f32.xlu0 %v1725
        %v1727 = vpop.xlane.xlu0 %1726
        %v1728 = vsel %vm364, %v1690, 0.0
        %1729 = vadd.xlane.f32.xlu0 %v1728
        %v1730 = vpop.xlane.xlu0 %1729
        %v1731 = vsel %vm364, %v1691, 0.0
        %1732 = vadd.xlane.f32.xlu0 %v1731
        %v1733 = vpop.xlane.xlu0 %1732
        %v1734 = vsel %vm364, %v1692, 0.0
        %1735 = vadd.xlane.f32.xlu0 %v1734
        %v1736 = vpop.xlane.xlu0 %1735
        %v1737 = vsel %vm364, %v1693, 0.0
        %1738 = vadd.xlane.f32.xlu0 %v1737
        %v1739 = vpop.xlane.xlu0 %1738
        %v1740 = vsel %vm364, %v1694, 0.0
        %1741 = vadd.xlane.f32.xlu0 %v1740
        %v1742 = vpop.xlane.xlu0 %1741
        %v1743 = vsub.f32 0.0, %v1697
        %v1744 = vsub.f32 0.0, %v1700
        %v1745 = vsub.f32 0.0, %v1703
        %v1746 = vsub.f32 0.0, %v1706
        %v1747 = vsub.f32 0.0, %v1709
        %v1748 = vsub.f32 0.0, %v1712
        %v1749 = vsub.f32 0.0, %v1715
        %v1750 = vsub.f32 0.0, %v1718
        %v1751 = vsub.f32 0.0, %v1721
        %v1752 = vsub.f32 0.0, %v1724
        %v1753 = vsub.f32 0.0, %v1727
        %v1754 = vsub.f32 0.0, %v1730
        %v1755 = vsub.f32 0.0, %v1733
        %v1756 = vsub.f32 0.0, %v1736
        %v1757 = vsub.f32 0.0, %v1739
        %v1758 = vsub.f32 0.0, %v1742
        %v1759 = vmin.f32 %v1743, 0.0
        %v1760 = vmin.f32 %v1744, 0.0
        %v1761 = vmin.f32 %v1745, 0.0
        %v1762 = vmin.f32 %v1746, 0.0
        %v1763 = vmin.f32 %v1747, 0.0
        %v1764 = vmin.f32 %v1748, 0.0
        %v1765 = vmin.f32 %v1749, 0.0
        %v1766 = vmin.f32 %v1750, 0.0
        %v1767 = vmin.f32 %v1751, 0.0
        %v1768 = vmin.f32 %v1752, 0.0
        %v1769 = vmin.f32 %v1753, 0.0
        %v1770 = vmin.f32 %v1754, 0.0
        %v1771 = vmin.f32 %v1755, 0.0
        %v1772 = vmin.f32 %v1756, 0.0
        %v1773 = vmin.f32 %v1757, 0.0
        %v1774 = vmin.f32 %v1758, 0.0
        %v1775 = vand.u32 2147483647, %v1743
        %v1776 = vand.u32 2147483647, %v1744
        %v1777 = vand.u32 2147483647, %v1745
        %v1778 = vand.u32 2147483647, %v1746
        %v1779 = vand.u32 2147483647, %v1747
        %v1780 = vand.u32 2147483647, %v1748
        %v1781 = vand.u32 2147483647, %v1749
        %v1782 = vand.u32 2147483647, %v1750
        %v1783 = vand.u32 2147483647, %v1751
        %v1784 = vand.u32 2147483647, %v1752
        %v1785 = vand.u32 2147483647, %v1753
        %v1786 = vand.u32 2147483647, %v1754
        %v1787 = vand.u32 2147483647, %v1755
        %v1788 = vand.u32 2147483647, %v1756
        %v1789 = vand.u32 2147483647, %v1757
        %v1790 = vand.u32 2147483647, %v1758
        %v1791 = vsub.f32 0.0, %v1775
        %v1792 = vsub.f32 0.0, %v1776
        %v1793 = vsub.f32 0.0, %v1777
        %v1794 = vsub.f32 0.0, %v1778
        %v1795 = vsub.f32 0.0, %v1779
        %v1796 = vsub.f32 0.0, %v1780
        %v1797 = vsub.f32 0.0, %v1781
        %v1798 = vsub.f32 0.0, %v1782
        %v1799 = vsub.f32 0.0, %v1783
        %v1800 = vsub.f32 0.0, %v1784
        %v1801 = vsub.f32 0.0, %v1785
        %v1802 = vsub.f32 0.0, %v1786
        %v1803 = vsub.f32 0.0, %v1787
        %v1804 = vsub.f32 0.0, %v1788
        %v1805 = vsub.f32 0.0, %v1789
        %v1806 = vsub.f32 0.0, %v1790
        %v1807 = vmul.f32 %v1791, 1.442695
        %v1808 = vpow.pop %v1807
        %v1809 = vmul.f32 %v1792, 1.442695
        %v1810 = vpow.pop %v1809
        %v1811 = vmul.f32 %v1793, 1.442695
        %v1812 = vpow.pop %v1811
        %v1813 = vmul.f32 %v1794, 1.442695
        %v1814 = vpow.pop %v1813
        %v1815 = vmul.f32 %v1795, 1.442695
        %v1816 = vpow.pop %v1815
        %v1817 = vmul.f32 %v1796, 1.442695
        %v1818 = vpow.pop %v1817
        %v1819 = vmul.f32 %v1797, 1.442695
        %v1820 = vpow.pop %v1819
        %v1821 = vmul.f32 %v1798, 1.442695
        %v1822 = vpow.pop %v1821
        %v1823 = vmul.f32 %v1799, 1.442695
        %v1824 = vpow.pop %v1823
        %v1825 = vmul.f32 %v1800, 1.442695
        %v1826 = vpow.pop %v1825
        %v1827 = vmul.f32 %v1801, 1.442695
        %v1828 = vpow.pop %v1827
        %v1829 = vmul.f32 %v1802, 1.442695
        %v1830 = vpow.pop %v1829
        %v1831 = vmul.f32 %v1803, 1.442695
        %v1832 = vpow.pop %v1831
        %v1833 = vmul.f32 %v1804, 1.442695
        %v1834 = vpow.pop %v1833
        %v1835 = vmul.f32 %v1805, 1.442695
        %v1836 = vpow.pop %v1835
        %v1837 = vmul.f32 %v1806, 1.442695
        %v1838 = vpow.pop %v1837
        %v1839 = vadd.f32 %v1808, 1.0
        %v1840 = vlog2.pop %v1839
        %v1841 = vmul.f32 %v1840, 0.6931472
        %v1842 = vmul.f32 -0.5, %v1808
        %v1843 = vadd.f32 %v1842, 1.0
        %v1844 = vmul.f32 %v1843, %v1808
        %v1845 = vand.u32 2147483647, %v1808
        %vm1846 = vcmp.lt.f32.partialorder %v1845, 0.0004427343
        %v1847 = vsel %vm1846, %v1844, %v1841
        %v1848 = vadd.f32 %v1810, 1.0
        %v1849 = vlog2.pop %v1848
        %v1850 = vmul.f32 %v1849, 0.6931472
        %v1851 = vmul.f32 -0.5, %v1810
        %v1852 = vadd.f32 %v1851, 1.0
        %v1853 = vmul.f32 %v1852, %v1810
        %v1854 = vand.u32 2147483647, %v1810
        %vm1855 = vcmp.lt.f32.partialorder %v1854, 0.0004427343
        %v1856 = vsel %vm1855, %v1853, %v1850
        %v1857 = vadd.f32 %v1812, 1.0
        %v1858 = vlog2.pop %v1857
        %v1859 = vmul.f32 %v1858, 0.6931472
        %v1860 = vmul.f32 -0.5, %v1812
        %v1861 = vadd.f32 %v1860, 1.0
        %v1862 = vmul.f32 %v1861, %v1812
        %v1863 = vand.u32 2147483647, %v1812
        %vm1864 = vcmp.lt.f32.partialorder %v1863, 0.0004427343
        %v1865 = vsel %vm1864, %v1862, %v1859
        %v1866 = vadd.f32 %v1814, 1.0
        %v1867 = vlog2.pop %v1866
        %v1868 = vmul.f32 %v1867, 0.6931472
        %v1869 = vmul.f32 -0.5, %v1814
        %v1870 = vadd.f32 %v1869, 1.0
        %v1871 = vmul.f32 %v1870, %v1814
        %v1872 = vand.u32 2147483647, %v1814
        %vm1873 = vcmp.lt.f32.partialorder %v1872, 0.0004427343
        %v1874 = vsel %vm1873, %v1871, %v1868
        %v1875 = vadd.f32 %v1816, 1.0
        %v1876 = vlog2.pop %v1875
        %v1877 = vmul.f32 %v1876, 0.6931472
        %v1878 = vmul.f32 -0.5, %v1816
        %v1879 = vadd.f32 %v1878, 1.0
        %v1880 = vmul.f32 %v1879, %v1816
        %v1881 = vand.u32 2147483647, %v1816
        %vm1882 = vcmp.lt.f32.partialorder %v1881, 0.0004427343
        %v1883 = vsel %vm1882, %v1880, %v1877
        %v1884 = vadd.f32 %v1818, 1.0
        %v1885 = vlog2.pop %v1884
        %v1886 = vmul.f32 %v1885, 0.6931472
        %v1887 = vmul.f32 -0.5, %v1818
        %v1888 = vadd.f32 %v1887, 1.0
        %v1889 = vmul.f32 %v1888, %v1818
        %v1890 = vand.u32 2147483647, %v1818
        %vm1891 = vcmp.lt.f32.partialorder %v1890, 0.0004427343
        %v1892 = vsel %vm1891, %v1889, %v1886
        %v1893 = vadd.f32 %v1820, 1.0
        %v1894 = vlog2.pop %v1893
        %v1895 = vmul.f32 %v1894, 0.6931472
        %v1896 = vmul.f32 -0.5, %v1820
        %v1897 = vadd.f32 %v1896, 1.0
        %v1898 = vmul.f32 %v1897, %v1820
        %v1899 = vand.u32 2147483647, %v1820
        %vm1900 = vcmp.lt.f32.partialorder %v1899, 0.0004427343
        %v1901 = vsel %vm1900, %v1898, %v1895
        %v1902 = vadd.f32 %v1822, 1.0
        %v1903 = vlog2.pop %v1902
        %v1904 = vmul.f32 %v1903, 0.6931472
        %v1905 = vmul.f32 -0.5, %v1822
        %v1906 = vadd.f32 %v1905, 1.0
        %v1907 = vmul.f32 %v1906, %v1822
        %v1908 = vand.u32 2147483647, %v1822
        %vm1909 = vcmp.lt.f32.partialorder %v1908, 0.0004427343
        %v1910 = vsel %vm1909, %v1907, %v1904
        %v1911 = vadd.f32 %v1824, 1.0
        %v1912 = vlog2.pop %v1911
        %v1913 = vmul.f32 %v1912, 0.6931472
        %v1914 = vmul.f32 -0.5, %v1824
        %v1915 = vadd.f32 %v1914, 1.0
        %v1916 = vmul.f32 %v1915, %v1824
        %v1917 = vand.u32 2147483647, %v1824
        %vm1918 = vcmp.lt.f32.partialorder %v1917, 0.0004427343
        %v1919 = vsel %vm1918, %v1916, %v1913
        %v1920 = vadd.f32 %v1826, 1.0
        %v1921 = vlog2.pop %v1920
        %v1922 = vmul.f32 %v1921, 0.6931472
        %v1923 = vmul.f32 -0.5, %v1826
        %v1924 = vadd.f32 %v1923, 1.0
        %v1925 = vmul.f32 %v1924, %v1826
        %v1926 = vand.u32 2147483647, %v1826
        %vm1927 = vcmp.lt.f32.partialorder %v1926, 0.0004427343
        %v1928 = vsel %vm1927, %v1925, %v1922
        %v1929 = vadd.f32 %v1828, 1.0
        %v1930 = vlog2.pop %v1929
        %v1931 = vmul.f32 %v1930, 0.6931472
        %v1932 = vmul.f32 -0.5, %v1828
        %v1933 = vadd.f32 %v1932, 1.0
        %v1934 = vmul.f32 %v1933, %v1828
        %v1935 = vand.u32 2147483647, %v1828
        %vm1936 = vcmp.lt.f32.partialorder %v1935, 0.0004427343
        %v1937 = vsel %vm1936, %v1934, %v1931
        %v1938 = vadd.f32 %v1830, 1.0
        %v1939 = vlog2.pop %v1938
        %v1940 = vmul.f32 %v1939, 0.6931472
        %v1941 = vmul.f32 -0.5, %v1830
        %v1942 = vadd.f32 %v1941, 1.0
        %v1943 = vmul.f32 %v1942, %v1830
        %v1944 = vand.u32 2147483647, %v1830
        %vm1945 = vcmp.lt.f32.partialorder %v1944, 0.0004427343
        %v1946 = vsel %vm1945, %v1943, %v1940
        %v1947 = vadd.f32 %v1832, 1.0
        %v1948 = vlog2.pop %v1947
        %v1949 = vmul.f32 %v1948, 0.6931472
        %v1950 = vmul.f32 -0.5, %v1832
        %v1951 = vadd.f32 %v1950, 1.0
        %v1952 = vmul.f32 %v1951, %v1832
        %v1953 = vand.u32 2147483647, %v1832
        %vm1954 = vcmp.lt.f32.partialorder %v1953, 0.0004427343
        %v1955 = vsel %vm1954, %v1952, %v1949
        %v1956 = vadd.f32 %v1834, 1.0
        %v1957 = vlog2.pop %v1956
        %v1958 = vmul.f32 %v1957, 0.6931472
        %v1959 = vmul.f32 -0.5, %v1834
        %v1960 = vadd.f32 %v1959, 1.0
        %v1961 = vmul.f32 %v1960, %v1834
        %v1962 = vand.u32 2147483647, %v1834
        %vm1963 = vcmp.lt.f32.partialorder %v1962, 0.0004427343
        %v1964 = vsel %vm1963, %v1961, %v1958
        %v1965 = vadd.f32 %v1836, 1.0
        %v1966 = vlog2.pop %v1965
        %v1967 = vmul.f32 %v1966, 0.6931472
        %v1968 = vmul.f32 -0.5, %v1836
        %v1969 = vadd.f32 %v1968, 1.0
        %v1970 = vmul.f32 %v1969, %v1836
        %v1971 = vand.u32 2147483647, %v1836
        %vm1972 = vcmp.lt.f32.partialorder %v1971, 0.0004427343
        %v1973 = vsel %vm1972, %v1970, %v1967
        %v1974 = vadd.f32 %v1838, 1.0
        %v1975 = vlog2.pop %v1974
        %v1976 = vmul.f32 %v1975, 0.6931472
        %v1977 = vmul.f32 -0.5, %v1838
        %v1978 = vadd.f32 %v1977, 1.0
        %v1979 = vmul.f32 %v1978, %v1838
        %v1980 = vand.u32 2147483647, %v1838
        %vm1981 = vcmp.lt.f32.partialorder %v1980, 0.0004427343
        %v1982 = vsel %vm1981, %v1979, %v1976
        %v1983 = vsub.f32 %v1759, %v1847
        %v1984 = vsub.f32 %v1760, %v1856
        %v1985 = vsub.f32 %v1761, %v1865
        %v1986 = vsub.f32 %v1762, %v1874
        %v1987 = vsub.f32 %v1763, %v1883
        %v1988 = vsub.f32 %v1764, %v1892
        %v1989 = vsub.f32 %v1765, %v1901
        %v1990 = vsub.f32 %v1766, %v1910
        %v1991 = vsub.f32 %v1767, %v1919
        %v1992 = vsub.f32 %v1768, %v1928
        %v1993 = vsub.f32 %v1769, %v1937
        %v1994 = vsub.f32 %v1770, %v1946
        %v1995 = vsub.f32 %v1771, %v1955
        %v1996 = vsub.f32 %v1772, %v1964
        %v1997 = vsub.f32 %v1773, %v1973
        %v1998 = vsub.f32 %v1774, %v1982
        %v1999 = vsub.f32 %v1567, %v1983
        %v2000 = vsub.f32 %v1568, %v1984
        %v2001 = vsub.f32 %v1569, %v1985
        %v2002 = vsub.f32 %v1570, %v1986
        %v2003 = vsub.f32 %v1571, %v1987
        %v2004 = vsub.f32 %v1572, %v1988
        %v2005 = vsub.f32 %v1573, %v1989
        %v2006 = vsub.f32 %v1574, %v1990
        %v2007 = vsub.f32 %v1575, %v1991
        %v2008 = vsub.f32 %v1576, %v1992
        %v2009 = vsub.f32 %v1577, %v1993
        %v2010 = vsub.f32 %v1578, %v1994
        %v2011 = vsub.f32 %v1579, %v1995
        %v2012 = vsub.f32 %v1580, %v1996
        %v2013 = vsub.f32 %v1581, %v1997
        %v2014 = vsub.f32 %v1582, %v1998
        %2015 = vset.pattern.permute.xlu0 2
        %2016 = vperm.xlu0 %2015, %v1135
        %v2017 = vpop.permute.xlu0 %2016
        %2018 = vset.pattern.permute.xlu0 2
        %2019 = vperm.xlu0 %2018, %v1136
        %v2020 = vpop.permute.xlu0 %2019
        %2021 = vset.pattern.permute.xlu0 2
        %2022 = vperm.xlu0 %2021, %v1137
        %v2023 = vpop.permute.xlu0 %2022
        %2024 = vset.pattern.permute.xlu0 2
        %2025 = vperm.xlu0 %2024, %v1138
        %v2026 = vpop.permute.xlu0 %2025
        %2027 = vset.pattern.permute.xlu0 2
        %2028 = vperm.xlu0 %2027, %v1139
        %v2029 = vpop.permute.xlu0 %2028
        %2030 = vset.pattern.permute.xlu0 2
        %2031 = vperm.xlu0 %2030, %v1140
        %v2032 = vpop.permute.xlu0 %2031
        %2033 = vset.pattern.permute.xlu0 2
        %2034 = vperm.xlu0 %2033, %v1141
        %v2035 = vpop.permute.xlu0 %2034
        %2036 = vset.pattern.permute.xlu0 2
        %2037 = vperm.xlu0 %2036, %v1142
        %v2038 = vpop.permute.xlu0 %2037
        %2039 = vset.pattern.permute.xlu0 2
        %2040 = vperm.xlu0 %2039, %v1143
        %v2041 = vpop.permute.xlu0 %2040
        %2042 = vset.pattern.permute.xlu0 2
        %2043 = vperm.xlu0 %2042, %v1144
        %v2044 = vpop.permute.xlu0 %2043
        %2045 = vset.pattern.permute.xlu0 2
        %2046 = vperm.xlu0 %2045, %v1145
        %v2047 = vpop.permute.xlu0 %2046
        %2048 = vset.pattern.permute.xlu0 2
        %2049 = vperm.xlu0 %2048, %v1146
        %v2050 = vpop.permute.xlu0 %2049
        %2051 = vset.pattern.permute.xlu0 2
        %2052 = vperm.xlu0 %2051, %v1147
        %v2053 = vpop.permute.xlu0 %2052
        %2054 = vset.pattern.permute.xlu0 2
        %2055 = vperm.xlu0 %2054, %v1148
        %v2056 = vpop.permute.xlu0 %2055
        %2057 = vset.pattern.permute.xlu0 2
        %2058 = vperm.xlu0 %2057, %v1149
        %v2059 = vpop.permute.xlu0 %2058
        %2060 = vset.pattern.permute.xlu0 2
        %2061 = vperm.xlu0 %2060, %v1150
        %v2062 = vpop.permute.xlu0 %2061
        %vm2063 = vcmp.eq.s32.totalorder %v2017, %v251
        %vm2064 = vcmp.eq.s32.totalorder %v2020, %v251
        %vm2065 = vcmp.eq.s32.totalorder %v2023, %v251
        %vm2066 = vcmp.eq.s32.totalorder %v2026, %v251
        %vm2067 = vcmp.eq.s32.totalorder %v2029, %v251
        %vm2068 = vcmp.eq.s32.totalorder %v2032, %v251
        %vm2069 = vcmp.eq.s32.totalorder %v2035, %v251
        %vm2070 = vcmp.eq.s32.totalorder %v2038, %v251
        %vm2071 = vcmp.eq.s32.totalorder %v2041, %v251
        %vm2072 = vcmp.eq.s32.totalorder %v2044, %v251
        %vm2073 = vcmp.eq.s32.totalorder %v2047, %v251
        %vm2074 = vcmp.eq.s32.totalorder %v2050, %v251
        %vm2075 = vcmp.eq.s32.totalorder %v2053, %v251
        %vm2076 = vcmp.eq.s32.totalorder %v2056, %v251
        %vm2077 = vcmp.eq.s32.totalorder %v2059, %v251
        %vm2078 = vcmp.eq.s32.totalorder %v2062, %v251
        %v2079 = vsel %vm2063, 1, 0
        %v2080 = vsel %vm2064, 1, 0
        %v2081 = vsel %vm2065, 1, 0
        %v2082 = vsel %vm2066, 1, 0
        %v2083 = vsel %vm2067, 1, 0
        %v2084 = vsel %vm2068, 1, 0
        %v2085 = vsel %vm2069, 1, 0
        %v2086 = vsel %vm2070, 1, 0
        %v2087 = vsel %vm2071, 1, 0
        %v2088 = vsel %vm2072, 1, 0
        %v2089 = vsel %vm2073, 1, 0
        %v2090 = vsel %vm2074, 1, 0
        %v2091 = vsel %vm2075, 1, 0
        %v2092 = vsel %vm2076, 1, 0
        %v2093 = vsel %vm2077, 1, 0
        %v2094 = vsel %vm2078, 1, 0
        %v2095 = vcvt.s32.f32 %v2079
        %v2096 = vcvt.s32.f32 %v2080
        %v2097 = vcvt.s32.f32 %v2081
        %v2098 = vcvt.s32.f32 %v2082
        %v2099 = vcvt.s32.f32 %v2083
        %v2100 = vcvt.s32.f32 %v2084
        %v2101 = vcvt.s32.f32 %v2085
        %v2102 = vcvt.s32.f32 %v2086
        %v2103 = vcvt.s32.f32 %v2087
        %v2104 = vcvt.s32.f32 %v2088
        %v2105 = vcvt.s32.f32 %v2089
        %v2106 = vcvt.s32.f32 %v2090
        %v2107 = vcvt.s32.f32 %v2091
        %v2108 = vcvt.s32.f32 %v2092
        %v2109 = vcvt.s32.f32 %v2093
        %v2110 = vcvt.s32.f32 %v2094
        %v2111 = vmul.f32 %v2095, %v625
        %v2112 = vmul.f32 %v2096, %v630
        %v2113 = vmul.f32 %v2097, %v635
        %v2114 = vmul.f32 %v2098, %v640
        %v2115 = vmul.f32 %v2099, %v645
        %v2116 = vmul.f32 %v2100, %v650
        %v2117 = vmul.f32 %v2101, %v655
        %v2118 = vmul.f32 %v2102, %v660
        %v2119 = vmul.f32 %v2103, %v665
        %v2120 = vmul.f32 %v2104, %v670
        %v2121 = vmul.f32 %v2105, %v675
        %v2122 = vmul.f32 %v2106, %v680
        %v2123 = vmul.f32 %v2107, %v685
        %v2124 = vmul.f32 %v2108, %v690
        %v2125 = vmul.f32 %v2109, %v695
        %v2126 = vmul.f32 %v2110, %v700
        %v2127 = vsel %vm364, %v2111, 0.0
        %2128 = vadd.xlane.f32.xlu0 %v2127
        %v2129 = vpop.xlane.xlu0 %2128
        %v2130 = vsel %vm364, %v2112, 0.0
        %2131 = vadd.xlane.f32.xlu0 %v2130
        %v2132 = vpop.xlane.xlu0 %2131
        %v2133 = vsel %vm364, %v2113, 0.0
        %2134 = vadd.xlane.f32.xlu0 %v2133
        %v2135 = vpop.xlane.xlu0 %2134
        %v2136 = vsel %vm364, %v2114, 0.0
        %2137 = vadd.xlane.f32.xlu0 %v2136
        %v2138 = vpop.xlane.xlu0 %2137
        %v2139 = vsel %vm364, %v2115, 0.0
        %2140 = vadd.xlane.f32.xlu0 %v2139
        %v2141 = vpop.xlane.xlu0 %2140
        %v2142 = vsel %vm364, %v2116, 0.0
        %2143 = vadd.xlane.f32.xlu0 %v2142
        %v2144 = vpop.xlane.xlu0 %2143
        %v2145 = vsel %vm364, %v2117, 0.0
        %2146 = vadd.xlane.f32.xlu0 %v2145
        %v2147 = vpop.xlane.xlu0 %2146
        %v2148 = vsel %vm364, %v2118, 0.0
        %2149 = vadd.xlane.f32.xlu0 %v2148
        %v2150 = vpop.xlane.xlu0 %2149
        %v2151 = vsel %vm364, %v2119, 0.0
        %2152 = vadd.xlane.f32.xlu0 %v2151
        %v2153 = vpop.xlane.xlu0 %2152
        %v2154 = vsel %vm364, %v2120, 0.0
        %2155 = vadd.xlane.f32.xlu0 %v2154
        %v2156 = vpop.xlane.xlu0 %2155
        %v2157 = vsel %vm364, %v2121, 0.0
        %2158 = vadd.xlane.f32.xlu0 %v2157
        %v2159 = vpop.xlane.xlu0 %2158
        %v2160 = vsel %vm364, %v2122, 0.0
        %2161 = vadd.xlane.f32.xlu0 %v2160
        %v2162 = vpop.xlane.xlu0 %2161
        %v2163 = vsel %vm364, %v2123, 0.0
        %2164 = vadd.xlane.f32.xlu0 %v2163
        %v2165 = vpop.xlane.xlu0 %2164
        %v2166 = vsel %vm364, %v2124, 0.0
        %2167 = vadd.xlane.f32.xlu0 %v2166
        %v2168 = vpop.xlane.xlu0 %2167
        %v2169 = vsel %vm364, %v2125, 0.0
        %2170 = vadd.xlane.f32.xlu0 %v2169
        %v2171 = vpop.xlane.xlu0 %2170
        %v2172 = vsel %vm364, %v2126, 0.0
        %2173 = vadd.xlane.f32.xlu0 %v2172
        %v2174 = vpop.xlane.xlu0 %2173
        %v2175 = vsub.f32 0.0, %v2129
        %v2176 = vsub.f32 0.0, %v2132
        %v2177 = vsub.f32 0.0, %v2135
        %v2178 = vsub.f32 0.0, %v2138
        %v2179 = vsub.f32 0.0, %v2141
        %v2180 = vsub.f32 0.0, %v2144
        %v2181 = vsub.f32 0.0, %v2147
        %v2182 = vsub.f32 0.0, %v2150
        %v2183 = vsub.f32 0.0, %v2153
        %v2184 = vsub.f32 0.0, %v2156
        %v2185 = vsub.f32 0.0, %v2159
        %v2186 = vsub.f32 0.0, %v2162
        %v2187 = vsub.f32 0.0, %v2165
        %v2188 = vsub.f32 0.0, %v2168
        %v2189 = vsub.f32 0.0, %v2171
        %v2190 = vsub.f32 0.0, %v2174
        %v2191 = vmin.f32 %v2175, 0.0
        %v2192 = vmin.f32 %v2176, 0.0
        %v2193 = vmin.f32 %v2177, 0.0
        %v2194 = vmin.f32 %v2178, 0.0
        %v2195 = vmin.f32 %v2179, 0.0
        %v2196 = vmin.f32 %v2180, 0.0
        %v2197 = vmin.f32 %v2181, 0.0
        %v2198 = vmin.f32 %v2182, 0.0
        %v2199 = vmin.f32 %v2183, 0.0
        %v2200 = vmin.f32 %v2184, 0.0
        %v2201 = vmin.f32 %v2185, 0.0
        %v2202 = vmin.f32 %v2186, 0.0
        %v2203 = vmin.f32 %v2187, 0.0
        %v2204 = vmin.f32 %v2188, 0.0
        %v2205 = vmin.f32 %v2189, 0.0
        %v2206 = vmin.f32 %v2190, 0.0
        %v2207 = vand.u32 2147483647, %v2175
        %v2208 = vand.u32 2147483647, %v2176
        %v2209 = vand.u32 2147483647, %v2177
        %v2210 = vand.u32 2147483647, %v2178
        %v2211 = vand.u32 2147483647, %v2179
        %v2212 = vand.u32 2147483647, %v2180
        %v2213 = vand.u32 2147483647, %v2181
        %v2214 = vand.u32 2147483647, %v2182
        %v2215 = vand.u32 2147483647, %v2183
        %v2216 = vand.u32 2147483647, %v2184
        %v2217 = vand.u32 2147483647, %v2185
        %v2218 = vand.u32 2147483647, %v2186
        %v2219 = vand.u32 2147483647, %v2187
        %v2220 = vand.u32 2147483647, %v2188
        %v2221 = vand.u32 2147483647, %v2189
        %v2222 = vand.u32 2147483647, %v2190
        %v2223 = vsub.f32 0.0, %v2207
        %v2224 = vsub.f32 0.0, %v2208
        %v2225 = vsub.f32 0.0, %v2209
        %v2226 = vsub.f32 0.0, %v2210
        %v2227 = vsub.f32 0.0, %v2211
        %v2228 = vsub.f32 0.0, %v2212
        %v2229 = vsub.f32 0.0, %v2213
        %v2230 = vsub.f32 0.0, %v2214
        %v2231 = vsub.f32 0.0, %v2215
        %v2232 = vsub.f32 0.0, %v2216
        %v2233 = vsub.f32 0.0, %v2217
        %v2234 = vsub.f32 0.0, %v2218
        %v2235 = vsub.f32 0.0, %v2219
        %v2236 = vsub.f32 0.0, %v2220
        %v2237 = vsub.f32 0.0, %v2221
        %v2238 = vsub.f32 0.0, %v2222
        %v2239 = vmul.f32 %v2223, 1.442695
        %v2240 = vpow.pop %v2239
        %v2241 = vmul.f32 %v2224, 1.442695
        %v2242 = vpow.pop %v2241
        %v2243 = vmul.f32 %v2225, 1.442695
        %v2244 = vpow.pop %v2243
        %v2245 = vmul.f32 %v2226, 1.442695
        %v2246 = vpow.pop %v2245
        %v2247 = vmul.f32 %v2227, 1.442695
        %v2248 = vpow.pop %v2247
        %v2249 = vmul.f32 %v2228, 1.442695
        %v2250 = vpow.pop %v2249
        %v2251 = vmul.f32 %v2229, 1.442695
        %v2252 = vpow.pop %v2251
        %v2253 = vmul.f32 %v2230, 1.442695
        %v2254 = vpow.pop %v2253
        %v2255 = vmul.f32 %v2231, 1.442695
        %v2256 = vpow.pop %v2255
        %v2257 = vmul.f32 %v2232, 1.442695
        %v2258 = vpow.pop %v2257
        %v2259 = vmul.f32 %v2233, 1.442695
        %v2260 = vpow.pop %v2259
        %v2261 = vmul.f32 %v2234, 1.442695
        %v2262 = vpow.pop %v2261
        %v2263 = vmul.f32 %v2235, 1.442695
        %v2264 = vpow.pop %v2263
        %v2265 = vmul.f32 %v2236, 1.442695
        %v2266 = vpow.pop %v2265
        %v2267 = vmul.f32 %v2237, 1.442695
        %v2268 = vpow.pop %v2267
        %v2269 = vmul.f32 %v2238, 1.442695
        %v2270 = vpow.pop %v2269
        %v2271 = vadd.f32 %v2240, 1.0
        %v2272 = vlog2.pop %v2271
        %v2273 = vmul.f32 %v2272, 0.6931472
        %v2274 = vmul.f32 -0.5, %v2240
        %v2275 = vadd.f32 %v2274, 1.0
        %v2276 = vmul.f32 %v2275, %v2240
        %v2277 = vand.u32 2147483647, %v2240
        %vm2278 = vcmp.lt.f32.partialorder %v2277, 0.0004427343
        %v2279 = vsel %vm2278, %v2276, %v2273
        %v2280 = vadd.f32 %v2242, 1.0
        %v2281 = vlog2.pop %v2280
        %v2282 = vmul.f32 %v2281, 0.6931472
        %v2283 = vmul.f32 -0.5, %v2242
        %v2284 = vadd.f32 %v2283, 1.0
        %v2285 = vmul.f32 %v2284, %v2242
        %v2286 = vand.u32 2147483647, %v2242
        %vm2287 = vcmp.lt.f32.partialorder %v2286, 0.0004427343
        %v2288 = vsel %vm2287, %v2285, %v2282
        %v2289 = vadd.f32 %v2244, 1.0
        %v2290 = vlog2.pop %v2289
        %v2291 = vmul.f32 %v2290, 0.6931472
        %v2292 = vmul.f32 -0.5, %v2244
        %v2293 = vadd.f32 %v2292, 1.0
        %v2294 = vmul.f32 %v2293, %v2244
        %v2295 = vand.u32 2147483647, %v2244
        %vm2296 = vcmp.lt.f32.partialorder %v2295, 0.0004427343
        %v2297 = vsel %vm2296, %v2294, %v2291
        %v2298 = vadd.f32 %v2246, 1.0
        %v2299 = vlog2.pop %v2298
        %v2300 = vmul.f32 %v2299, 0.6931472
        %v2301 = vmul.f32 -0.5, %v2246
        %v2302 = vadd.f32 %v2301, 1.0
        %v2303 = vmul.f32 %v2302, %v2246
        %v2304 = vand.u32 2147483647, %v2246
        %vm2305 = vcmp.lt.f32.partialorder %v2304, 0.0004427343
        %v2306 = vsel %vm2305, %v2303, %v2300
        %v2307 = vadd.f32 %v2248, 1.0
        %v2308 = vlog2.pop %v2307
        %v2309 = vmul.f32 %v2308, 0.6931472
        %v2310 = vmul.f32 -0.5, %v2248
        %v2311 = vadd.f32 %v2310, 1.0
        %v2312 = vmul.f32 %v2311, %v2248
        %v2313 = vand.u32 2147483647, %v2248
        %vm2314 = vcmp.lt.f32.partialorder %v2313, 0.0004427343
        %v2315 = vsel %vm2314, %v2312, %v2309
        %v2316 = vadd.f32 %v2250, 1.0
        %v2317 = vlog2.pop %v2316
        %v2318 = vmul.f32 %v2317, 0.6931472
        %v2319 = vmul.f32 -0.5, %v2250
        %v2320 = vadd.f32 %v2319, 1.0
        %v2321 = vmul.f32 %v2320, %v2250
        %v2322 = vand.u32 2147483647, %v2250
        %vm2323 = vcmp.lt.f32.partialorder %v2322, 0.0004427343
        %v2324 = vsel %vm2323, %v2321, %v2318
        %v2325 = vadd.f32 %v2252, 1.0
        %v2326 = vlog2.pop %v2325
        %v2327 = vmul.f32 %v2326, 0.6931472
        %v2328 = vmul.f32 -0.5, %v2252
        %v2329 = vadd.f32 %v2328, 1.0
        %v2330 = vmul.f32 %v2329, %v2252
        %v2331 = vand.u32 2147483647, %v2252
        %vm2332 = vcmp.lt.f32.partialorder %v2331, 0.0004427343
        %v2333 = vsel %vm2332, %v2330, %v2327
        %v2334 = vadd.f32 %v2254, 1.0
        %v2335 = vlog2.pop %v2334
        %v2336 = vmul.f32 %v2335, 0.6931472
        %v2337 = vmul.f32 -0.5, %v2254
        %v2338 = vadd.f32 %v2337, 1.0
        %v2339 = vmul.f32 %v2338, %v2254
        %v2340 = vand.u32 2147483647, %v2254
        %vm2341 = vcmp.lt.f32.partialorder %v2340, 0.0004427343
        %v2342 = vsel %vm2341, %v2339, %v2336
        %v2343 = vadd.f32 %v2256, 1.0
        %v2344 = vlog2.pop %v2343
        %v2345 = vmul.f32 %v2344, 0.6931472
        %v2346 = vmul.f32 -0.5, %v2256
        %v2347 = vadd.f32 %v2346, 1.0
        %v2348 = vmul.f32 %v2347, %v2256
        %v2349 = vand.u32 2147483647, %v2256
        %vm2350 = vcmp.lt.f32.partialorder %v2349, 0.0004427343
        %v2351 = vsel %vm2350, %v2348, %v2345
        %v2352 = vadd.f32 %v2258, 1.0
        %v2353 = vlog2.pop %v2352
        %v2354 = vmul.f32 %v2353, 0.6931472
        %v2355 = vmul.f32 -0.5, %v2258
        %v2356 = vadd.f32 %v2355, 1.0
        %v2357 = vmul.f32 %v2356, %v2258
        %v2358 = vand.u32 2147483647, %v2258
        %vm2359 = vcmp.lt.f32.partialorder %v2358, 0.0004427343
        %v2360 = vsel %vm2359, %v2357, %v2354
        %v2361 = vadd.f32 %v2260, 1.0
        %v2362 = vlog2.pop %v2361
        %v2363 = vmul.f32 %v2362, 0.6931472
        %v2364 = vmul.f32 -0.5, %v2260
        %v2365 = vadd.f32 %v2364, 1.0
        %v2366 = vmul.f32 %v2365, %v2260
        %v2367 = vand.u32 2147483647, %v2260
        %vm2368 = vcmp.lt.f32.partialorder %v2367, 0.0004427343
        %v2369 = vsel %vm2368, %v2366, %v2363
        %v2370 = vadd.f32 %v2262, 1.0
        %v2371 = vlog2.pop %v2370
        %v2372 = vmul.f32 %v2371, 0.6931472
        %v2373 = vmul.f32 -0.5, %v2262
        %v2374 = vadd.f32 %v2373, 1.0
        %v2375 = vmul.f32 %v2374, %v2262
        %v2376 = vand.u32 2147483647, %v2262
        %vm2377 = vcmp.lt.f32.partialorder %v2376, 0.0004427343
        %v2378 = vsel %vm2377, %v2375, %v2372
        %v2379 = vadd.f32 %v2264, 1.0
        %v2380 = vlog2.pop %v2379
        %v2381 = vmul.f32 %v2380, 0.6931472
        %v2382 = vmul.f32 -0.5, %v2264
        %v2383 = vadd.f32 %v2382, 1.0
        %v2384 = vmul.f32 %v2383, %v2264
        %v2385 = vand.u32 2147483647, %v2264
        %vm2386 = vcmp.lt.f32.partialorder %v2385, 0.0004427343
        %v2387 = vsel %vm2386, %v2384, %v2381
        %v2388 = vadd.f32 %v2266, 1.0
        %v2389 = vlog2.pop %v2388
        %v2390 = vmul.f32 %v2389, 0.6931472
        %v2391 = vmul.f32 -0.5, %v2266
        %v2392 = vadd.f32 %v2391, 1.0
        %v2393 = vmul.f32 %v2392, %v2266
        %v2394 = vand.u32 2147483647, %v2266
        %vm2395 = vcmp.lt.f32.partialorder %v2394, 0.0004427343
        %v2396 = vsel %vm2395, %v2393, %v2390
        %v2397 = vadd.f32 %v2268, 1.0
        %v2398 = vlog2.pop %v2397
        %v2399 = vmul.f32 %v2398, 0.6931472
        %v2400 = vmul.f32 -0.5, %v2268
        %v2401 = vadd.f32 %v2400, 1.0
        %v2402 = vmul.f32 %v2401, %v2268
        %v2403 = vand.u32 2147483647, %v2268
        %vm2404 = vcmp.lt.f32.partialorder %v2403, 0.0004427343
        %v2405 = vsel %vm2404, %v2402, %v2399
        %v2406 = vadd.f32 %v2270, 1.0
        %v2407 = vlog2.pop %v2406
        %v2408 = vmul.f32 %v2407, 0.6931472
        %v2409 = vmul.f32 -0.5, %v2270
        %v2410 = vadd.f32 %v2409, 1.0
        %v2411 = vmul.f32 %v2410, %v2270
        %v2412 = vand.u32 2147483647, %v2270
        %vm2413 = vcmp.lt.f32.partialorder %v2412, 0.0004427343
        %v2414 = vsel %vm2413, %v2411, %v2408
        %v2415 = vsub.f32 %v2191, %v2279
        %v2416 = vsub.f32 %v2192, %v2288
        %v2417 = vsub.f32 %v2193, %v2297
        %v2418 = vsub.f32 %v2194, %v2306
        %v2419 = vsub.f32 %v2195, %v2315
        %v2420 = vsub.f32 %v2196, %v2324
        %v2421 = vsub.f32 %v2197, %v2333
        %v2422 = vsub.f32 %v2198, %v2342
        %v2423 = vsub.f32 %v2199, %v2351
        %v2424 = vsub.f32 %v2200, %v2360
        %v2425 = vsub.f32 %v2201, %v2369
        %v2426 = vsub.f32 %v2202, %v2378
        %v2427 = vsub.f32 %v2203, %v2387
        %v2428 = vsub.f32 %v2204, %v2396
        %v2429 = vsub.f32 %v2205, %v2405
        %v2430 = vsub.f32 %v2206, %v2414
        %v2431 = vsub.f32 %v1999, %v2415
        %v2432 = vsub.f32 %v2000, %v2416
        %v2433 = vsub.f32 %v2001, %v2417
        %v2434 = vsub.f32 %v2002, %v2418
        %v2435 = vsub.f32 %v2003, %v2419
        %v2436 = vsub.f32 %v2004, %v2420
        %v2437 = vsub.f32 %v2005, %v2421
        %v2438 = vsub.f32 %v2006, %v2422
        %v2439 = vsub.f32 %v2007, %v2423
        %v2440 = vsub.f32 %v2008, %v2424
        %v2441 = vsub.f32 %v2009, %v2425
        %v2442 = vsub.f32 %v2010, %v2426
        %v2443 = vsub.f32 %v2011, %v2427
        %v2444 = vsub.f32 %v2012, %v2428
        %v2445 = vsub.f32 %v2013, %v2429
        %v2446 = vsub.f32 %v2014, %v2430
        %2447 = vset.pattern.permute.xlu0 3
        %2448 = vperm.xlu0 %2447, %v1135
        %v2449 = vpop.permute.xlu0 %2448
        %2450 = vset.pattern.permute.xlu0 3
        %2451 = vperm.xlu0 %2450, %v1136
        %v2452 = vpop.permute.xlu0 %2451
        %2453 = vset.pattern.permute.xlu0 3
        %2454 = vperm.xlu0 %2453, %v1137
        %v2455 = vpop.permute.xlu0 %2454
        %2456 = vset.pattern.permute.xlu0 3
        %2457 = vperm.xlu0 %2456, %v1138
        %v2458 = vpop.permute.xlu0 %2457
        %2459 = vset.pattern.permute.xlu0 3
        %2460 = vperm.xlu0 %2459, %v1139
        %v2461 = vpop.permute.xlu0 %2460
        %2462 = vset.pattern.permute.xlu0 3
        %2463 = vperm.xlu0 %2462, %v1140
        %v2464 = vpop.permute.xlu0 %2463
        %2465 = vset.pattern.permute.xlu0 3
        %2466 = vperm.xlu0 %2465, %v1141
        %v2467 = vpop.permute.xlu0 %2466
        %2468 = vset.pattern.permute.xlu0 3
        %2469 = vperm.xlu0 %2468, %v1142
        %v2470 = vpop.permute.xlu0 %2469
        %2471 = vset.pattern.permute.xlu0 3
        %2472 = vperm.xlu0 %2471, %v1143
        %v2473 = vpop.permute.xlu0 %2472
        %2474 = vset.pattern.permute.xlu0 3
        %2475 = vperm.xlu0 %2474, %v1144
        %v2476 = vpop.permute.xlu0 %2475
        %2477 = vset.pattern.permute.xlu0 3
        %2478 = vperm.xlu0 %2477, %v1145
        %v2479 = vpop.permute.xlu0 %2478
        %2480 = vset.pattern.permute.xlu0 3
        %2481 = vperm.xlu0 %2480, %v1146
        %v2482 = vpop.permute.xlu0 %2481
        %2483 = vset.pattern.permute.xlu0 3
        %2484 = vperm.xlu0 %2483, %v1147
        %v2485 = vpop.permute.xlu0 %2484
        %2486 = vset.pattern.permute.xlu0 3
        %2487 = vperm.xlu0 %2486, %v1148
        %v2488 = vpop.permute.xlu0 %2487
        %2489 = vset.pattern.permute.xlu0 3
        %2490 = vperm.xlu0 %2489, %v1149
        %v2491 = vpop.permute.xlu0 %2490
        %2492 = vset.pattern.permute.xlu0 3
        %2493 = vperm.xlu0 %2492, %v1150
        %v2494 = vpop.permute.xlu0 %2493
        %vm2495 = vcmp.eq.s32.totalorder %v2449, %v251
        %vm2496 = vcmp.eq.s32.totalorder %v2452, %v251
        %vm2497 = vcmp.eq.s32.totalorder %v2455, %v251
        %vm2498 = vcmp.eq.s32.totalorder %v2458, %v251
        %vm2499 = vcmp.eq.s32.totalorder %v2461, %v251
        %vm2500 = vcmp.eq.s32.totalorder %v2464, %v251
        %vm2501 = vcmp.eq.s32.totalorder %v2467, %v251
        %vm2502 = vcmp.eq.s32.totalorder %v2470, %v251
        %vm2503 = vcmp.eq.s32.totalorder %v2473, %v251
        %vm2504 = vcmp.eq.s32.totalorder %v2476, %v251
        %vm2505 = vcmp.eq.s32.totalorder %v2479, %v251
        %vm2506 = vcmp.eq.s32.totalorder %v2482, %v251
        %vm2507 = vcmp.eq.s32.totalorder %v2485, %v251
        %vm2508 = vcmp.eq.s32.totalorder %v2488, %v251
        %vm2509 = vcmp.eq.s32.totalorder %v2491, %v251
        %vm2510 = vcmp.eq.s32.totalorder %v2494, %v251
        %v2511 = vsel %vm2495, 1, 0
        %v2512 = vsel %vm2496, 1, 0
        %v2513 = vsel %vm2497, 1, 0
        %v2514 = vsel %vm2498, 1, 0
        %v2515 = vsel %vm2499, 1, 0
        %v2516 = vsel %vm2500, 1, 0
        %v2517 = vsel %vm2501, 1, 0
        %v2518 = vsel %vm2502, 1, 0
        %v2519 = vsel %vm2503, 1, 0
        %v2520 = vsel %vm2504, 1, 0
        %v2521 = vsel %vm2505, 1, 0
        %v2522 = vsel %vm2506, 1, 0
        %v2523 = vsel %vm2507, 1, 0
        %v2524 = vsel %vm2508, 1, 0
        %v2525 = vsel %vm2509, 1, 0
        %v2526 = vsel %vm2510, 1, 0
        %v2527 = vcvt.s32.f32 %v2511
        %v2528 = vcvt.s32.f32 %v2512
        %v2529 = vcvt.s32.f32 %v2513
        %v2530 = vcvt.s32.f32 %v2514
        %v2531 = vcvt.s32.f32 %v2515
        %v2532 = vcvt.s32.f32 %v2516
        %v2533 = vcvt.s32.f32 %v2517
        %v2534 = vcvt.s32.f32 %v2518
        %v2535 = vcvt.s32.f32 %v2519
        %v2536 = vcvt.s32.f32 %v2520
        %v2537 = vcvt.s32.f32 %v2521
        %v2538 = vcvt.s32.f32 %v2522
        %v2539 = vcvt.s32.f32 %v2523
        %v2540 = vcvt.s32.f32 %v2524
        %v2541 = vcvt.s32.f32 %v2525
        %v2542 = vcvt.s32.f32 %v2526
        %v2543 = vmul.f32 %v2527, %v625
        %v2544 = vmul.f32 %v2528, %v630
        %v2545 = vmul.f32 %v2529, %v635
        %v2546 = vmul.f32 %v2530, %v640
        %v2547 = vmul.f32 %v2531, %v645
        %v2548 = vmul.f32 %v2532, %v650
        %v2549 = vmul.f32 %v2533, %v655
        %v2550 = vmul.f32 %v2534, %v660
        %v2551 = vmul.f32 %v2535, %v665
        %v2552 = vmul.f32 %v2536, %v670
        %v2553 = vmul.f32 %v2537, %v675
        %v2554 = vmul.f32 %v2538, %v680
        %v2555 = vmul.f32 %v2539, %v685
        %v2556 = vmul.f32 %v2540, %v690
        %v2557 = vmul.f32 %v2541, %v695
        %v2558 = vmul.f32 %v2542, %v700
        %v2559 = vsel %vm364, %v2543, 0.0
        %2560 = vadd.xlane.f32.xlu0 %v2559
        %v2561 = vpop.xlane.xlu0 %2560
        %v2562 = vsel %vm364, %v2544, 0.0
        %2563 = vadd.xlane.f32.xlu0 %v2562
        %v2564 = vpop.xlane.xlu0 %2563
        %v2565 = vsel %vm364, %v2545, 0.0
        %2566 = vadd.xlane.f32.xlu0 %v2565
        %v2567 = vpop.xlane.xlu0 %2566
        %v2568 = vsel %vm364, %v2546, 0.0
        %2569 = vadd.xlane.f32.xlu0 %v2568
        %v2570 = vpop.xlane.xlu0 %2569
        %v2571 = vsel %vm364, %v2547, 0.0
        %2572 = vadd.xlane.f32.xlu0 %v2571
        %v2573 = vpop.xlane.xlu0 %2572
        %v2574 = vsel %vm364, %v2548, 0.0
        %2575 = vadd.xlane.f32.xlu0 %v2574
        %v2576 = vpop.xlane.xlu0 %2575
        %v2577 = vsel %vm364, %v2549, 0.0
        %2578 = vadd.xlane.f32.xlu0 %v2577
        %v2579 = vpop.xlane.xlu0 %2578
        %v2580 = vsel %vm364, %v2550, 0.0
        %2581 = vadd.xlane.f32.xlu0 %v2580
        %v2582 = vpop.xlane.xlu0 %2581
        %v2583 = vsel %vm364, %v2551, 0.0
        %2584 = vadd.xlane.f32.xlu0 %v2583
        %v2585 = vpop.xlane.xlu0 %2584
        %v2586 = vsel %vm364, %v2552, 0.0
        %2587 = vadd.xlane.f32.xlu0 %v2586
        %v2588 = vpop.xlane.xlu0 %2587
        %v2589 = vsel %vm364, %v2553, 0.0
        %2590 = vadd.xlane.f32.xlu0 %v2589
        %v2591 = vpop.xlane.xlu0 %2590
        %v2592 = vsel %vm364, %v2554, 0.0
        %2593 = vadd.xlane.f32.xlu0 %v2592
        %v2594 = vpop.xlane.xlu0 %2593
        %v2595 = vsel %vm364, %v2555, 0.0
        %2596 = vadd.xlane.f32.xlu0 %v2595
        %v2597 = vpop.xlane.xlu0 %2596
        %v2598 = vsel %vm364, %v2556, 0.0
        %2599 = vadd.xlane.f32.xlu0 %v2598
        %v2600 = vpop.xlane.xlu0 %2599
        %v2601 = vsel %vm364, %v2557, 0.0
        %2602 = vadd.xlane.f32.xlu0 %v2601
        %v2603 = vpop.xlane.xlu0 %2602
        %v2604 = vsel %vm364, %v2558, 0.0
        %2605 = vadd.xlane.f32.xlu0 %v2604
        %v2606 = vpop.xlane.xlu0 %2605
        %v2607 = vsub.f32 0.0, %v2561
        %v2608 = vsub.f32 0.0, %v2564
        %v2609 = vsub.f32 0.0, %v2567
        %v2610 = vsub.f32 0.0, %v2570
        %v2611 = vsub.f32 0.0, %v2573
        %v2612 = vsub.f32 0.0, %v2576
        %v2613 = vsub.f32 0.0, %v2579
        %v2614 = vsub.f32 0.0, %v2582
        %v2615 = vsub.f32 0.0, %v2585
        %v2616 = vsub.f32 0.0, %v2588
        %v2617 = vsub.f32 0.0, %v2591
        %v2618 = vsub.f32 0.0, %v2594
        %v2619 = vsub.f32 0.0, %v2597
        %v2620 = vsub.f32 0.0, %v2600
        %v2621 = vsub.f32 0.0, %v2603
        %v2622 = vsub.f32 0.0, %v2606
        %v2623 = vmin.f32 %v2607, 0.0
        %v2624 = vmin.f32 %v2608, 0.0
        %v2625 = vmin.f32 %v2609, 0.0
        %v2626 = vmin.f32 %v2610, 0.0
        %v2627 = vmin.f32 %v2611, 0.0
        %v2628 = vmin.f32 %v2612, 0.0
        %v2629 = vmin.f32 %v2613, 0.0
        %v2630 = vmin.f32 %v2614, 0.0
        %v2631 = vmin.f32 %v2615, 0.0
        %v2632 = vmin.f32 %v2616, 0.0
        %v2633 = vmin.f32 %v2617, 0.0
        %v2634 = vmin.f32 %v2618, 0.0
        %v2635 = vmin.f32 %v2619, 0.0
        %v2636 = vmin.f32 %v2620, 0.0
        %v2637 = vmin.f32 %v2621, 0.0
        %v2638 = vmin.f32 %v2622, 0.0
        %v2639 = vand.u32 2147483647, %v2607
        %v2640 = vand.u32 2147483647, %v2608
        %v2641 = vand.u32 2147483647, %v2609
        %v2642 = vand.u32 2147483647, %v2610
        %v2643 = vand.u32 2147483647, %v2611
        %v2644 = vand.u32 2147483647, %v2612
        %v2645 = vand.u32 2147483647, %v2613
        %v2646 = vand.u32 2147483647, %v2614
        %v2647 = vand.u32 2147483647, %v2615
        %v2648 = vand.u32 2147483647, %v2616
        %v2649 = vand.u32 2147483647, %v2617
        %v2650 = vand.u32 2147483647, %v2618
        %v2651 = vand.u32 2147483647, %v2619
        %v2652 = vand.u32 2147483647, %v2620
        %v2653 = vand.u32 2147483647, %v2621
        %v2654 = vand.u32 2147483647, %v2622
        %v2655 = vsub.f32 0.0, %v2639
        %v2656 = vsub.f32 0.0, %v2640
        %v2657 = vsub.f32 0.0, %v2641
        %v2658 = vsub.f32 0.0, %v2642
        %v2659 = vsub.f32 0.0, %v2643
        %v2660 = vsub.f32 0.0, %v2644
        %v2661 = vsub.f32 0.0, %v2645
        %v2662 = vsub.f32 0.0, %v2646
        %v2663 = vsub.f32 0.0, %v2647
        %v2664 = vsub.f32 0.0, %v2648
        %v2665 = vsub.f32 0.0, %v2649
        %v2666 = vsub.f32 0.0, %v2650
        %v2667 = vsub.f32 0.0, %v2651
        %v2668 = vsub.f32 0.0, %v2652
        %v2669 = vsub.f32 0.0, %v2653
        %v2670 = vsub.f32 0.0, %v2654
        %v2671 = vmul.f32 %v2655, 1.442695
        %v2672 = vpow.pop %v2671
        %v2673 = vmul.f32 %v2656, 1.442695
        %v2674 = vpow.pop %v2673
        %v2675 = vmul.f32 %v2657, 1.442695
        %v2676 = vpow.pop %v2675
        %v2677 = vmul.f32 %v2658, 1.442695
        %v2678 = vpow.pop %v2677
        %v2679 = vmul.f32 %v2659, 1.442695
        %v2680 = vpow.pop %v2679
        %v2681 = vmul.f32 %v2660, 1.442695
        %v2682 = vpow.pop %v2681
        %v2683 = vmul.f32 %v2661, 1.442695
        %v2684 = vpow.pop %v2683
        %v2685 = vmul.f32 %v2662, 1.442695
        %v2686 = vpow.pop %v2685
        %v2687 = vmul.f32 %v2663, 1.442695
        %v2688 = vpow.pop %v2687
        %v2689 = vmul.f32 %v2664, 1.442695
        %v2690 = vpow.pop %v2689
        %v2691 = vmul.f32 %v2665, 1.442695
        %v2692 = vpow.pop %v2691
        %v2693 = vmul.f32 %v2666, 1.442695
        %v2694 = vpow.pop %v2693
        %v2695 = vmul.f32 %v2667, 1.442695
        %v2696 = vpow.pop %v2695
        %v2697 = vmul.f32 %v2668, 1.442695
        %v2698 = vpow.pop %v2697
        %v2699 = vmul.f32 %v2669, 1.442695
        %v2700 = vpow.pop %v2699
        %v2701 = vmul.f32 %v2670, 1.442695
        %v2702 = vpow.pop %v2701
        %v2703 = vadd.f32 %v2672, 1.0
        %v2704 = vlog2.pop %v2703
        %v2705 = vmul.f32 %v2704, 0.6931472
        %v2706 = vmul.f32 -0.5, %v2672
        %v2707 = vadd.f32 %v2706, 1.0
        %v2708 = vmul.f32 %v2707, %v2672
        %v2709 = vand.u32 2147483647, %v2672
        %vm2710 = vcmp.lt.f32.partialorder %v2709, 0.0004427343
        %v2711 = vsel %vm2710, %v2708, %v2705
        %v2712 = vadd.f32 %v2674, 1.0
        %v2713 = vlog2.pop %v2712
        %v2714 = vmul.f32 %v2713, 0.6931472
        %v2715 = vmul.f32 -0.5, %v2674
        %v2716 = vadd.f32 %v2715, 1.0
        %v2717 = vmul.f32 %v2716, %v2674
        %v2718 = vand.u32 2147483647, %v2674
        %vm2719 = vcmp.lt.f32.partialorder %v2718, 0.0004427343
        %v2720 = vsel %vm2719, %v2717, %v2714
        %v2721 = vadd.f32 %v2676, 1.0
        %v2722 = vlog2.pop %v2721
        %v2723 = vmul.f32 %v2722, 0.6931472
        %v2724 = vmul.f32 -0.5, %v2676
        %v2725 = vadd.f32 %v2724, 1.0
        %v2726 = vmul.f32 %v2725, %v2676
        %v2727 = vand.u32 2147483647, %v2676
        %vm2728 = vcmp.lt.f32.partialorder %v2727, 0.0004427343
        %v2729 = vsel %vm2728, %v2726, %v2723
        %v2730 = vadd.f32 %v2678, 1.0
        %v2731 = vlog2.pop %v2730
        %v2732 = vmul.f32 %v2731, 0.6931472
        %v2733 = vmul.f32 -0.5, %v2678
        %v2734 = vadd.f32 %v2733, 1.0
        %v2735 = vmul.f32 %v2734, %v2678
        %v2736 = vand.u32 2147483647, %v2678
        %vm2737 = vcmp.lt.f32.partialorder %v2736, 0.0004427343
        %v2738 = vsel %vm2737, %v2735, %v2732
        %v2739 = vadd.f32 %v2680, 1.0
        %v2740 = vlog2.pop %v2739
        %v2741 = vmul.f32 %v2740, 0.6931472
        %v2742 = vmul.f32 -0.5, %v2680
        %v2743 = vadd.f32 %v2742, 1.0
        %v2744 = vmul.f32 %v2743, %v2680
        %v2745 = vand.u32 2147483647, %v2680
        %vm2746 = vcmp.lt.f32.partialorder %v2745, 0.0004427343
        %v2747 = vsel %vm2746, %v2744, %v2741
        %v2748 = vadd.f32 %v2682, 1.0
        %v2749 = vlog2.pop %v2748
        %v2750 = vmul.f32 %v2749, 0.6931472
        %v2751 = vmul.f32 -0.5, %v2682
        %v2752 = vadd.f32 %v2751, 1.0
        %v2753 = vmul.f32 %v2752, %v2682
        %v2754 = vand.u32 2147483647, %v2682
        %vm2755 = vcmp.lt.f32.partialorder %v2754, 0.0004427343
        %v2756 = vsel %vm2755, %v2753, %v2750
        %v2757 = vadd.f32 %v2684, 1.0
        %v2758 = vlog2.pop %v2757
        %v2759 = vmul.f32 %v2758, 0.6931472
        %v2760 = vmul.f32 -0.5, %v2684
        %v2761 = vadd.f32 %v2760, 1.0
        %v2762 = vmul.f32 %v2761, %v2684
        %v2763 = vand.u32 2147483647, %v2684
        %vm2764 = vcmp.lt.f32.partialorder %v2763, 0.0004427343
        %v2765 = vsel %vm2764, %v2762, %v2759
        %v2766 = vadd.f32 %v2686, 1.0
        %v2767 = vlog2.pop %v2766
        %v2768 = vmul.f32 %v2767, 0.6931472
        %v2769 = vmul.f32 -0.5, %v2686
        %v2770 = vadd.f32 %v2769, 1.0
        %v2771 = vmul.f32 %v2770, %v2686
        %v2772 = vand.u32 2147483647, %v2686
        %vm2773 = vcmp.lt.f32.partialorder %v2772, 0.0004427343
        %v2774 = vsel %vm2773, %v2771, %v2768
        %v2775 = vadd.f32 %v2688, 1.0
        %v2776 = vlog2.pop %v2775
        %v2777 = vmul.f32 %v2776, 0.6931472
        %v2778 = vmul.f32 -0.5, %v2688
        %v2779 = vadd.f32 %v2778, 1.0
        %v2780 = vmul.f32 %v2779, %v2688
        %v2781 = vand.u32 2147483647, %v2688
        %vm2782 = vcmp.lt.f32.partialorder %v2781, 0.0004427343
        %v2783 = vsel %vm2782, %v2780, %v2777
        %v2784 = vadd.f32 %v2690, 1.0
        %v2785 = vlog2.pop %v2784
        %v2786 = vmul.f32 %v2785, 0.6931472
        %v2787 = vmul.f32 -0.5, %v2690
        %v2788 = vadd.f32 %v2787, 1.0
        %v2789 = vmul.f32 %v2788, %v2690
        %v2790 = vand.u32 2147483647, %v2690
        %vm2791 = vcmp.lt.f32.partialorder %v2790, 0.0004427343
        %v2792 = vsel %vm2791, %v2789, %v2786
        %v2793 = vadd.f32 %v2692, 1.0
        %v2794 = vlog2.pop %v2793
        %v2795 = vmul.f32 %v2794, 0.6931472
        %v2796 = vmul.f32 -0.5, %v2692
        %v2797 = vadd.f32 %v2796, 1.0
        %v2798 = vmul.f32 %v2797, %v2692
        %v2799 = vand.u32 2147483647, %v2692
        %vm2800 = vcmp.lt.f32.partialorder %v2799, 0.0004427343
        %v2801 = vsel %vm2800, %v2798, %v2795
        %v2802 = vadd.f32 %v2694, 1.0
        %v2803 = vlog2.pop %v2802
        %v2804 = vmul.f32 %v2803, 0.6931472
        %v2805 = vmul.f32 -0.5, %v2694
        %v2806 = vadd.f32 %v2805, 1.0
        %v2807 = vmul.f32 %v2806, %v2694
        %v2808 = vand.u32 2147483647, %v2694
        %vm2809 = vcmp.lt.f32.partialorder %v2808, 0.0004427343
        %v2810 = vsel %vm2809, %v2807, %v2804
        %v2811 = vadd.f32 %v2696, 1.0
        %v2812 = vlog2.pop %v2811
        %v2813 = vmul.f32 %v2812, 0.6931472
        %v2814 = vmul.f32 -0.5, %v2696
        %v2815 = vadd.f32 %v2814, 1.0
        %v2816 = vmul.f32 %v2815, %v2696
        %v2817 = vand.u32 2147483647, %v2696
        %vm2818 = vcmp.lt.f32.partialorder %v2817, 0.0004427343
        %v2819 = vsel %vm2818, %v2816, %v2813
        %v2820 = vadd.f32 %v2698, 1.0
        %v2821 = vlog2.pop %v2820
        %v2822 = vmul.f32 %v2821, 0.6931472
        %v2823 = vmul.f32 -0.5, %v2698
        %v2824 = vadd.f32 %v2823, 1.0
        %v2825 = vmul.f32 %v2824, %v2698
        %v2826 = vand.u32 2147483647, %v2698
        %vm2827 = vcmp.lt.f32.partialorder %v2826, 0.0004427343
        %v2828 = vsel %vm2827, %v2825, %v2822
        %v2829 = vadd.f32 %v2700, 1.0
        %v2830 = vlog2.pop %v2829
        %v2831 = vmul.f32 %v2830, 0.6931472
        %v2832 = vmul.f32 -0.5, %v2700
        %v2833 = vadd.f32 %v2832, 1.0
        %v2834 = vmul.f32 %v2833, %v2700
        %v2835 = vand.u32 2147483647, %v2700
        %vm2836 = vcmp.lt.f32.partialorder %v2835, 0.0004427343
        %v2837 = vsel %vm2836, %v2834, %v2831
        %v2838 = vadd.f32 %v2702, 1.0
        %v2839 = vlog2.pop %v2838
        %v2840 = vmul.f32 %v2839, 0.6931472
        %v2841 = vmul.f32 -0.5, %v2702
        %v2842 = vadd.f32 %v2841, 1.0
        %v2843 = vmul.f32 %v2842, %v2702
        %v2844 = vand.u32 2147483647, %v2702
        %vm2845 = vcmp.lt.f32.partialorder %v2844, 0.0004427343
        %v2846 = vsel %vm2845, %v2843, %v2840
        %v2847 = vsub.f32 %v2623, %v2711
        %v2848 = vsub.f32 %v2624, %v2720
        %v2849 = vsub.f32 %v2625, %v2729
        %v2850 = vsub.f32 %v2626, %v2738
        %v2851 = vsub.f32 %v2627, %v2747
        %v2852 = vsub.f32 %v2628, %v2756
        %v2853 = vsub.f32 %v2629, %v2765
        %v2854 = vsub.f32 %v2630, %v2774
        %v2855 = vsub.f32 %v2631, %v2783
        %v2856 = vsub.f32 %v2632, %v2792
        %v2857 = vsub.f32 %v2633, %v2801
        %v2858 = vsub.f32 %v2634, %v2810
        %v2859 = vsub.f32 %v2635, %v2819
        %v2860 = vsub.f32 %v2636, %v2828
        %v2861 = vsub.f32 %v2637, %v2837
        %v2862 = vsub.f32 %v2638, %v2846
        %v2863 = vsub.f32 %v2431, %v2847
        %v2864 = vsub.f32 %v2432, %v2848
        %v2865 = vsub.f32 %v2433, %v2849
        %v2866 = vsub.f32 %v2434, %v2850
        %v2867 = vsub.f32 %v2435, %v2851
        %v2868 = vsub.f32 %v2436, %v2852
        %v2869 = vsub.f32 %v2437, %v2853
        %v2870 = vsub.f32 %v2438, %v2854
        %v2871 = vsub.f32 %v2439, %v2855
        %v2872 = vsub.f32 %v2440, %v2856
        %v2873 = vsub.f32 %v2441, %v2857
        %v2874 = vsub.f32 %v2442, %v2858
        %v2875 = vsub.f32 %v2443, %v2859
        %v2876 = vsub.f32 %v2444, %v2860
        %v2877 = vsub.f32 %v2445, %v2861
        %v2878 = vsub.f32 %v2446, %v2862
        %2879 = vset.pattern.permute.xlu0 4
        %2880 = vperm.xlu0 %2879, %v1135
        %v2881 = vpop.permute.xlu0 %2880
        %2882 = vset.pattern.permute.xlu0 4
        %2883 = vperm.xlu0 %2882, %v1136
        %v2884 = vpop.permute.xlu0 %2883
        %2885 = vset.pattern.permute.xlu0 4
        %2886 = vperm.xlu0 %2885, %v1137
        %v2887 = vpop.permute.xlu0 %2886
        %2888 = vset.pattern.permute.xlu0 4
        %2889 = vperm.xlu0 %2888, %v1138
        %v2890 = vpop.permute.xlu0 %2889
        %2891 = vset.pattern.permute.xlu0 4
        %2892 = vperm.xlu0 %2891, %v1139
        %v2893 = vpop.permute.xlu0 %2892
        %2894 = vset.pattern.permute.xlu0 4
        %2895 = vperm.xlu0 %2894, %v1140
        %v2896 = vpop.permute.xlu0 %2895
        %2897 = vset.pattern.permute.xlu0 4
        %2898 = vperm.xlu0 %2897, %v1141
        %v2899 = vpop.permute.xlu0 %2898
        %2900 = vset.pattern.permute.xlu0 4
        %2901 = vperm.xlu0 %2900, %v1142
        %v2902 = vpop.permute.xlu0 %2901
        %2903 = vset.pattern.permute.xlu0 4
        %2904 = vperm.xlu0 %2903, %v1143
        %v2905 = vpop.permute.xlu0 %2904
        %2906 = vset.pattern.permute.xlu0 4
        %2907 = vperm.xlu0 %2906, %v1144
        %v2908 = vpop.permute.xlu0 %2907
        %2909 = vset.pattern.permute.xlu0 4
        %2910 = vperm.xlu0 %2909, %v1145
        %v2911 = vpop.permute.xlu0 %2910
        %2912 = vset.pattern.permute.xlu0 4
        %2913 = vperm.xlu0 %2912, %v1146
        %v2914 = vpop.permute.xlu0 %2913
        %2915 = vset.pattern.permute.xlu0 4
        %2916 = vperm.xlu0 %2915, %v1147
        %v2917 = vpop.permute.xlu0 %2916
        %2918 = vset.pattern.permute.xlu0 4
        %2919 = vperm.xlu0 %2918, %v1148
        %v2920 = vpop.permute.xlu0 %2919
        %2921 = vset.pattern.permute.xlu0 4
        %2922 = vperm.xlu0 %2921, %v1149
        %v2923 = vpop.permute.xlu0 %2922
        %2924 = vset.pattern.permute.xlu0 4
        %2925 = vperm.xlu0 %2924, %v1150
        %v2926 = vpop.permute.xlu0 %2925
        %vm2927 = vcmp.eq.s32.totalorder %v2881, %v251
        %vm2928 = vcmp.eq.s32.totalorder %v2884, %v251
        %vm2929 = vcmp.eq.s32.totalorder %v2887, %v251
        %vm2930 = vcmp.eq.s32.totalorder %v2890, %v251
        %vm2931 = vcmp.eq.s32.totalorder %v2893, %v251
        %vm2932 = vcmp.eq.s32.totalorder %v2896, %v251
        %vm2933 = vcmp.eq.s32.totalorder %v2899, %v251
        %vm2934 = vcmp.eq.s32.totalorder %v2902, %v251
        %vm2935 = vcmp.eq.s32.totalorder %v2905, %v251
        %vm2936 = vcmp.eq.s32.totalorder %v2908, %v251
        %vm2937 = vcmp.eq.s32.totalorder %v2911, %v251
        %vm2938 = vcmp.eq.s32.totalorder %v2914, %v251
        %vm2939 = vcmp.eq.s32.totalorder %v2917, %v251
        %vm2940 = vcmp.eq.s32.totalorder %v2920, %v251
        %vm2941 = vcmp.eq.s32.totalorder %v2923, %v251
        %vm2942 = vcmp.eq.s32.totalorder %v2926, %v251
        %v2943 = vsel %vm2927, 1, 0
        %v2944 = vsel %vm2928, 1, 0
        %v2945 = vsel %vm2929, 1, 0
        %v2946 = vsel %vm2930, 1, 0
        %v2947 = vsel %vm2931, 1, 0
        %v2948 = vsel %vm2932, 1, 0
        %v2949 = vsel %vm2933, 1, 0
        %v2950 = vsel %vm2934, 1, 0
        %v2951 = vsel %vm2935, 1, 0
        %v2952 = vsel %vm2936, 1, 0
        %v2953 = vsel %vm2937, 1, 0
        %v2954 = vsel %vm2938, 1, 0
        %v2955 = vsel %vm2939, 1, 0
        %v2956 = vsel %vm2940, 1, 0
        %v2957 = vsel %vm2941, 1, 0
        %v2958 = vsel %vm2942, 1, 0
        %v2959 = vcvt.s32.f32 %v2943
        %v2960 = vcvt.s32.f32 %v2944
        %v2961 = vcvt.s32.f32 %v2945
        %v2962 = vcvt.s32.f32 %v2946
        %v2963 = vcvt.s32.f32 %v2947
        %v2964 = vcvt.s32.f32 %v2948
        %v2965 = vcvt.s32.f32 %v2949
        %v2966 = vcvt.s32.f32 %v2950
        %v2967 = vcvt.s32.f32 %v2951
        %v2968 = vcvt.s32.f32 %v2952
        %v2969 = vcvt.s32.f32 %v2953
        %v2970 = vcvt.s32.f32 %v2954
        %v2971 = vcvt.s32.f32 %v2955
        %v2972 = vcvt.s32.f32 %v2956
        %v2973 = vcvt.s32.f32 %v2957
        %v2974 = vcvt.s32.f32 %v2958
        %v2975 = vmul.f32 %v2959, %v625
        %v2976 = vmul.f32 %v2960, %v630
        %v2977 = vmul.f32 %v2961, %v635
        %v2978 = vmul.f32 %v2962, %v640
        %v2979 = vmul.f32 %v2963, %v645
        %v2980 = vmul.f32 %v2964, %v650
        %v2981 = vmul.f32 %v2965, %v655
        %v2982 = vmul.f32 %v2966, %v660
        %v2983 = vmul.f32 %v2967, %v665
        %v2984 = vmul.f32 %v2968, %v670
        %v2985 = vmul.f32 %v2969, %v675
        %v2986 = vmul.f32 %v2970, %v680
        %v2987 = vmul.f32 %v2971, %v685
        %v2988 = vmul.f32 %v2972, %v690
        %v2989 = vmul.f32 %v2973, %v695
        %v2990 = vmul.f32 %v2974, %v700
        %v2991 = vsel %vm364, %v2975, 0.0
        %2992 = vadd.xlane.f32.xlu0 %v2991
        %v2993 = vpop.xlane.xlu0 %2992
        %v2994 = vsel %vm364, %v2976, 0.0
        %2995 = vadd.xlane.f32.xlu0 %v2994
        %v2996 = vpop.xlane.xlu0 %2995
        %v2997 = vsel %vm364, %v2977, 0.0
        %2998 = vadd.xlane.f32.xlu0 %v2997
        %v2999 = vpop.xlane.xlu0 %2998
        %v3000 = vsel %vm364, %v2978, 0.0
        %3001 = vadd.xlane.f32.xlu0 %v3000
        %v3002 = vpop.xlane.xlu0 %3001
        %v3003 = vsel %vm364, %v2979, 0.0
        %3004 = vadd.xlane.f32.xlu0 %v3003
        %v3005 = vpop.xlane.xlu0 %3004
        %v3006 = vsel %vm364, %v2980, 0.0
        %3007 = vadd.xlane.f32.xlu0 %v3006
        %v3008 = vpop.xlane.xlu0 %3007
        %v3009 = vsel %vm364, %v2981, 0.0
        %3010 = vadd.xlane.f32.xlu0 %v3009
        %v3011 = vpop.xlane.xlu0 %3010
        %v3012 = vsel %vm364, %v2982, 0.0
        %3013 = vadd.xlane.f32.xlu0 %v3012
        %v3014 = vpop.xlane.xlu0 %3013
        %v3015 = vsel %vm364, %v2983, 0.0
        %3016 = vadd.xlane.f32.xlu0 %v3015
        %v3017 = vpop.xlane.xlu0 %3016
        %v3018 = vsel %vm364, %v2984, 0.0
        %3019 = vadd.xlane.f32.xlu0 %v3018
        %v3020 = vpop.xlane.xlu0 %3019
        %v3021 = vsel %vm364, %v2985, 0.0
        %3022 = vadd.xlane.f32.xlu0 %v3021
        %v3023 = vpop.xlane.xlu0 %3022
        %v3024 = vsel %vm364, %v2986, 0.0
        %3025 = vadd.xlane.f32.xlu0 %v3024
        %v3026 = vpop.xlane.xlu0 %3025
        %v3027 = vsel %vm364, %v2987, 0.0
        %3028 = vadd.xlane.f32.xlu0 %v3027
        %v3029 = vpop.xlane.xlu0 %3028
        %v3030 = vsel %vm364, %v2988, 0.0
        %3031 = vadd.xlane.f32.xlu0 %v3030
        %v3032 = vpop.xlane.xlu0 %3031
        %v3033 = vsel %vm364, %v2989, 0.0
        %3034 = vadd.xlane.f32.xlu0 %v3033
        %v3035 = vpop.xlane.xlu0 %3034
        %v3036 = vsel %vm364, %v2990, 0.0
        %3037 = vadd.xlane.f32.xlu0 %v3036
        %v3038 = vpop.xlane.xlu0 %3037
        %v3039 = vsub.f32 0.0, %v2993
        %v3040 = vsub.f32 0.0, %v2996
        %v3041 = vsub.f32 0.0, %v2999
        %v3042 = vsub.f32 0.0, %v3002
        %v3043 = vsub.f32 0.0, %v3005
        %v3044 = vsub.f32 0.0, %v3008
        %v3045 = vsub.f32 0.0, %v3011
        %v3046 = vsub.f32 0.0, %v3014
        %v3047 = vsub.f32 0.0, %v3017
        %v3048 = vsub.f32 0.0, %v3020
        %v3049 = vsub.f32 0.0, %v3023
        %v3050 = vsub.f32 0.0, %v3026
        %v3051 = vsub.f32 0.0, %v3029
        %v3052 = vsub.f32 0.0, %v3032
        %v3053 = vsub.f32 0.0, %v3035
        %v3054 = vsub.f32 0.0, %v3038
        %v3055 = vmin.f32 %v3039, 0.0
        %v3056 = vmin.f32 %v3040, 0.0
        %v3057 = vmin.f32 %v3041, 0.0
        %v3058 = vmin.f32 %v3042, 0.0
        %v3059 = vmin.f32 %v3043, 0.0
        %v3060 = vmin.f32 %v3044, 0.0
        %v3061 = vmin.f32 %v3045, 0.0
        %v3062 = vmin.f32 %v3046, 0.0
        %v3063 = vmin.f32 %v3047, 0.0
        %v3064 = vmin.f32 %v3048, 0.0
        %v3065 = vmin.f32 %v3049, 0.0
        %v3066 = vmin.f32 %v3050, 0.0
        %v3067 = vmin.f32 %v3051, 0.0
        %v3068 = vmin.f32 %v3052, 0.0
        %v3069 = vmin.f32 %v3053, 0.0
        %v3070 = vmin.f32 %v3054, 0.0
        %v3071 = vand.u32 2147483647, %v3039
        %v3072 = vand.u32 2147483647, %v3040
        %v3073 = vand.u32 2147483647, %v3041
        %v3074 = vand.u32 2147483647, %v3042
        %v3075 = vand.u32 2147483647, %v3043
        %v3076 = vand.u32 2147483647, %v3044
        %v3077 = vand.u32 2147483647, %v3045
        %v3078 = vand.u32 2147483647, %v3046
        %v3079 = vand.u32 2147483647, %v3047
        %v3080 = vand.u32 2147483647, %v3048
        %v3081 = vand.u32 2147483647, %v3049
        %v3082 = vand.u32 2147483647, %v3050
        %v3083 = vand.u32 2147483647, %v3051
        %v3084 = vand.u32 2147483647, %v3052
        %v3085 = vand.u32 2147483647, %v3053
        %v3086 = vand.u32 2147483647, %v3054
        %v3087 = vsub.f32 0.0, %v3071
        %v3088 = vsub.f32 0.0, %v3072
        %v3089 = vsub.f32 0.0, %v3073
        %v3090 = vsub.f32 0.0, %v3074
        %v3091 = vsub.f32 0.0, %v3075
        %v3092 = vsub.f32 0.0, %v3076
        %v3093 = vsub.f32 0.0, %v3077
        %v3094 = vsub.f32 0.0, %v3078
        %v3095 = vsub.f32 0.0, %v3079
        %v3096 = vsub.f32 0.0, %v3080
        %v3097 = vsub.f32 0.0, %v3081
        %v3098 = vsub.f32 0.0, %v3082
        %v3099 = vsub.f32 0.0, %v3083
        %v3100 = vsub.f32 0.0, %v3084
        %v3101 = vsub.f32 0.0, %v3085
        %v3102 = vsub.f32 0.0, %v3086
        %v3103 = vmul.f32 %v3087, 1.442695
        %v3104 = vpow.pop %v3103
        %v3105 = vmul.f32 %v3088, 1.442695
        %v3106 = vpow.pop %v3105
        %v3107 = vmul.f32 %v3089, 1.442695
        %v3108 = vpow.pop %v3107
        %v3109 = vmul.f32 %v3090, 1.442695
        %v3110 = vpow.pop %v3109
        %v3111 = vmul.f32 %v3091, 1.442695
        %v3112 = vpow.pop %v3111
        %v3113 = vmul.f32 %v3092, 1.442695
        %v3114 = vpow.pop %v3113
        %v3115 = vmul.f32 %v3093, 1.442695
        %v3116 = vpow.pop %v3115
        %v3117 = vmul.f32 %v3094, 1.442695
        %v3118 = vpow.pop %v3117
        %v3119 = vmul.f32 %v3095, 1.442695
        %v3120 = vpow.pop %v3119
        %v3121 = vmul.f32 %v3096, 1.442695
        %v3122 = vpow.pop %v3121
        %v3123 = vmul.f32 %v3097, 1.442695
        %v3124 = vpow.pop %v3123
        %v3125 = vmul.f32 %v3098, 1.442695
        %v3126 = vpow.pop %v3125
        %v3127 = vmul.f32 %v3099, 1.442695
        %v3128 = vpow.pop %v3127
        %v3129 = vmul.f32 %v3100, 1.442695
        %v3130 = vpow.pop %v3129
        %v3131 = vmul.f32 %v3101, 1.442695
        %v3132 = vpow.pop %v3131
        %v3133 = vmul.f32 %v3102, 1.442695
        %v3134 = vpow.pop %v3133
        %v3135 = vadd.f32 %v3104, 1.0
        %v3136 = vlog2.pop %v3135
        %v3137 = vmul.f32 %v3136, 0.6931472
        %v3138 = vmul.f32 -0.5, %v3104
        %v3139 = vadd.f32 %v3138, 1.0
        %v3140 = vmul.f32 %v3139, %v3104
        %v3141 = vand.u32 2147483647, %v3104
        %vm3142 = vcmp.lt.f32.partialorder %v3141, 0.0004427343
        %v3143 = vsel %vm3142, %v3140, %v3137
        %v3144 = vadd.f32 %v3106, 1.0
        %v3145 = vlog2.pop %v3144
        %v3146 = vmul.f32 %v3145, 0.6931472
        %v3147 = vmul.f32 -0.5, %v3106
        %v3148 = vadd.f32 %v3147, 1.0
        %v3149 = vmul.f32 %v3148, %v3106
        %v3150 = vand.u32 2147483647, %v3106
        %vm3151 = vcmp.lt.f32.partialorder %v3150, 0.0004427343
        %v3152 = vsel %vm3151, %v3149, %v3146
        %v3153 = vadd.f32 %v3108, 1.0
        %v3154 = vlog2.pop %v3153
        %v3155 = vmul.f32 %v3154, 0.6931472
        %v3156 = vmul.f32 -0.5, %v3108
        %v3157 = vadd.f32 %v3156, 1.0
        %v3158 = vmul.f32 %v3157, %v3108
        %v3159 = vand.u32 2147483647, %v3108
        %vm3160 = vcmp.lt.f32.partialorder %v3159, 0.0004427343
        %v3161 = vsel %vm3160, %v3158, %v3155
        %v3162 = vadd.f32 %v3110, 1.0
        %v3163 = vlog2.pop %v3162
        %v3164 = vmul.f32 %v3163, 0.6931472
        %v3165 = vmul.f32 -0.5, %v3110
        %v3166 = vadd.f32 %v3165, 1.0
        %v3167 = vmul.f32 %v3166, %v3110
        %v3168 = vand.u32 2147483647, %v3110
        %vm3169 = vcmp.lt.f32.partialorder %v3168, 0.0004427343
        %v3170 = vsel %vm3169, %v3167, %v3164
        %v3171 = vadd.f32 %v3112, 1.0
        %v3172 = vlog2.pop %v3171
        %v3173 = vmul.f32 %v3172, 0.6931472
        %v3174 = vmul.f32 -0.5, %v3112
        %v3175 = vadd.f32 %v3174, 1.0
        %v3176 = vmul.f32 %v3175, %v3112
        %v3177 = vand.u32 2147483647, %v3112
        %vm3178 = vcmp.lt.f32.partialorder %v3177, 0.0004427343
        %v3179 = vsel %vm3178, %v3176, %v3173
        %v3180 = vadd.f32 %v3114, 1.0
        %v3181 = vlog2.pop %v3180
        %v3182 = vmul.f32 %v3181, 0.6931472
        %v3183 = vmul.f32 -0.5, %v3114
        %v3184 = vadd.f32 %v3183, 1.0
        %v3185 = vmul.f32 %v3184, %v3114
        %v3186 = vand.u32 2147483647, %v3114
        %vm3187 = vcmp.lt.f32.partialorder %v3186, 0.0004427343
        %v3188 = vsel %vm3187, %v3185, %v3182
        %v3189 = vadd.f32 %v3116, 1.0
        %v3190 = vlog2.pop %v3189
        %v3191 = vmul.f32 %v3190, 0.6931472
        %v3192 = vmul.f32 -0.5, %v3116
        %v3193 = vadd.f32 %v3192, 1.0
        %v3194 = vmul.f32 %v3193, %v3116
        %v3195 = vand.u32 2147483647, %v3116
        %vm3196 = vcmp.lt.f32.partialorder %v3195, 0.0004427343
        %v3197 = vsel %vm3196, %v3194, %v3191
        %v3198 = vadd.f32 %v3118, 1.0
        %v3199 = vlog2.pop %v3198
        %v3200 = vmul.f32 %v3199, 0.6931472
        %v3201 = vmul.f32 -0.5, %v3118
        %v3202 = vadd.f32 %v3201, 1.0
        %v3203 = vmul.f32 %v3202, %v3118
        %v3204 = vand.u32 2147483647, %v3118
        %vm3205 = vcmp.lt.f32.partialorder %v3204, 0.0004427343
        %v3206 = vsel %vm3205, %v3203, %v3200
        %v3207 = vadd.f32 %v3120, 1.0
        %v3208 = vlog2.pop %v3207
        %v3209 = vmul.f32 %v3208, 0.6931472
        %v3210 = vmul.f32 -0.5, %v3120
        %v3211 = vadd.f32 %v3210, 1.0
        %v3212 = vmul.f32 %v3211, %v3120
        %v3213 = vand.u32 2147483647, %v3120
        %vm3214 = vcmp.lt.f32.partialorder %v3213, 0.0004427343
        %v3215 = vsel %vm3214, %v3212, %v3209
        %v3216 = vadd.f32 %v3122, 1.0
        %v3217 = vlog2.pop %v3216
        %v3218 = vmul.f32 %v3217, 0.6931472
        %v3219 = vmul.f32 -0.5, %v3122
        %v3220 = vadd.f32 %v3219, 1.0
        %v3221 = vmul.f32 %v3220, %v3122
        %v3222 = vand.u32 2147483647, %v3122
        %vm3223 = vcmp.lt.f32.partialorder %v3222, 0.0004427343
        %v3224 = vsel %vm3223, %v3221, %v3218
        %v3225 = vadd.f32 %v3124, 1.0
        %v3226 = vlog2.pop %v3225
        %v3227 = vmul.f32 %v3226, 0.6931472
        %v3228 = vmul.f32 -0.5, %v3124
        %v3229 = vadd.f32 %v3228, 1.0
        %v3230 = vmul.f32 %v3229, %v3124
        %v3231 = vand.u32 2147483647, %v3124
        %vm3232 = vcmp.lt.f32.partialorder %v3231, 0.0004427343
        %v3233 = vsel %vm3232, %v3230, %v3227
        %v3234 = vadd.f32 %v3126, 1.0
        %v3235 = vlog2.pop %v3234
        %v3236 = vmul.f32 %v3235, 0.6931472
        %v3237 = vmul.f32 -0.5, %v3126
        %v3238 = vadd.f32 %v3237, 1.0
        %v3239 = vmul.f32 %v3238, %v3126
        %v3240 = vand.u32 2147483647, %v3126
        %vm3241 = vcmp.lt.f32.partialorder %v3240, 0.0004427343
        %v3242 = vsel %vm3241, %v3239, %v3236
        %v3243 = vadd.f32 %v3128, 1.0
        %v3244 = vlog2.pop %v3243
        %v3245 = vmul.f32 %v3244, 0.6931472
        %v3246 = vmul.f32 -0.5, %v3128
        %v3247 = vadd.f32 %v3246, 1.0
        %v3248 = vmul.f32 %v3247, %v3128
        %v3249 = vand.u32 2147483647, %v3128
        %vm3250 = vcmp.lt.f32.partialorder %v3249, 0.0004427343
        %v3251 = vsel %vm3250, %v3248, %v3245
        %v3252 = vadd.f32 %v3130, 1.0
        %v3253 = vlog2.pop %v3252
        %v3254 = vmul.f32 %v3253, 0.6931472
        %v3255 = vmul.f32 -0.5, %v3130
        %v3256 = vadd.f32 %v3255, 1.0
        %v3257 = vmul.f32 %v3256, %v3130
        %v3258 = vand.u32 2147483647, %v3130
        %vm3259 = vcmp.lt.f32.partialorder %v3258, 0.0004427343
        %v3260 = vsel %vm3259, %v3257, %v3254
        %v3261 = vadd.f32 %v3132, 1.0
        %v3262 = vlog2.pop %v3261
        %v3263 = vmul.f32 %v3262, 0.6931472
        %v3264 = vmul.f32 -0.5, %v3132
        %v3265 = vadd.f32 %v3264, 1.0
        %v3266 = vmul.f32 %v3265, %v3132
        %v3267 = vand.u32 2147483647, %v3132
        %vm3268 = vcmp.lt.f32.partialorder %v3267, 0.0004427343
        %v3269 = vsel %vm3268, %v3266, %v3263
        %v3270 = vadd.f32 %v3134, 1.0
        %v3271 = vlog2.pop %v3270
        %v3272 = vmul.f32 %v3271, 0.6931472
        %v3273 = vmul.f32 -0.5, %v3134
        %v3274 = vadd.f32 %v3273, 1.0
        %v3275 = vmul.f32 %v3274, %v3134
        %v3276 = vand.u32 2147483647, %v3134
        %vm3277 = vcmp.lt.f32.partialorder %v3276, 0.0004427343
        %v3278 = vsel %vm3277, %v3275, %v3272
        %v3279 = vsub.f32 %v3055, %v3143
        %v3280 = vsub.f32 %v3056, %v3152
        %v3281 = vsub.f32 %v3057, %v3161
        %v3282 = vsub.f32 %v3058, %v3170
        %v3283 = vsub.f32 %v3059, %v3179
        %v3284 = vsub.f32 %v3060, %v3188
        %v3285 = vsub.f32 %v3061, %v3197
        %v3286 = vsub.f32 %v3062, %v3206
        %v3287 = vsub.f32 %v3063, %v3215
        %v3288 = vsub.f32 %v3064, %v3224
        %v3289 = vsub.f32 %v3065, %v3233
        %v3290 = vsub.f32 %v3066, %v3242
        %v3291 = vsub.f32 %v3067, %v3251
        %v3292 = vsub.f32 %v3068, %v3260
        %v3293 = vsub.f32 %v3069, %v3269
        %v3294 = vsub.f32 %v3070, %v3278
        %v3295 = vsub.f32 %v2863, %v3279
        %v3296 = vsub.f32 %v2864, %v3280
        %v3297 = vsub.f32 %v2865, %v3281
        %v3298 = vsub.f32 %v2866, %v3282
        %v3299 = vsub.f32 %v2867, %v3283
        %v3300 = vsub.f32 %v2868, %v3284
        %v3301 = vsub.f32 %v2869, %v3285
        %v3302 = vsub.f32 %v2870, %v3286
        %v3303 = vsub.f32 %v2871, %v3287
        %v3304 = vsub.f32 %v2872, %v3288
        %v3305 = vsub.f32 %v2873, %v3289
        %v3306 = vsub.f32 %v2874, %v3290
        %v3307 = vsub.f32 %v2875, %v3291
        %v3308 = vsub.f32 %v2876, %v3292
        %v3309 = vsub.f32 %v2877, %v3293
        %v3310 = vsub.f32 %v2878, %v3294
        %3311 = vset.pattern.permute.xlu0 5
        %3312 = vperm.xlu0 %3311, %v1135
        %v3313 = vpop.permute.xlu0 %3312
        %3314 = vset.pattern.permute.xlu0 5
        %3315 = vperm.xlu0 %3314, %v1136
        %v3316 = vpop.permute.xlu0 %3315
        %3317 = vset.pattern.permute.xlu0 5
        %3318 = vperm.xlu0 %3317, %v1137
        %v3319 = vpop.permute.xlu0 %3318
        %3320 = vset.pattern.permute.xlu0 5
        %3321 = vperm.xlu0 %3320, %v1138
        %v3322 = vpop.permute.xlu0 %3321
        %3323 = vset.pattern.permute.xlu0 5
        %3324 = vperm.xlu0 %3323, %v1139
        %v3325 = vpop.permute.xlu0 %3324
        %3326 = vset.pattern.permute.xlu0 5
        %3327 = vperm.xlu0 %3326, %v1140
        %v3328 = vpop.permute.xlu0 %3327
        %3329 = vset.pattern.permute.xlu0 5
        %3330 = vperm.xlu0 %3329, %v1141
        %v3331 = vpop.permute.xlu0 %3330
        %3332 = vset.pattern.permute.xlu0 5
        %3333 = vperm.xlu0 %3332, %v1142
        %v3334 = vpop.permute.xlu0 %3333
        %3335 = vset.pattern.permute.xlu0 5
        %3336 = vperm.xlu0 %3335, %v1143
        %v3337 = vpop.permute.xlu0 %3336
        %3338 = vset.pattern.permute.xlu0 5
        %3339 = vperm.xlu0 %3338, %v1144
        %v3340 = vpop.permute.xlu0 %3339
        %3341 = vset.pattern.permute.xlu0 5
        %3342 = vperm.xlu0 %3341, %v1145
        %v3343 = vpop.permute.xlu0 %3342
        %3344 = vset.pattern.permute.xlu0 5
        %3345 = vperm.xlu0 %3344, %v1146
        %v3346 = vpop.permute.xlu0 %3345
        %3347 = vset.pattern.permute.xlu0 5
        %3348 = vperm.xlu0 %3347, %v1147
        %v3349 = vpop.permute.xlu0 %3348
        %3350 = vset.pattern.permute.xlu0 5
        %3351 = vperm.xlu0 %3350, %v1148
        %v3352 = vpop.permute.xlu0 %3351
        %3353 = vset.pattern.permute.xlu0 5
        %3354 = vperm.xlu0 %3353, %v1149
        %v3355 = vpop.permute.xlu0 %3354
        %3356 = vset.pattern.permute.xlu0 5
        %3357 = vperm.xlu0 %3356, %v1150
        %v3358 = vpop.permute.xlu0 %3357
        %vm3359 = vcmp.eq.s32.totalorder %v3313, %v251
        %vm3360 = vcmp.eq.s32.totalorder %v3316, %v251
        %vm3361 = vcmp.eq.s32.totalorder %v3319, %v251
        %vm3362 = vcmp.eq.s32.totalorder %v3322, %v251
        %vm3363 = vcmp.eq.s32.totalorder %v3325, %v251
        %vm3364 = vcmp.eq.s32.totalorder %v3328, %v251
        %vm3365 = vcmp.eq.s32.totalorder %v3331, %v251
        %vm3366 = vcmp.eq.s32.totalorder %v3334, %v251
        %vm3367 = vcmp.eq.s32.totalorder %v3337, %v251
        %vm3368 = vcmp.eq.s32.totalorder %v3340, %v251
        %vm3369 = vcmp.eq.s32.totalorder %v3343, %v251
        %vm3370 = vcmp.eq.s32.totalorder %v3346, %v251
        %vm3371 = vcmp.eq.s32.totalorder %v3349, %v251
        %vm3372 = vcmp.eq.s32.totalorder %v3352, %v251
        %vm3373 = vcmp.eq.s32.totalorder %v3355, %v251
        %vm3374 = vcmp.eq.s32.totalorder %v3358, %v251
        %v3375 = vsel %vm3359, 1, 0
        %v3376 = vsel %vm3360, 1, 0
        %v3377 = vsel %vm3361, 1, 0
        %v3378 = vsel %vm3362, 1, 0
        %v3379 = vsel %vm3363, 1, 0
        %v3380 = vsel %vm3364, 1, 0
        %v3381 = vsel %vm3365, 1, 0
        %v3382 = vsel %vm3366, 1, 0
        %v3383 = vsel %vm3367, 1, 0
        %v3384 = vsel %vm3368, 1, 0
        %v3385 = vsel %vm3369, 1, 0
        %v3386 = vsel %vm3370, 1, 0
        %v3387 = vsel %vm3371, 1, 0
        %v3388 = vsel %vm3372, 1, 0
        %v3389 = vsel %vm3373, 1, 0
        %v3390 = vsel %vm3374, 1, 0
        %v3391 = vcvt.s32.f32 %v3375
        %v3392 = vcvt.s32.f32 %v3376
        %v3393 = vcvt.s32.f32 %v3377
        %v3394 = vcvt.s32.f32 %v3378
        %v3395 = vcvt.s32.f32 %v3379
        %v3396 = vcvt.s32.f32 %v3380
        %v3397 = vcvt.s32.f32 %v3381
        %v3398 = vcvt.s32.f32 %v3382
        %v3399 = vcvt.s32.f32 %v3383
        %v3400 = vcvt.s32.f32 %v3384
        %v3401 = vcvt.s32.f32 %v3385
        %v3402 = vcvt.s32.f32 %v3386
        %v3403 = vcvt.s32.f32 %v3387
        %v3404 = vcvt.s32.f32 %v3388
        %v3405 = vcvt.s32.f32 %v3389
        %v3406 = vcvt.s32.f32 %v3390
        %v3407 = vmul.f32 %v3391, %v625
        %v3408 = vmul.f32 %v3392, %v630
        %v3409 = vmul.f32 %v3393, %v635
        %v3410 = vmul.f32 %v3394, %v640
        %v3411 = vmul.f32 %v3395, %v645
        %v3412 = vmul.f32 %v3396, %v650
        %v3413 = vmul.f32 %v3397, %v655
        %v3414 = vmul.f32 %v3398, %v660
        %v3415 = vmul.f32 %v3399, %v665
        %v3416 = vmul.f32 %v3400, %v670
        %v3417 = vmul.f32 %v3401, %v675
        %v3418 = vmul.f32 %v3402, %v680
        %v3419 = vmul.f32 %v3403, %v685
        %v3420 = vmul.f32 %v3404, %v690
        %v3421 = vmul.f32 %v3405, %v695
        %v3422 = vmul.f32 %v3406, %v700
        %v3423 = vsel %vm364, %v3407, 0.0
        %3424 = vadd.xlane.f32.xlu0 %v3423
        %v3425 = vpop.xlane.xlu0 %3424
        %v3426 = vsel %vm364, %v3408, 0.0
        %3427 = vadd.xlane.f32.xlu0 %v3426
        %v3428 = vpop.xlane.xlu0 %3427
        %v3429 = vsel %vm364, %v3409, 0.0
        %3430 = vadd.xlane.f32.xlu0 %v3429
        %v3431 = vpop.xlane.xlu0 %3430
        %v3432 = vsel %vm364, %v3410, 0.0
        %3433 = vadd.xlane.f32.xlu0 %v3432
        %v3434 = vpop.xlane.xlu0 %3433
        %v3435 = vsel %vm364, %v3411, 0.0
        %3436 = vadd.xlane.f32.xlu0 %v3435
        %v3437 = vpop.xlane.xlu0 %3436
        %v3438 = vsel %vm364, %v3412, 0.0
        %3439 = vadd.xlane.f32.xlu0 %v3438
        %v3440 = vpop.xlane.xlu0 %3439
        %v3441 = vsel %vm364, %v3413, 0.0
        %3442 = vadd.xlane.f32.xlu0 %v3441
        %v3443 = vpop.xlane.xlu0 %3442
        %v3444 = vsel %vm364, %v3414, 0.0
        %3445 = vadd.xlane.f32.xlu0 %v3444
        %v3446 = vpop.xlane.xlu0 %3445
        %v3447 = vsel %vm364, %v3415, 0.0
        %3448 = vadd.xlane.f32.xlu0 %v3447
        %v3449 = vpop.xlane.xlu0 %3448
        %v3450 = vsel %vm364, %v3416, 0.0
        %3451 = vadd.xlane.f32.xlu0 %v3450
        %v3452 = vpop.xlane.xlu0 %3451
        %v3453 = vsel %vm364, %v3417, 0.0
        %3454 = vadd.xlane.f32.xlu0 %v3453
        %v3455 = vpop.xlane.xlu0 %3454
        %v3456 = vsel %vm364, %v3418, 0.0
        %3457 = vadd.xlane.f32.xlu0 %v3456
        %v3458 = vpop.xlane.xlu0 %3457
        %v3459 = vsel %vm364, %v3419, 0.0
        %3460 = vadd.xlane.f32.xlu0 %v3459
        %v3461 = vpop.xlane.xlu0 %3460
        %v3462 = vsel %vm364, %v3420, 0.0
        %3463 = vadd.xlane.f32.xlu0 %v3462
        %v3464 = vpop.xlane.xlu0 %3463
        %v3465 = vsel %vm364, %v3421, 0.0
        %3466 = vadd.xlane.f32.xlu0 %v3465
        %v3467 = vpop.xlane.xlu0 %3466
        %v3468 = vsel %vm364, %v3422, 0.0
        %3469 = vadd.xlane.f32.xlu0 %v3468
        %v3470 = vpop.xlane.xlu0 %3469
        %v3471 = vsub.f32 0.0, %v3425
        %v3472 = vsub.f32 0.0, %v3428
        %v3473 = vsub.f32 0.0, %v3431
        %v3474 = vsub.f32 0.0, %v3434
        %v3475 = vsub.f32 0.0, %v3437
        %v3476 = vsub.f32 0.0, %v3440
        %v3477 = vsub.f32 0.0, %v3443
        %v3478 = vsub.f32 0.0, %v3446
        %v3479 = vsub.f32 0.0, %v3449
        %v3480 = vsub.f32 0.0, %v3452
        %v3481 = vsub.f32 0.0, %v3455
        %v3482 = vsub.f32 0.0, %v3458
        %v3483 = vsub.f32 0.0, %v3461
        %v3484 = vsub.f32 0.0, %v3464
        %v3485 = vsub.f32 0.0, %v3467
        %v3486 = vsub.f32 0.0, %v3470
        %v3487 = vmin.f32 %v3471, 0.0
        %v3488 = vmin.f32 %v3472, 0.0
        %v3489 = vmin.f32 %v3473, 0.0
        %v3490 = vmin.f32 %v3474, 0.0
        %v3491 = vmin.f32 %v3475, 0.0
        %v3492 = vmin.f32 %v3476, 0.0
        %v3493 = vmin.f32 %v3477, 0.0
        %v3494 = vmin.f32 %v3478, 0.0
        %v3495 = vmin.f32 %v3479, 0.0
        %v3496 = vmin.f32 %v3480, 0.0
        %v3497 = vmin.f32 %v3481, 0.0
        %v3498 = vmin.f32 %v3482, 0.0
        %v3499 = vmin.f32 %v3483, 0.0
        %v3500 = vmin.f32 %v3484, 0.0
        %v3501 = vmin.f32 %v3485, 0.0
        %v3502 = vmin.f32 %v3486, 0.0
        %v3503 = vand.u32 2147483647, %v3471
        %v3504 = vand.u32 2147483647, %v3472
        %v3505 = vand.u32 2147483647, %v3473
        %v3506 = vand.u32 2147483647, %v3474
        %v3507 = vand.u32 2147483647, %v3475
        %v3508 = vand.u32 2147483647, %v3476
        %v3509 = vand.u32 2147483647, %v3477
        %v3510 = vand.u32 2147483647, %v3478
        %v3511 = vand.u32 2147483647, %v3479
        %v3512 = vand.u32 2147483647, %v3480
        %v3513 = vand.u32 2147483647, %v3481
        %v3514 = vand.u32 2147483647, %v3482
        %v3515 = vand.u32 2147483647, %v3483
        %v3516 = vand.u32 2147483647, %v3484
        %v3517 = vand.u32 2147483647, %v3485
        %v3518 = vand.u32 2147483647, %v3486
        %v3519 = vsub.f32 0.0, %v3503
        %v3520 = vsub.f32 0.0, %v3504
        %v3521 = vsub.f32 0.0, %v3505
        %v3522 = vsub.f32 0.0, %v3506
        %v3523 = vsub.f32 0.0, %v3507
        %v3524 = vsub.f32 0.0, %v3508
        %v3525 = vsub.f32 0.0, %v3509
        %v3526 = vsub.f32 0.0, %v3510
        %v3527 = vsub.f32 0.0, %v3511
        %v3528 = vsub.f32 0.0, %v3512
        %v3529 = vsub.f32 0.0, %v3513
        %v3530 = vsub.f32 0.0, %v3514
        %v3531 = vsub.f32 0.0, %v3515
        %v3532 = vsub.f32 0.0, %v3516
        %v3533 = vsub.f32 0.0, %v3517
        %v3534 = vsub.f32 0.0, %v3518
        %v3535 = vmul.f32 %v3519, 1.442695
        %v3536 = vpow.pop %v3535
        %v3537 = vmul.f32 %v3520, 1.442695
        %v3538 = vpow.pop %v3537
        %v3539 = vmul.f32 %v3521, 1.442695
        %v3540 = vpow.pop %v3539
        %v3541 = vmul.f32 %v3522, 1.442695
        %v3542 = vpow.pop %v3541
        %v3543 = vmul.f32 %v3523, 1.442695
        %v3544 = vpow.pop %v3543
        %v3545 = vmul.f32 %v3524, 1.442695
        %v3546 = vpow.pop %v3545
        %v3547 = vmul.f32 %v3525, 1.442695
        %v3548 = vpow.pop %v3547
        %v3549 = vmul.f32 %v3526, 1.442695
        %v3550 = vpow.pop %v3549
        %v3551 = vmul.f32 %v3527, 1.442695
        %v3552 = vpow.pop %v3551
        %v3553 = vmul.f32 %v3528, 1.442695
        %v3554 = vpow.pop %v3553
        %v3555 = vmul.f32 %v3529, 1.442695
        %v3556 = vpow.pop %v3555
        %v3557 = vmul.f32 %v3530, 1.442695
        %v3558 = vpow.pop %v3557
        %v3559 = vmul.f32 %v3531, 1.442695
        %v3560 = vpow.pop %v3559
        %v3561 = vmul.f32 %v3532, 1.442695
        %v3562 = vpow.pop %v3561
        %v3563 = vmul.f32 %v3533, 1.442695
        %v3564 = vpow.pop %v3563
        %v3565 = vmul.f32 %v3534, 1.442695
        %v3566 = vpow.pop %v3565
        %v3567 = vadd.f32 %v3536, 1.0
        %v3568 = vlog2.pop %v3567
        %v3569 = vmul.f32 %v3568, 0.6931472
        %v3570 = vmul.f32 -0.5, %v3536
        %v3571 = vadd.f32 %v3570, 1.0
        %v3572 = vmul.f32 %v3571, %v3536
        %v3573 = vand.u32 2147483647, %v3536
        %vm3574 = vcmp.lt.f32.partialorder %v3573, 0.0004427343
        %v3575 = vsel %vm3574, %v3572, %v3569
        %v3576 = vadd.f32 %v3538, 1.0
        %v3577 = vlog2.pop %v3576
        %v3578 = vmul.f32 %v3577, 0.6931472
        %v3579 = vmul.f32 -0.5, %v3538
        %v3580 = vadd.f32 %v3579, 1.0
        %v3581 = vmul.f32 %v3580, %v3538
        %v3582 = vand.u32 2147483647, %v3538
        %vm3583 = vcmp.lt.f32.partialorder %v3582, 0.0004427343
        %v3584 = vsel %vm3583, %v3581, %v3578
        %v3585 = vadd.f32 %v3540, 1.0
        %v3586 = vlog2.pop %v3585
        %v3587 = vmul.f32 %v3586, 0.6931472
        %v3588 = vmul.f32 -0.5, %v3540
        %v3589 = vadd.f32 %v3588, 1.0
        %v3590 = vmul.f32 %v3589, %v3540
        %v3591 = vand.u32 2147483647, %v3540
        %vm3592 = vcmp.lt.f32.partialorder %v3591, 0.0004427343
        %v3593 = vsel %vm3592, %v3590, %v3587
        %v3594 = vadd.f32 %v3542, 1.0
        %v3595 = vlog2.pop %v3594
        %v3596 = vmul.f32 %v3595, 0.6931472
        %v3597 = vmul.f32 -0.5, %v3542
        %v3598 = vadd.f32 %v3597, 1.0
        %v3599 = vmul.f32 %v3598, %v3542
        %v3600 = vand.u32 2147483647, %v3542
        %vm3601 = vcmp.lt.f32.partialorder %v3600, 0.0004427343
        %v3602 = vsel %vm3601, %v3599, %v3596
        %v3603 = vadd.f32 %v3544, 1.0
        %v3604 = vlog2.pop %v3603
        %v3605 = vmul.f32 %v3604, 0.6931472
        %v3606 = vmul.f32 -0.5, %v3544
        %v3607 = vadd.f32 %v3606, 1.0
        %v3608 = vmul.f32 %v3607, %v3544
        %v3609 = vand.u32 2147483647, %v3544
        %vm3610 = vcmp.lt.f32.partialorder %v3609, 0.0004427343
        %v3611 = vsel %vm3610, %v3608, %v3605
        %v3612 = vadd.f32 %v3546, 1.0
        %v3613 = vlog2.pop %v3612
        %v3614 = vmul.f32 %v3613, 0.6931472
        %v3615 = vmul.f32 -0.5, %v3546
        %v3616 = vadd.f32 %v3615, 1.0
        %v3617 = vmul.f32 %v3616, %v3546
        %v3618 = vand.u32 2147483647, %v3546
        %vm3619 = vcmp.lt.f32.partialorder %v3618, 0.0004427343
        %v3620 = vsel %vm3619, %v3617, %v3614
        %v3621 = vadd.f32 %v3548, 1.0
        %v3622 = vlog2.pop %v3621
        %v3623 = vmul.f32 %v3622, 0.6931472
        %v3624 = vmul.f32 -0.5, %v3548
        %v3625 = vadd.f32 %v3624, 1.0
        %v3626 = vmul.f32 %v3625, %v3548
        %v3627 = vand.u32 2147483647, %v3548
        %vm3628 = vcmp.lt.f32.partialorder %v3627, 0.0004427343
        %v3629 = vsel %vm3628, %v3626, %v3623
        %v3630 = vadd.f32 %v3550, 1.0
        %v3631 = vlog2.pop %v3630
        %v3632 = vmul.f32 %v3631, 0.6931472
        %v3633 = vmul.f32 -0.5, %v3550
        %v3634 = vadd.f32 %v3633, 1.0
        %v3635 = vmul.f32 %v3634, %v3550
        %v3636 = vand.u32 2147483647, %v3550
        %vm3637 = vcmp.lt.f32.partialorder %v3636, 0.0004427343
        %v3638 = vsel %vm3637, %v3635, %v3632
        %v3639 = vadd.f32 %v3552, 1.0
        %v3640 = vlog2.pop %v3639
        %v3641 = vmul.f32 %v3640, 0.6931472
        %v3642 = vmul.f32 -0.5, %v3552
        %v3643 = vadd.f32 %v3642, 1.0
        %v3644 = vmul.f32 %v3643, %v3552
        %v3645 = vand.u32 2147483647, %v3552
        %vm3646 = vcmp.lt.f32.partialorder %v3645, 0.0004427343
        %v3647 = vsel %vm3646, %v3644, %v3641
        %v3648 = vadd.f32 %v3554, 1.0
        %v3649 = vlog2.pop %v3648
        %v3650 = vmul.f32 %v3649, 0.6931472
        %v3651 = vmul.f32 -0.5, %v3554
        %v3652 = vadd.f32 %v3651, 1.0
        %v3653 = vmul.f32 %v3652, %v3554
        %v3654 = vand.u32 2147483647, %v3554
        %vm3655 = vcmp.lt.f32.partialorder %v3654, 0.0004427343
        %v3656 = vsel %vm3655, %v3653, %v3650
        %v3657 = vadd.f32 %v3556, 1.0
        %v3658 = vlog2.pop %v3657
        %v3659 = vmul.f32 %v3658, 0.6931472
        %v3660 = vmul.f32 -0.5, %v3556
        %v3661 = vadd.f32 %v3660, 1.0
        %v3662 = vmul.f32 %v3661, %v3556
        %v3663 = vand.u32 2147483647, %v3556
        %vm3664 = vcmp.lt.f32.partialorder %v3663, 0.0004427343
        %v3665 = vsel %vm3664, %v3662, %v3659
        %v3666 = vadd.f32 %v3558, 1.0
        %v3667 = vlog2.pop %v3666
        %v3668 = vmul.f32 %v3667, 0.6931472
        %v3669 = vmul.f32 -0.5, %v3558
        %v3670 = vadd.f32 %v3669, 1.0
        %v3671 = vmul.f32 %v3670, %v3558
        %v3672 = vand.u32 2147483647, %v3558
        %vm3673 = vcmp.lt.f32.partialorder %v3672, 0.0004427343
        %v3674 = vsel %vm3673, %v3671, %v3668
        %v3675 = vadd.f32 %v3560, 1.0
        %v3676 = vlog2.pop %v3675
        %v3677 = vmul.f32 %v3676, 0.6931472
        %v3678 = vmul.f32 -0.5, %v3560
        %v3679 = vadd.f32 %v3678, 1.0
        %v3680 = vmul.f32 %v3679, %v3560
        %v3681 = vand.u32 2147483647, %v3560
        %vm3682 = vcmp.lt.f32.partialorder %v3681, 0.0004427343
        %v3683 = vsel %vm3682, %v3680, %v3677
        %v3684 = vadd.f32 %v3562, 1.0
        %v3685 = vlog2.pop %v3684
        %v3686 = vmul.f32 %v3685, 0.6931472
        %v3687 = vmul.f32 -0.5, %v3562
        %v3688 = vadd.f32 %v3687, 1.0
        %v3689 = vmul.f32 %v3688, %v3562
        %v3690 = vand.u32 2147483647, %v3562
        %vm3691 = vcmp.lt.f32.partialorder %v3690, 0.0004427343
        %v3692 = vsel %vm3691, %v3689, %v3686
        %v3693 = vadd.f32 %v3564, 1.0
        %v3694 = vlog2.pop %v3693
        %v3695 = vmul.f32 %v3694, 0.6931472
        %v3696 = vmul.f32 -0.5, %v3564
        %v3697 = vadd.f32 %v3696, 1.0
        %v3698 = vmul.f32 %v3697, %v3564
        %v3699 = vand.u32 2147483647, %v3564
        %vm3700 = vcmp.lt.f32.partialorder %v3699, 0.0004427343
        %v3701 = vsel %vm3700, %v3698, %v3695
        %v3702 = vadd.f32 %v3566, 1.0
        %v3703 = vlog2.pop %v3702
        %v3704 = vmul.f32 %v3703, 0.6931472
        %v3705 = vmul.f32 -0.5, %v3566
        %v3706 = vadd.f32 %v3705, 1.0
        %v3707 = vmul.f32 %v3706, %v3566
        %v3708 = vand.u32 2147483647, %v3566
        %vm3709 = vcmp.lt.f32.partialorder %v3708, 0.0004427343
        %v3710 = vsel %vm3709, %v3707, %v3704
        %v3711 = vsub.f32 %v3487, %v3575
        %v3712 = vsub.f32 %v3488, %v3584
        %v3713 = vsub.f32 %v3489, %v3593
        %v3714 = vsub.f32 %v3490, %v3602
        %v3715 = vsub.f32 %v3491, %v3611
        %v3716 = vsub.f32 %v3492, %v3620
        %v3717 = vsub.f32 %v3493, %v3629
        %v3718 = vsub.f32 %v3494, %v3638
        %v3719 = vsub.f32 %v3495, %v3647
        %v3720 = vsub.f32 %v3496, %v3656
        %v3721 = vsub.f32 %v3497, %v3665
        %v3722 = vsub.f32 %v3498, %v3674
        %v3723 = vsub.f32 %v3499, %v3683
        %v3724 = vsub.f32 %v3500, %v3692
        %v3725 = vsub.f32 %v3501, %v3701
        %v3726 = vsub.f32 %v3502, %v3710
        %v3727 = vsub.f32 %v3295, %v3711
        %v3728 = vsub.f32 %v3296, %v3712
        %v3729 = vsub.f32 %v3297, %v3713
        %v3730 = vsub.f32 %v3298, %v3714
        %v3731 = vsub.f32 %v3299, %v3715
        %v3732 = vsub.f32 %v3300, %v3716
        %v3733 = vsub.f32 %v3301, %v3717
        %v3734 = vsub.f32 %v3302, %v3718
        %v3735 = vsub.f32 %v3303, %v3719
        %v3736 = vsub.f32 %v3304, %v3720
        %v3737 = vsub.f32 %v3305, %v3721
        %v3738 = vsub.f32 %v3306, %v3722
        %v3739 = vsub.f32 %v3307, %v3723
        %v3740 = vsub.f32 %v3308, %v3724
        %v3741 = vsub.f32 %v3309, %v3725
        %v3742 = vsub.f32 %v3310, %v3726
        %3743 = vset.pattern.permute.xlu0 6
        %3744 = vperm.xlu0 %3743, %v1135
        %v3745 = vpop.permute.xlu0 %3744
        %3746 = vset.pattern.permute.xlu0 6
        %3747 = vperm.xlu0 %3746, %v1136
        %v3748 = vpop.permute.xlu0 %3747
        %3749 = vset.pattern.permute.xlu0 6
        %3750 = vperm.xlu0 %3749, %v1137
        %v3751 = vpop.permute.xlu0 %3750
        %3752 = vset.pattern.permute.xlu0 6
        %3753 = vperm.xlu0 %3752, %v1138
        %v3754 = vpop.permute.xlu0 %3753
        %3755 = vset.pattern.permute.xlu0 6
        %3756 = vperm.xlu0 %3755, %v1139
        %v3757 = vpop.permute.xlu0 %3756
        %3758 = vset.pattern.permute.xlu0 6
        %3759 = vperm.xlu0 %3758, %v1140
        %v3760 = vpop.permute.xlu0 %3759
        %3761 = vset.pattern.permute.xlu0 6
        %3762 = vperm.xlu0 %3761, %v1141
        %v3763 = vpop.permute.xlu0 %3762
        %3764 = vset.pattern.permute.xlu0 6
        %3765 = vperm.xlu0 %3764, %v1142
        %v3766 = vpop.permute.xlu0 %3765
        %3767 = vset.pattern.permute.xlu0 6
        %3768 = vperm.xlu0 %3767, %v1143
        %v3769 = vpop.permute.xlu0 %3768
        %3770 = vset.pattern.permute.xlu0 6
        %3771 = vperm.xlu0 %3770, %v1144
        %v3772 = vpop.permute.xlu0 %3771
        %3773 = vset.pattern.permute.xlu0 6
        %3774 = vperm.xlu0 %3773, %v1145
        %v3775 = vpop.permute.xlu0 %3774
        %3776 = vset.pattern.permute.xlu0 6
        %3777 = vperm.xlu0 %3776, %v1146
        %v3778 = vpop.permute.xlu0 %3777
        %3779 = vset.pattern.permute.xlu0 6
        %3780 = vperm.xlu0 %3779, %v1147
        %v3781 = vpop.permute.xlu0 %3780
        %3782 = vset.pattern.permute.xlu0 6
        %3783 = vperm.xlu0 %3782, %v1148
        %v3784 = vpop.permute.xlu0 %3783
        %3785 = vset.pattern.permute.xlu0 6
        %3786 = vperm.xlu0 %3785, %v1149
        %v3787 = vpop.permute.xlu0 %3786
        %3788 = vset.pattern.permute.xlu0 6
        %3789 = vperm.xlu0 %3788, %v1150
        %v3790 = vpop.permute.xlu0 %3789
        %vm3791 = vcmp.eq.s32.totalorder %v3745, %v251
        %vm3792 = vcmp.eq.s32.totalorder %v3748, %v251
        %vm3793 = vcmp.eq.s32.totalorder %v3751, %v251
        %vm3794 = vcmp.eq.s32.totalorder %v3754, %v251
        %vm3795 = vcmp.eq.s32.totalorder %v3757, %v251
        %vm3796 = vcmp.eq.s32.totalorder %v3760, %v251
        %vm3797 = vcmp.eq.s32.totalorder %v3763, %v251
        %vm3798 = vcmp.eq.s32.totalorder %v3766, %v251
        %vm3799 = vcmp.eq.s32.totalorder %v3769, %v251
        %vm3800 = vcmp.eq.s32.totalorder %v3772, %v251
        %vm3801 = vcmp.eq.s32.totalorder %v3775, %v251
        %vm3802 = vcmp.eq.s32.totalorder %v3778, %v251
        %vm3803 = vcmp.eq.s32.totalorder %v3781, %v251
        %vm3804 = vcmp.eq.s32.totalorder %v3784, %v251
        %vm3805 = vcmp.eq.s32.totalorder %v3787, %v251
        %vm3806 = vcmp.eq.s32.totalorder %v3790, %v251
        %v3807 = vsel %vm3791, 1, 0
        %v3808 = vsel %vm3792, 1, 0
        %v3809 = vsel %vm3793, 1, 0
        %v3810 = vsel %vm3794, 1, 0
        %v3811 = vsel %vm3795, 1, 0
        %v3812 = vsel %vm3796, 1, 0
        %v3813 = vsel %vm3797, 1, 0
        %v3814 = vsel %vm3798, 1, 0
        %v3815 = vsel %vm3799, 1, 0
        %v3816 = vsel %vm3800, 1, 0
        %v3817 = vsel %vm3801, 1, 0
        %v3818 = vsel %vm3802, 1, 0
        %v3819 = vsel %vm3803, 1, 0
        %v3820 = vsel %vm3804, 1, 0
        %v3821 = vsel %vm3805, 1, 0
        %v3822 = vsel %vm3806, 1, 0
        %v3823 = vcvt.s32.f32 %v3807
        %v3824 = vcvt.s32.f32 %v3808
        %v3825 = vcvt.s32.f32 %v3809
        %v3826 = vcvt.s32.f32 %v3810
        %v3827 = vcvt.s32.f32 %v3811
        %v3828 = vcvt.s32.f32 %v3812
        %v3829 = vcvt.s32.f32 %v3813
        %v3830 = vcvt.s32.f32 %v3814
        %v3831 = vcvt.s32.f32 %v3815
        %v3832 = vcvt.s32.f32 %v3816
        %v3833 = vcvt.s32.f32 %v3817
        %v3834 = vcvt.s32.f32 %v3818
        %v3835 = vcvt.s32.f32 %v3819
        %v3836 = vcvt.s32.f32 %v3820
        %v3837 = vcvt.s32.f32 %v3821
        %v3838 = vcvt.s32.f32 %v3822
        %v3839 = vmul.f32 %v3823, %v625
        %v3840 = vmul.f32 %v3824, %v630
        %v3841 = vmul.f32 %v3825, %v635
        %v3842 = vmul.f32 %v3826, %v640
        %v3843 = vmul.f32 %v3827, %v645
        %v3844 = vmul.f32 %v3828, %v650
        %v3845 = vmul.f32 %v3829, %v655
        %v3846 = vmul.f32 %v3830, %v660
        %v3847 = vmul.f32 %v3831, %v665
        %v3848 = vmul.f32 %v3832, %v670
        %v3849 = vmul.f32 %v3833, %v675
        %v3850 = vmul.f32 %v3834, %v680
        %v3851 = vmul.f32 %v3835, %v685
        %v3852 = vmul.f32 %v3836, %v690
        %v3853 = vmul.f32 %v3837, %v695
        %v3854 = vmul.f32 %v3838, %v700
        %v3855 = vsel %vm364, %v3839, 0.0
        %3856 = vadd.xlane.f32.xlu0 %v3855
        %v3857 = vpop.xlane.xlu0 %3856
        %v3858 = vsel %vm364, %v3840, 0.0
        %3859 = vadd.xlane.f32.xlu0 %v3858
        %v3860 = vpop.xlane.xlu0 %3859
        %v3861 = vsel %vm364, %v3841, 0.0
        %3862 = vadd.xlane.f32.xlu0 %v3861
        %v3863 = vpop.xlane.xlu0 %3862
        %v3864 = vsel %vm364, %v3842, 0.0
        %3865 = vadd.xlane.f32.xlu0 %v3864
        %v3866 = vpop.xlane.xlu0 %3865
        %v3867 = vsel %vm364, %v3843, 0.0
        %3868 = vadd.xlane.f32.xlu0 %v3867
        %v3869 = vpop.xlane.xlu0 %3868
        %v3870 = vsel %vm364, %v3844, 0.0
        %3871 = vadd.xlane.f32.xlu0 %v3870
        %v3872 = vpop.xlane.xlu0 %3871
        %v3873 = vsel %vm364, %v3845, 0.0
        %3874 = vadd.xlane.f32.xlu0 %v3873
        %v3875 = vpop.xlane.xlu0 %3874
        %v3876 = vsel %vm364, %v3846, 0.0
        %3877 = vadd.xlane.f32.xlu0 %v3876
        %v3878 = vpop.xlane.xlu0 %3877
        %v3879 = vsel %vm364, %v3847, 0.0
        %3880 = vadd.xlane.f32.xlu0 %v3879
        %v3881 = vpop.xlane.xlu0 %3880
        %v3882 = vsel %vm364, %v3848, 0.0
        %3883 = vadd.xlane.f32.xlu0 %v3882
        %v3884 = vpop.xlane.xlu0 %3883
        %v3885 = vsel %vm364, %v3849, 0.0
        %3886 = vadd.xlane.f32.xlu0 %v3885
        %v3887 = vpop.xlane.xlu0 %3886
        %v3888 = vsel %vm364, %v3850, 0.0
        %3889 = vadd.xlane.f32.xlu0 %v3888
        %v3890 = vpop.xlane.xlu0 %3889
        %v3891 = vsel %vm364, %v3851, 0.0
        %3892 = vadd.xlane.f32.xlu0 %v3891
        %v3893 = vpop.xlane.xlu0 %3892
        %v3894 = vsel %vm364, %v3852, 0.0
        %3895 = vadd.xlane.f32.xlu0 %v3894
        %v3896 = vpop.xlane.xlu0 %3895
        %v3897 = vsel %vm364, %v3853, 0.0
        %3898 = vadd.xlane.f32.xlu0 %v3897
        %v3899 = vpop.xlane.xlu0 %3898
        %v3900 = vsel %vm364, %v3854, 0.0
        %3901 = vadd.xlane.f32.xlu0 %v3900
        %v3902 = vpop.xlane.xlu0 %3901
        %v3903 = vsub.f32 0.0, %v3857
        %v3904 = vsub.f32 0.0, %v3860
        %v3905 = vsub.f32 0.0, %v3863
        %v3906 = vsub.f32 0.0, %v3866
        %v3907 = vsub.f32 0.0, %v3869
        %v3908 = vsub.f32 0.0, %v3872
        %v3909 = vsub.f32 0.0, %v3875
        %v3910 = vsub.f32 0.0, %v3878
        %v3911 = vsub.f32 0.0, %v3881
        %v3912 = vsub.f32 0.0, %v3884
        %v3913 = vsub.f32 0.0, %v3887
        %v3914 = vsub.f32 0.0, %v3890
        %v3915 = vsub.f32 0.0, %v3893
        %v3916 = vsub.f32 0.0, %v3896
        %v3917 = vsub.f32 0.0, %v3899
        %v3918 = vsub.f32 0.0, %v3902
        %v3919 = vmin.f32 %v3903, 0.0
        %v3920 = vmin.f32 %v3904, 0.0
        %v3921 = vmin.f32 %v3905, 0.0
        %v3922 = vmin.f32 %v3906, 0.0
        %v3923 = vmin.f32 %v3907, 0.0
        %v3924 = vmin.f32 %v3908, 0.0
        %v3925 = vmin.f32 %v3909, 0.0
        %v3926 = vmin.f32 %v3910, 0.0
        %v3927 = vmin.f32 %v3911, 0.0
        %v3928 = vmin.f32 %v3912, 0.0
        %v3929 = vmin.f32 %v3913, 0.0
        %v3930 = vmin.f32 %v3914, 0.0
        %v3931 = vmin.f32 %v3915, 0.0
        %v3932 = vmin.f32 %v3916, 0.0
        %v3933 = vmin.f32 %v3917, 0.0
        %v3934 = vmin.f32 %v3918, 0.0
        %v3935 = vand.u32 2147483647, %v3903
        %v3936 = vand.u32 2147483647, %v3904
        %v3937 = vand.u32 2147483647, %v3905
        %v3938 = vand.u32 2147483647, %v3906
        %v3939 = vand.u32 2147483647, %v3907
        %v3940 = vand.u32 2147483647, %v3908
        %v3941 = vand.u32 2147483647, %v3909
        %v3942 = vand.u32 2147483647, %v3910
        %v3943 = vand.u32 2147483647, %v3911
        %v3944 = vand.u32 2147483647, %v3912
        %v3945 = vand.u32 2147483647, %v3913
        %v3946 = vand.u32 2147483647, %v3914
        %v3947 = vand.u32 2147483647, %v3915
        %v3948 = vand.u32 2147483647, %v3916
        %v3949 = vand.u32 2147483647, %v3917
        %v3950 = vand.u32 2147483647, %v3918
        %v3951 = vsub.f32 0.0, %v3935
        %v3952 = vsub.f32 0.0, %v3936
        %v3953 = vsub.f32 0.0, %v3937
        %v3954 = vsub.f32 0.0, %v3938
        %v3955 = vsub.f32 0.0, %v3939
        %v3956 = vsub.f32 0.0, %v3940
        %v3957 = vsub.f32 0.0, %v3941
        %v3958 = vsub.f32 0.0, %v3942
        %v3959 = vsub.f32 0.0, %v3943
        %v3960 = vsub.f32 0.0, %v3944
        %v3961 = vsub.f32 0.0, %v3945
        %v3962 = vsub.f32 0.0, %v3946
        %v3963 = vsub.f32 0.0, %v3947
        %v3964 = vsub.f32 0.0, %v3948
        %v3965 = vsub.f32 0.0, %v3949
        %v3966 = vsub.f32 0.0, %v3950
        %v3967 = vmul.f32 %v3951, 1.442695
        %v3968 = vpow.pop %v3967
        %v3969 = vmul.f32 %v3952, 1.442695
        %v3970 = vpow.pop %v3969
        %v3971 = vmul.f32 %v3953, 1.442695
        %v3972 = vpow.pop %v3971
        %v3973 = vmul.f32 %v3954, 1.442695
        %v3974 = vpow.pop %v3973
        %v3975 = vmul.f32 %v3955, 1.442695
        %v3976 = vpow.pop %v3975
        %v3977 = vmul.f32 %v3956, 1.442695
        %v3978 = vpow.pop %v3977
        %v3979 = vmul.f32 %v3957, 1.442695
        %v3980 = vpow.pop %v3979
        %v3981 = vmul.f32 %v3958, 1.442695
        %v3982 = vpow.pop %v3981
        %v3983 = vmul.f32 %v3959, 1.442695
        %v3984 = vpow.pop %v3983
        %v3985 = vmul.f32 %v3960, 1.442695
        %v3986 = vpow.pop %v3985
        %v3987 = vmul.f32 %v3961, 1.442695
        %v3988 = vpow.pop %v3987
        %v3989 = vmul.f32 %v3962, 1.442695
        %v3990 = vpow.pop %v3989
        %v3991 = vmul.f32 %v3963, 1.442695
        %v3992 = vpow.pop %v3991
        %v3993 = vmul.f32 %v3964, 1.442695
        %v3994 = vpow.pop %v3993
        %v3995 = vmul.f32 %v3965, 1.442695
        %v3996 = vpow.pop %v3995
        %v3997 = vmul.f32 %v3966, 1.442695
        %v3998 = vpow.pop %v3997
        %v3999 = vadd.f32 %v3968, 1.0
        %v4000 = vlog2.pop %v3999
        %v4001 = vmul.f32 %v4000, 0.6931472
        %v4002 = vmul.f32 -0.5, %v3968
        %v4003 = vadd.f32 %v4002, 1.0
        %v4004 = vmul.f32 %v4003, %v3968
        %v4005 = vand.u32 2147483647, %v3968
        %vm4006 = vcmp.lt.f32.partialorder %v4005, 0.0004427343
        %v4007 = vsel %vm4006, %v4004, %v4001
        %v4008 = vadd.f32 %v3970, 1.0
        %v4009 = vlog2.pop %v4008
        %v4010 = vmul.f32 %v4009, 0.6931472
        %v4011 = vmul.f32 -0.5, %v3970
        %v4012 = vadd.f32 %v4011, 1.0
        %v4013 = vmul.f32 %v4012, %v3970
        %v4014 = vand.u32 2147483647, %v3970
        %vm4015 = vcmp.lt.f32.partialorder %v4014, 0.0004427343
        %v4016 = vsel %vm4015, %v4013, %v4010
        %v4017 = vadd.f32 %v3972, 1.0
        %v4018 = vlog2.pop %v4017
        %v4019 = vmul.f32 %v4018, 0.6931472
        %v4020 = vmul.f32 -0.5, %v3972
        %v4021 = vadd.f32 %v4020, 1.0
        %v4022 = vmul.f32 %v4021, %v3972
        %v4023 = vand.u32 2147483647, %v3972
        %vm4024 = vcmp.lt.f32.partialorder %v4023, 0.0004427343
        %v4025 = vsel %vm4024, %v4022, %v4019
        %v4026 = vadd.f32 %v3974, 1.0
        %v4027 = vlog2.pop %v4026
        %v4028 = vmul.f32 %v4027, 0.6931472
        %v4029 = vmul.f32 -0.5, %v3974
        %v4030 = vadd.f32 %v4029, 1.0
        %v4031 = vmul.f32 %v4030, %v3974
        %v4032 = vand.u32 2147483647, %v3974
        %vm4033 = vcmp.lt.f32.partialorder %v4032, 0.0004427343
        %v4034 = vsel %vm4033, %v4031, %v4028
        %v4035 = vadd.f32 %v3976, 1.0
        %v4036 = vlog2.pop %v4035
        %v4037 = vmul.f32 %v4036, 0.6931472
        %v4038 = vmul.f32 -0.5, %v3976
        %v4039 = vadd.f32 %v4038, 1.0
        %v4040 = vmul.f32 %v4039, %v3976
        %v4041 = vand.u32 2147483647, %v3976
        %vm4042 = vcmp.lt.f32.partialorder %v4041, 0.0004427343
        %v4043 = vsel %vm4042, %v4040, %v4037
        %v4044 = vadd.f32 %v3978, 1.0
        %v4045 = vlog2.pop %v4044
        %v4046 = vmul.f32 %v4045, 0.6931472
        %v4047 = vmul.f32 -0.5, %v3978
        %v4048 = vadd.f32 %v4047, 1.0
        %v4049 = vmul.f32 %v4048, %v3978
        %v4050 = vand.u32 2147483647, %v3978
        %vm4051 = vcmp.lt.f32.partialorder %v4050, 0.0004427343
        %v4052 = vsel %vm4051, %v4049, %v4046
        %v4053 = vadd.f32 %v3980, 1.0
        %v4054 = vlog2.pop %v4053
        %v4055 = vmul.f32 %v4054, 0.6931472
        %v4056 = vmul.f32 -0.5, %v3980
        %v4057 = vadd.f32 %v4056, 1.0
        %v4058 = vmul.f32 %v4057, %v3980
        %v4059 = vand.u32 2147483647, %v3980
        %vm4060 = vcmp.lt.f32.partialorder %v4059, 0.0004427343
        %v4061 = vsel %vm4060, %v4058, %v4055
        %v4062 = vadd.f32 %v3982, 1.0
        %v4063 = vlog2.pop %v4062
        %v4064 = vmul.f32 %v4063, 0.6931472
        %v4065 = vmul.f32 -0.5, %v3982
        %v4066 = vadd.f32 %v4065, 1.0
        %v4067 = vmul.f32 %v4066, %v3982
        %v4068 = vand.u32 2147483647, %v3982
        %vm4069 = vcmp.lt.f32.partialorder %v4068, 0.0004427343
        %v4070 = vsel %vm4069, %v4067, %v4064
        %v4071 = vadd.f32 %v3984, 1.0
        %v4072 = vlog2.pop %v4071
        %v4073 = vmul.f32 %v4072, 0.6931472
        %v4074 = vmul.f32 -0.5, %v3984
        %v4075 = vadd.f32 %v4074, 1.0
        %v4076 = vmul.f32 %v4075, %v3984
        %v4077 = vand.u32 2147483647, %v3984
        %vm4078 = vcmp.lt.f32.partialorder %v4077, 0.0004427343
        %v4079 = vsel %vm4078, %v4076, %v4073
        %v4080 = vadd.f32 %v3986, 1.0
        %v4081 = vlog2.pop %v4080
        %v4082 = vmul.f32 %v4081, 0.6931472
        %v4083 = vmul.f32 -0.5, %v3986
        %v4084 = vadd.f32 %v4083, 1.0
        %v4085 = vmul.f32 %v4084, %v3986
        %v4086 = vand.u32 2147483647, %v3986
        %vm4087 = vcmp.lt.f32.partialorder %v4086, 0.0004427343
        %v4088 = vsel %vm4087, %v4085, %v4082
        %v4089 = vadd.f32 %v3988, 1.0
        %v4090 = vlog2.pop %v4089
        %v4091 = vmul.f32 %v4090, 0.6931472
        %v4092 = vmul.f32 -0.5, %v3988
        %v4093 = vadd.f32 %v4092, 1.0
        %v4094 = vmul.f32 %v4093, %v3988
        %v4095 = vand.u32 2147483647, %v3988
        %vm4096 = vcmp.lt.f32.partialorder %v4095, 0.0004427343
        %v4097 = vsel %vm4096, %v4094, %v4091
        %v4098 = vadd.f32 %v3990, 1.0
        %v4099 = vlog2.pop %v4098
        %v4100 = vmul.f32 %v4099, 0.6931472
        %v4101 = vmul.f32 -0.5, %v3990
        %v4102 = vadd.f32 %v4101, 1.0
        %v4103 = vmul.f32 %v4102, %v3990
        %v4104 = vand.u32 2147483647, %v3990
        %vm4105 = vcmp.lt.f32.partialorder %v4104, 0.0004427343
        %v4106 = vsel %vm4105, %v4103, %v4100
        %v4107 = vadd.f32 %v3992, 1.0
        %v4108 = vlog2.pop %v4107
        %v4109 = vmul.f32 %v4108, 0.6931472
        %v4110 = vmul.f32 -0.5, %v3992
        %v4111 = vadd.f32 %v4110, 1.0
        %v4112 = vmul.f32 %v4111, %v3992
        %v4113 = vand.u32 2147483647, %v3992
        %vm4114 = vcmp.lt.f32.partialorder %v4113, 0.0004427343
        %v4115 = vsel %vm4114, %v4112, %v4109
        %v4116 = vadd.f32 %v3994, 1.0
        %v4117 = vlog2.pop %v4116
        %v4118 = vmul.f32 %v4117, 0.6931472
        %v4119 = vmul.f32 -0.5, %v3994
        %v4120 = vadd.f32 %v4119, 1.0
        %v4121 = vmul.f32 %v4120, %v3994
        %v4122 = vand.u32 2147483647, %v3994
        %vm4123 = vcmp.lt.f32.partialorder %v4122, 0.0004427343
        %v4124 = vsel %vm4123, %v4121, %v4118
        %v4125 = vadd.f32 %v3996, 1.0
        %v4126 = vlog2.pop %v4125
        %v4127 = vmul.f32 %v4126, 0.6931472
        %v4128 = vmul.f32 -0.5, %v3996
        %v4129 = vadd.f32 %v4128, 1.0
        %v4130 = vmul.f32 %v4129, %v3996
        %v4131 = vand.u32 2147483647, %v3996
        %vm4132 = vcmp.lt.f32.partialorder %v4131, 0.0004427343
        %v4133 = vsel %vm4132, %v4130, %v4127
        %v4134 = vadd.f32 %v3998, 1.0
        %v4135 = vlog2.pop %v4134
        %v4136 = vmul.f32 %v4135, 0.6931472
        %v4137 = vmul.f32 -0.5, %v3998
        %v4138 = vadd.f32 %v4137, 1.0
        %v4139 = vmul.f32 %v4138, %v3998
        %v4140 = vand.u32 2147483647, %v3998
        %vm4141 = vcmp.lt.f32.partialorder %v4140, 0.0004427343
        %v4142 = vsel %vm4141, %v4139, %v4136
        %v4143 = vsub.f32 %v3919, %v4007
        %v4144 = vsub.f32 %v3920, %v4016
        %v4145 = vsub.f32 %v3921, %v4025
        %v4146 = vsub.f32 %v3922, %v4034
        %v4147 = vsub.f32 %v3923, %v4043
        %v4148 = vsub.f32 %v3924, %v4052
        %v4149 = vsub.f32 %v3925, %v4061
        %v4150 = vsub.f32 %v3926, %v4070
        %v4151 = vsub.f32 %v3927, %v4079
        %v4152 = vsub.f32 %v3928, %v4088
        %v4153 = vsub.f32 %v3929, %v4097
        %v4154 = vsub.f32 %v3930, %v4106
        %v4155 = vsub.f32 %v3931, %v4115
        %v4156 = vsub.f32 %v3932, %v4124
        %v4157 = vsub.f32 %v3933, %v4133
        %v4158 = vsub.f32 %v3934, %v4142
        %v4159 = vsub.f32 %v3727, %v4143
        %v4160 = vsub.f32 %v3728, %v4144
        %v4161 = vsub.f32 %v3729, %v4145
        %v4162 = vsub.f32 %v3730, %v4146
        %v4163 = vsub.f32 %v3731, %v4147
        %v4164 = vsub.f32 %v3732, %v4148
        %v4165 = vsub.f32 %v3733, %v4149
        %v4166 = vsub.f32 %v3734, %v4150
        %v4167 = vsub.f32 %v3735, %v4151
        %v4168 = vsub.f32 %v3736, %v4152
        %v4169 = vsub.f32 %v3737, %v4153
        %v4170 = vsub.f32 %v3738, %v4154
        %v4171 = vsub.f32 %v3739, %v4155
        %v4172 = vsub.f32 %v3740, %v4156
        %v4173 = vsub.f32 %v3741, %v4157
        %v4174 = vsub.f32 %v3742, %v4158
        %4175 = vset.pattern.permute.xlu0 7
        %4176 = vperm.xlu0 %4175, %v1135
        %v4177 = vpop.permute.xlu0 %4176
        %4178 = vset.pattern.permute.xlu0 7
        %4179 = vperm.xlu0 %4178, %v1136
        %v4180 = vpop.permute.xlu0 %4179
        %4181 = vset.pattern.permute.xlu0 7
        %4182 = vperm.xlu0 %4181, %v1137
        %v4183 = vpop.permute.xlu0 %4182
        %4184 = vset.pattern.permute.xlu0 7
        %4185 = vperm.xlu0 %4184, %v1138
        %v4186 = vpop.permute.xlu0 %4185
        %4187 = vset.pattern.permute.xlu0 7
        %4188 = vperm.xlu0 %4187, %v1139
        %v4189 = vpop.permute.xlu0 %4188
        %4190 = vset.pattern.permute.xlu0 7
        %4191 = vperm.xlu0 %4190, %v1140
        %v4192 = vpop.permute.xlu0 %4191
        %4193 = vset.pattern.permute.xlu0 7
        %4194 = vperm.xlu0 %4193, %v1141
        %v4195 = vpop.permute.xlu0 %4194
        %4196 = vset.pattern.permute.xlu0 7
        %4197 = vperm.xlu0 %4196, %v1142
        %v4198 = vpop.permute.xlu0 %4197
        %4199 = vset.pattern.permute.xlu0 7
        %4200 = vperm.xlu0 %4199, %v1143
        %v4201 = vpop.permute.xlu0 %4200
        %4202 = vset.pattern.permute.xlu0 7
        %4203 = vperm.xlu0 %4202, %v1144
        %v4204 = vpop.permute.xlu0 %4203
        %4205 = vset.pattern.permute.xlu0 7
        %4206 = vperm.xlu0 %4205, %v1145
        %v4207 = vpop.permute.xlu0 %4206
        %4208 = vset.pattern.permute.xlu0 7
        %4209 = vperm.xlu0 %4208, %v1146
        %v4210 = vpop.permute.xlu0 %4209
        %4211 = vset.pattern.permute.xlu0 7
        %4212 = vperm.xlu0 %4211, %v1147
        %v4213 = vpop.permute.xlu0 %4212
        %4214 = vset.pattern.permute.xlu0 7
        %4215 = vperm.xlu0 %4214, %v1148
        %v4216 = vpop.permute.xlu0 %4215
        %4217 = vset.pattern.permute.xlu0 7
        %4218 = vperm.xlu0 %4217, %v1149
        %v4219 = vpop.permute.xlu0 %4218
        %4220 = vset.pattern.permute.xlu0 7
        %4221 = vperm.xlu0 %4220, %v1150
        %v4222 = vpop.permute.xlu0 %4221
        %vm4223 = vcmp.eq.s32.totalorder %v4177, %v251
        %vm4224 = vcmp.eq.s32.totalorder %v4180, %v251
        %vm4225 = vcmp.eq.s32.totalorder %v4183, %v251
        %vm4226 = vcmp.eq.s32.totalorder %v4186, %v251
        %vm4227 = vcmp.eq.s32.totalorder %v4189, %v251
        %vm4228 = vcmp.eq.s32.totalorder %v4192, %v251
        %vm4229 = vcmp.eq.s32.totalorder %v4195, %v251
        %vm4230 = vcmp.eq.s32.totalorder %v4198, %v251
        %vm4231 = vcmp.eq.s32.totalorder %v4201, %v251
        %vm4232 = vcmp.eq.s32.totalorder %v4204, %v251
        %vm4233 = vcmp.eq.s32.totalorder %v4207, %v251
        %vm4234 = vcmp.eq.s32.totalorder %v4210, %v251
        %vm4235 = vcmp.eq.s32.totalorder %v4213, %v251
        %vm4236 = vcmp.eq.s32.totalorder %v4216, %v251
        %vm4237 = vcmp.eq.s32.totalorder %v4219, %v251
        %vm4238 = vcmp.eq.s32.totalorder %v4222, %v251
        %v4239 = vsel %vm4223, 1, 0
        %v4240 = vsel %vm4224, 1, 0
        %v4241 = vsel %vm4225, 1, 0
        %v4242 = vsel %vm4226, 1, 0
        %v4243 = vsel %vm4227, 1, 0
        %v4244 = vsel %vm4228, 1, 0
        %v4245 = vsel %vm4229, 1, 0
        %v4246 = vsel %vm4230, 1, 0
        %v4247 = vsel %vm4231, 1, 0
        %v4248 = vsel %vm4232, 1, 0
        %v4249 = vsel %vm4233, 1, 0
        %v4250 = vsel %vm4234, 1, 0
        %v4251 = vsel %vm4235, 1, 0
        %v4252 = vsel %vm4236, 1, 0
        %v4253 = vsel %vm4237, 1, 0
        %v4254 = vsel %vm4238, 1, 0
        %v4255 = vcvt.s32.f32 %v4239
        %v4256 = vcvt.s32.f32 %v4240
        %v4257 = vcvt.s32.f32 %v4241
        %v4258 = vcvt.s32.f32 %v4242
        %v4259 = vcvt.s32.f32 %v4243
        %v4260 = vcvt.s32.f32 %v4244
        %v4261 = vcvt.s32.f32 %v4245
        %v4262 = vcvt.s32.f32 %v4246
        %v4263 = vcvt.s32.f32 %v4247
        %v4264 = vcvt.s32.f32 %v4248
        %v4265 = vcvt.s32.f32 %v4249
        %v4266 = vcvt.s32.f32 %v4250
        %v4267 = vcvt.s32.f32 %v4251
        %v4268 = vcvt.s32.f32 %v4252
        %v4269 = vcvt.s32.f32 %v4253
        %v4270 = vcvt.s32.f32 %v4254
        %v4271 = vmul.f32 %v4255, %v625
        %v4272 = vmul.f32 %v4256, %v630
        %v4273 = vmul.f32 %v4257, %v635
        %v4274 = vmul.f32 %v4258, %v640
        %v4275 = vmul.f32 %v4259, %v645
        %v4276 = vmul.f32 %v4260, %v650
        %v4277 = vmul.f32 %v4261, %v655
        %v4278 = vmul.f32 %v4262, %v660
        %v4279 = vmul.f32 %v4263, %v665
        %v4280 = vmul.f32 %v4264, %v670
        %v4281 = vmul.f32 %v4265, %v675
        %v4282 = vmul.f32 %v4266, %v680
        %v4283 = vmul.f32 %v4267, %v685
        %v4284 = vmul.f32 %v4268, %v690
        %v4285 = vmul.f32 %v4269, %v695
        %v4286 = vmul.f32 %v4270, %v700
        %v4287 = vsel %vm364, %v4271, 0.0
        %4288 = vadd.xlane.f32.xlu0 %v4287
        %v4289 = vpop.xlane.xlu0 %4288
        %v4290 = vsel %vm364, %v4272, 0.0
        %4291 = vadd.xlane.f32.xlu0 %v4290
        %v4292 = vpop.xlane.xlu0 %4291
        %v4293 = vsel %vm364, %v4273, 0.0
        %4294 = vadd.xlane.f32.xlu0 %v4293
        %v4295 = vpop.xlane.xlu0 %4294
        %v4296 = vsel %vm364, %v4274, 0.0
        %4297 = vadd.xlane.f32.xlu0 %v4296
        %v4298 = vpop.xlane.xlu0 %4297
        %v4299 = vsel %vm364, %v4275, 0.0
        %4300 = vadd.xlane.f32.xlu0 %v4299
        %v4301 = vpop.xlane.xlu0 %4300
        %v4302 = vsel %vm364, %v4276, 0.0
        %4303 = vadd.xlane.f32.xlu0 %v4302
        %v4304 = vpop.xlane.xlu0 %4303
        %v4305 = vsel %vm364, %v4277, 0.0
        %4306 = vadd.xlane.f32.xlu0 %v4305
        %v4307 = vpop.xlane.xlu0 %4306
        %v4308 = vsel %vm364, %v4278, 0.0
        %4309 = vadd.xlane.f32.xlu0 %v4308
        %v4310 = vpop.xlane.xlu0 %4309
        %v4311 = vsel %vm364, %v4279, 0.0
        %4312 = vadd.xlane.f32.xlu0 %v4311
        %v4313 = vpop.xlane.xlu0 %4312
        %v4314 = vsel %vm364, %v4280, 0.0
        %4315 = vadd.xlane.f32.xlu0 %v4314
        %v4316 = vpop.xlane.xlu0 %4315
        %v4317 = vsel %vm364, %v4281, 0.0
        %4318 = vadd.xlane.f32.xlu0 %v4317
        %v4319 = vpop.xlane.xlu0 %4318
        %v4320 = vsel %vm364, %v4282, 0.0
        %4321 = vadd.xlane.f32.xlu0 %v4320
        %v4322 = vpop.xlane.xlu0 %4321
        %v4323 = vsel %vm364, %v4283, 0.0
        %4324 = vadd.xlane.f32.xlu0 %v4323
        %v4325 = vpop.xlane.xlu0 %4324
        %v4326 = vsel %vm364, %v4284, 0.0
        %4327 = vadd.xlane.f32.xlu0 %v4326
        %v4328 = vpop.xlane.xlu0 %4327
        %v4329 = vsel %vm364, %v4285, 0.0
        %4330 = vadd.xlane.f32.xlu0 %v4329
        %v4331 = vpop.xlane.xlu0 %4330
        %v4332 = vsel %vm364, %v4286, 0.0
        %4333 = vadd.xlane.f32.xlu0 %v4332
        %v4334 = vpop.xlane.xlu0 %4333
        %v4335 = vsub.f32 0.0, %v4289
        %v4336 = vsub.f32 0.0, %v4292
        %v4337 = vsub.f32 0.0, %v4295
        %v4338 = vsub.f32 0.0, %v4298
        %v4339 = vsub.f32 0.0, %v4301
        %v4340 = vsub.f32 0.0, %v4304
        %v4341 = vsub.f32 0.0, %v4307
        %v4342 = vsub.f32 0.0, %v4310
        %v4343 = vsub.f32 0.0, %v4313
        %v4344 = vsub.f32 0.0, %v4316
        %v4345 = vsub.f32 0.0, %v4319
        %v4346 = vsub.f32 0.0, %v4322
        %v4347 = vsub.f32 0.0, %v4325
        %v4348 = vsub.f32 0.0, %v4328
        %v4349 = vsub.f32 0.0, %v4331
        %v4350 = vsub.f32 0.0, %v4334
        %v4351 = vmin.f32 %v4335, 0.0
        %v4352 = vmin.f32 %v4336, 0.0
        %v4353 = vmin.f32 %v4337, 0.0
        %v4354 = vmin.f32 %v4338, 0.0
        %v4355 = vmin.f32 %v4339, 0.0
        %v4356 = vmin.f32 %v4340, 0.0
        %v4357 = vmin.f32 %v4341, 0.0
        %v4358 = vmin.f32 %v4342, 0.0
        %v4359 = vmin.f32 %v4343, 0.0
        %v4360 = vmin.f32 %v4344, 0.0
        %v4361 = vmin.f32 %v4345, 0.0
        %v4362 = vmin.f32 %v4346, 0.0
        %v4363 = vmin.f32 %v4347, 0.0
        %v4364 = vmin.f32 %v4348, 0.0
        %v4365 = vmin.f32 %v4349, 0.0
        %v4366 = vmin.f32 %v4350, 0.0
        %v4367 = vand.u32 2147483647, %v4335
        %v4368 = vand.u32 2147483647, %v4336
        %v4369 = vand.u32 2147483647, %v4337
        %v4370 = vand.u32 2147483647, %v4338
        %v4371 = vand.u32 2147483647, %v4339
        %v4372 = vand.u32 2147483647, %v4340
        %v4373 = vand.u32 2147483647, %v4341
        %v4374 = vand.u32 2147483647, %v4342
        %v4375 = vand.u32 2147483647, %v4343
        %v4376 = vand.u32 2147483647, %v4344
        %v4377 = vand.u32 2147483647, %v4345
        %v4378 = vand.u32 2147483647, %v4346
        %v4379 = vand.u32 2147483647, %v4347
        %v4380 = vand.u32 2147483647, %v4348
        %v4381 = vand.u32 2147483647, %v4349
        %v4382 = vand.u32 2147483647, %v4350
        %v4383 = vsub.f32 0.0, %v4367
        %v4384 = vsub.f32 0.0, %v4368
        %v4385 = vsub.f32 0.0, %v4369
        %v4386 = vsub.f32 0.0, %v4370
        %v4387 = vsub.f32 0.0, %v4371
        %v4388 = vsub.f32 0.0, %v4372
        %v4389 = vsub.f32 0.0, %v4373
        %v4390 = vsub.f32 0.0, %v4374
        %v4391 = vsub.f32 0.0, %v4375
        %v4392 = vsub.f32 0.0, %v4376
        %v4393 = vsub.f32 0.0, %v4377
        %v4394 = vsub.f32 0.0, %v4378
        %v4395 = vsub.f32 0.0, %v4379
        %v4396 = vsub.f32 0.0, %v4380
        %v4397 = vsub.f32 0.0, %v4381
        %v4398 = vsub.f32 0.0, %v4382
        %v4399 = vmul.f32 %v4383, 1.442695
        %v4400 = vpow.pop %v4399
        %v4401 = vmul.f32 %v4384, 1.442695
        %v4402 = vpow.pop %v4401
        %v4403 = vmul.f32 %v4385, 1.442695
        %v4404 = vpow.pop %v4403
        %v4405 = vmul.f32 %v4386, 1.442695
        %v4406 = vpow.pop %v4405
        %v4407 = vmul.f32 %v4387, 1.442695
        %v4408 = vpow.pop %v4407
        %v4409 = vmul.f32 %v4388, 1.442695
        %v4410 = vpow.pop %v4409
        %v4411 = vmul.f32 %v4389, 1.442695
        %v4412 = vpow.pop %v4411
        %v4413 = vmul.f32 %v4390, 1.442695
        %v4414 = vpow.pop %v4413
        %v4415 = vmul.f32 %v4391, 1.442695
        %v4416 = vpow.pop %v4415
        %v4417 = vmul.f32 %v4392, 1.442695
        %v4418 = vpow.pop %v4417
        %v4419 = vmul.f32 %v4393, 1.442695
        %v4420 = vpow.pop %v4419
        %v4421 = vmul.f32 %v4394, 1.442695
        %v4422 = vpow.pop %v4421
        %v4423 = vmul.f32 %v4395, 1.442695
        %v4424 = vpow.pop %v4423
        %v4425 = vmul.f32 %v4396, 1.442695
        %v4426 = vpow.pop %v4425
        %v4427 = vmul.f32 %v4397, 1.442695
        %v4428 = vpow.pop %v4427
        %v4429 = vmul.f32 %v4398, 1.442695
        %v4430 = vpow.pop %v4429
        %v4431 = vadd.f32 %v4400, 1.0
        %v4432 = vlog2.pop %v4431
        %v4433 = vmul.f32 %v4432, 0.6931472
        %v4434 = vmul.f32 -0.5, %v4400
        %v4435 = vadd.f32 %v4434, 1.0
        %v4436 = vmul.f32 %v4435, %v4400
        %v4437 = vand.u32 2147483647, %v4400
        %vm4438 = vcmp.lt.f32.partialorder %v4437, 0.0004427343
        %v4439 = vsel %vm4438, %v4436, %v4433
        %v4440 = vadd.f32 %v4402, 1.0
        %v4441 = vlog2.pop %v4440
        %v4442 = vmul.f32 %v4441, 0.6931472
        %v4443 = vmul.f32 -0.5, %v4402
        %v4444 = vadd.f32 %v4443, 1.0
        %v4445 = vmul.f32 %v4444, %v4402
        %v4446 = vand.u32 2147483647, %v4402
        %vm4447 = vcmp.lt.f32.partialorder %v4446, 0.0004427343
        %v4448 = vsel %vm4447, %v4445, %v4442
        %v4449 = vadd.f32 %v4404, 1.0
        %v4450 = vlog2.pop %v4449
        %v4451 = vmul.f32 %v4450, 0.6931472
        %v4452 = vmul.f32 -0.5, %v4404
        %v4453 = vadd.f32 %v4452, 1.0
        %v4454 = vmul.f32 %v4453, %v4404
        %v4455 = vand.u32 2147483647, %v4404
        %vm4456 = vcmp.lt.f32.partialorder %v4455, 0.0004427343
        %v4457 = vsel %vm4456, %v4454, %v4451
        %v4458 = vadd.f32 %v4406, 1.0
        %v4459 = vlog2.pop %v4458
        %v4460 = vmul.f32 %v4459, 0.6931472
        %v4461 = vmul.f32 -0.5, %v4406
        %v4462 = vadd.f32 %v4461, 1.0
        %v4463 = vmul.f32 %v4462, %v4406
        %v4464 = vand.u32 2147483647, %v4406
        %vm4465 = vcmp.lt.f32.partialorder %v4464, 0.0004427343
        %v4466 = vsel %vm4465, %v4463, %v4460
        %v4467 = vadd.f32 %v4408, 1.0
        %v4468 = vlog2.pop %v4467
        %v4469 = vmul.f32 %v4468, 0.6931472
        %v4470 = vmul.f32 -0.5, %v4408
        %v4471 = vadd.f32 %v4470, 1.0
        %v4472 = vmul.f32 %v4471, %v4408
        %v4473 = vand.u32 2147483647, %v4408
        %vm4474 = vcmp.lt.f32.partialorder %v4473, 0.0004427343
        %v4475 = vsel %vm4474, %v4472, %v4469
        %v4476 = vadd.f32 %v4410, 1.0
        %v4477 = vlog2.pop %v4476
        %v4478 = vmul.f32 %v4477, 0.6931472
        %v4479 = vmul.f32 -0.5, %v4410
        %v4480 = vadd.f32 %v4479, 1.0
        %v4481 = vmul.f32 %v4480, %v4410
        %v4482 = vand.u32 2147483647, %v4410
        %vm4483 = vcmp.lt.f32.partialorder %v4482, 0.0004427343
        %v4484 = vsel %vm4483, %v4481, %v4478
        %v4485 = vadd.f32 %v4412, 1.0
        %v4486 = vlog2.pop %v4485
        %v4487 = vmul.f32 %v4486, 0.6931472
        %v4488 = vmul.f32 -0.5, %v4412
        %v4489 = vadd.f32 %v4488, 1.0
        %v4490 = vmul.f32 %v4489, %v4412
        %v4491 = vand.u32 2147483647, %v4412
        %vm4492 = vcmp.lt.f32.partialorder %v4491, 0.0004427343
        %v4493 = vsel %vm4492, %v4490, %v4487
        %v4494 = vadd.f32 %v4414, 1.0
        %v4495 = vlog2.pop %v4494
        %v4496 = vmul.f32 %v4495, 0.6931472
        %v4497 = vmul.f32 -0.5, %v4414
        %v4498 = vadd.f32 %v4497, 1.0
        %v4499 = vmul.f32 %v4498, %v4414
        %v4500 = vand.u32 2147483647, %v4414
        %vm4501 = vcmp.lt.f32.partialorder %v4500, 0.0004427343
        %v4502 = vsel %vm4501, %v4499, %v4496
        %v4503 = vadd.f32 %v4416, 1.0
        %v4504 = vlog2.pop %v4503
        %v4505 = vmul.f32 %v4504, 0.6931472
        %v4506 = vmul.f32 -0.5, %v4416
        %v4507 = vadd.f32 %v4506, 1.0
        %v4508 = vmul.f32 %v4507, %v4416
        %v4509 = vand.u32 2147483647, %v4416
        %vm4510 = vcmp.lt.f32.partialorder %v4509, 0.0004427343
        %v4511 = vsel %vm4510, %v4508, %v4505
        %v4512 = vadd.f32 %v4418, 1.0
        %v4513 = vlog2.pop %v4512
        %v4514 = vmul.f32 %v4513, 0.6931472
        %v4515 = vmul.f32 -0.5, %v4418
        %v4516 = vadd.f32 %v4515, 1.0
        %v4517 = vmul.f32 %v4516, %v4418
        %v4518 = vand.u32 2147483647, %v4418
        %vm4519 = vcmp.lt.f32.partialorder %v4518, 0.0004427343
        %v4520 = vsel %vm4519, %v4517, %v4514
        %v4521 = vadd.f32 %v4420, 1.0
        %v4522 = vlog2.pop %v4521
        %v4523 = vmul.f32 %v4522, 0.6931472
        %v4524 = vmul.f32 -0.5, %v4420
        %v4525 = vadd.f32 %v4524, 1.0
        %v4526 = vmul.f32 %v4525, %v4420
        %v4527 = vand.u32 2147483647, %v4420
        %vm4528 = vcmp.lt.f32.partialorder %v4527, 0.0004427343
        %v4529 = vsel %vm4528, %v4526, %v4523
        %v4530 = vadd.f32 %v4422, 1.0
        %v4531 = vlog2.pop %v4530
        %v4532 = vmul.f32 %v4531, 0.6931472
        %v4533 = vmul.f32 -0.5, %v4422
        %v4534 = vadd.f32 %v4533, 1.0
        %v4535 = vmul.f32 %v4534, %v4422
        %v4536 = vand.u32 2147483647, %v4422
        %vm4537 = vcmp.lt.f32.partialorder %v4536, 0.0004427343
        %v4538 = vsel %vm4537, %v4535, %v4532
        %v4539 = vadd.f32 %v4424, 1.0
        %v4540 = vlog2.pop %v4539
        %v4541 = vmul.f32 %v4540, 0.6931472
        %v4542 = vmul.f32 -0.5, %v4424
        %v4543 = vadd.f32 %v4542, 1.0
        %v4544 = vmul.f32 %v4543, %v4424
        %v4545 = vand.u32 2147483647, %v4424
        %vm4546 = vcmp.lt.f32.partialorder %v4545, 0.0004427343
        %v4547 = vsel %vm4546, %v4544, %v4541
        %v4548 = vadd.f32 %v4426, 1.0
        %v4549 = vlog2.pop %v4548
        %v4550 = vmul.f32 %v4549, 0.6931472
        %v4551 = vmul.f32 -0.5, %v4426
        %v4552 = vadd.f32 %v4551, 1.0
        %v4553 = vmul.f32 %v4552, %v4426
        %v4554 = vand.u32 2147483647, %v4426
        %vm4555 = vcmp.lt.f32.partialorder %v4554, 0.0004427343
        %v4556 = vsel %vm4555, %v4553, %v4550
        %v4557 = vadd.f32 %v4428, 1.0
        %v4558 = vlog2.pop %v4557
        %v4559 = vmul.f32 %v4558, 0.6931472
        %v4560 = vmul.f32 -0.5, %v4428
        %v4561 = vadd.f32 %v4560, 1.0
        %v4562 = vmul.f32 %v4561, %v4428
        %v4563 = vand.u32 2147483647, %v4428
        %vm4564 = vcmp.lt.f32.partialorder %v4563, 0.0004427343
        %v4565 = vsel %vm4564, %v4562, %v4559
        %v4566 = vadd.f32 %v4430, 1.0
        %v4567 = vlog2.pop %v4566
        %v4568 = vmul.f32 %v4567, 0.6931472
        %v4569 = vmul.f32 -0.5, %v4430
        %v4570 = vadd.f32 %v4569, 1.0
        %v4571 = vmul.f32 %v4570, %v4430
        %v4572 = vand.u32 2147483647, %v4430
        %vm4573 = vcmp.lt.f32.partialorder %v4572, 0.0004427343
        %v4574 = vsel %vm4573, %v4571, %v4568
        %v4575 = vsub.f32 %v4351, %v4439
        %v4576 = vsub.f32 %v4352, %v4448
        %v4577 = vsub.f32 %v4353, %v4457
        %v4578 = vsub.f32 %v4354, %v4466
        %v4579 = vsub.f32 %v4355, %v4475
        %v4580 = vsub.f32 %v4356, %v4484
        %v4581 = vsub.f32 %v4357, %v4493
        %v4582 = vsub.f32 %v4358, %v4502
        %v4583 = vsub.f32 %v4359, %v4511
        %v4584 = vsub.f32 %v4360, %v4520
        %v4585 = vsub.f32 %v4361, %v4529
        %v4586 = vsub.f32 %v4362, %v4538
        %v4587 = vsub.f32 %v4363, %v4547
        %v4588 = vsub.f32 %v4364, %v4556
        %v4589 = vsub.f32 %v4365, %v4565
        %v4590 = vsub.f32 %v4366, %v4574
        %v4591 = vsub.f32 %v4159, %v4575
        %v4592 = vsub.f32 %v4160, %v4576
        %v4593 = vsub.f32 %v4161, %v4577
        %v4594 = vsub.f32 %v4162, %v4578
        %v4595 = vsub.f32 %v4163, %v4579
        %v4596 = vsub.f32 %v4164, %v4580
        %v4597 = vsub.f32 %v4165, %v4581
        %v4598 = vsub.f32 %v4166, %v4582
        %v4599 = vsub.f32 %v4167, %v4583
        %v4600 = vsub.f32 %v4168, %v4584
        %v4601 = vsub.f32 %v4169, %v4585
        %v4602 = vsub.f32 %v4170, %v4586
        %v4603 = vsub.f32 %v4171, %v4587
        %v4604 = vsub.f32 %v4172, %v4588
        %v4605 = vsub.f32 %v4173, %v4589
        %v4606 = vsub.f32 %v4174, %v4590
        %4607 = vset.pattern.permute.xlu0 8
        %4608 = vperm.xlu0 %4607, %v1135
        %v4609 = vpop.permute.xlu0 %4608
        %4610 = vset.pattern.permute.xlu0 8
        %4611 = vperm.xlu0 %4610, %v1136
        %v4612 = vpop.permute.xlu0 %4611
        %4613 = vset.pattern.permute.xlu0 8
        %4614 = vperm.xlu0 %4613, %v1137
        %v4615 = vpop.permute.xlu0 %4614
        %4616 = vset.pattern.permute.xlu0 8
        %4617 = vperm.xlu0 %4616, %v1138
        %v4618 = vpop.permute.xlu0 %4617
        %4619 = vset.pattern.permute.xlu0 8
        %4620 = vperm.xlu0 %4619, %v1139
        %v4621 = vpop.permute.xlu0 %4620
        %4622 = vset.pattern.permute.xlu0 8
        %4623 = vperm.xlu0 %4622, %v1140
        %v4624 = vpop.permute.xlu0 %4623
        %4625 = vset.pattern.permute.xlu0 8
        %4626 = vperm.xlu0 %4625, %v1141
        %v4627 = vpop.permute.xlu0 %4626
        %4628 = vset.pattern.permute.xlu0 8
        %4629 = vperm.xlu0 %4628, %v1142
        %v4630 = vpop.permute.xlu0 %4629
        %4631 = vset.pattern.permute.xlu0 8
        %4632 = vperm.xlu0 %4631, %v1143
        %v4633 = vpop.permute.xlu0 %4632
        %4634 = vset.pattern.permute.xlu0 8
        %4635 = vperm.xlu0 %4634, %v1144
        %v4636 = vpop.permute.xlu0 %4635
        %4637 = vset.pattern.permute.xlu0 8
        %4638 = vperm.xlu0 %4637, %v1145
        %v4639 = vpop.permute.xlu0 %4638
        %4640 = vset.pattern.permute.xlu0 8
        %4641 = vperm.xlu0 %4640, %v1146
        %v4642 = vpop.permute.xlu0 %4641
        %4643 = vset.pattern.permute.xlu0 8
        %4644 = vperm.xlu0 %4643, %v1147
        %v4645 = vpop.permute.xlu0 %4644
        %4646 = vset.pattern.permute.xlu0 8
        %4647 = vperm.xlu0 %4646, %v1148
        %v4648 = vpop.permute.xlu0 %4647
        %4649 = vset.pattern.permute.xlu0 8
        %4650 = vperm.xlu0 %4649, %v1149
        %v4651 = vpop.permute.xlu0 %4650
        %4652 = vset.pattern.permute.xlu0 8
        %4653 = vperm.xlu0 %4652, %v1150
        %v4654 = vpop.permute.xlu0 %4653
        %vm4655 = vcmp.eq.s32.totalorder %v4609, %v251
        %vm4656 = vcmp.eq.s32.totalorder %v4612, %v251
        %vm4657 = vcmp.eq.s32.totalorder %v4615, %v251
        %vm4658 = vcmp.eq.s32.totalorder %v4618, %v251
        %vm4659 = vcmp.eq.s32.totalorder %v4621, %v251
        %vm4660 = vcmp.eq.s32.totalorder %v4624, %v251
        %vm4661 = vcmp.eq.s32.totalorder %v4627, %v251
        %vm4662 = vcmp.eq.s32.totalorder %v4630, %v251
        %vm4663 = vcmp.eq.s32.totalorder %v4633, %v251
        %vm4664 = vcmp.eq.s32.totalorder %v4636, %v251
        %vm4665 = vcmp.eq.s32.totalorder %v4639, %v251
        %vm4666 = vcmp.eq.s32.totalorder %v4642, %v251
        %vm4667 = vcmp.eq.s32.totalorder %v4645, %v251
        %vm4668 = vcmp.eq.s32.totalorder %v4648, %v251
        %vm4669 = vcmp.eq.s32.totalorder %v4651, %v251
        %vm4670 = vcmp.eq.s32.totalorder %v4654, %v251
        %v4671 = vsel %vm4655, 1, 0
        %v4672 = vsel %vm4656, 1, 0
        %v4673 = vsel %vm4657, 1, 0
        %v4674 = vsel %vm4658, 1, 0
        %v4675 = vsel %vm4659, 1, 0
        %v4676 = vsel %vm4660, 1, 0
        %v4677 = vsel %vm4661, 1, 0
        %v4678 = vsel %vm4662, 1, 0
        %v4679 = vsel %vm4663, 1, 0
        %v4680 = vsel %vm4664, 1, 0
        %v4681 = vsel %vm4665, 1, 0
        %v4682 = vsel %vm4666, 1, 0
        %v4683 = vsel %vm4667, 1, 0
        %v4684 = vsel %vm4668, 1, 0
        %v4685 = vsel %vm4669, 1, 0
        %v4686 = vsel %vm4670, 1, 0
        %v4687 = vcvt.s32.f32 %v4671
        %v4688 = vcvt.s32.f32 %v4672
        %v4689 = vcvt.s32.f32 %v4673
        %v4690 = vcvt.s32.f32 %v4674
        %v4691 = vcvt.s32.f32 %v4675
        %v4692 = vcvt.s32.f32 %v4676
        %v4693 = vcvt.s32.f32 %v4677
        %v4694 = vcvt.s32.f32 %v4678
        %v4695 = vcvt.s32.f32 %v4679
        %v4696 = vcvt.s32.f32 %v4680
        %v4697 = vcvt.s32.f32 %v4681
        %v4698 = vcvt.s32.f32 %v4682
        %v4699 = vcvt.s32.f32 %v4683
        %v4700 = vcvt.s32.f32 %v4684
        %v4701 = vcvt.s32.f32 %v4685
        %v4702 = vcvt.s32.f32 %v4686
        %v4703 = vmul.f32 %v4687, %v625
        %v4704 = vmul.f32 %v4688, %v630
        %v4705 = vmul.f32 %v4689, %v635
        %v4706 = vmul.f32 %v4690, %v640
        %v4707 = vmul.f32 %v4691, %v645
        %v4708 = vmul.f32 %v4692, %v650
        %v4709 = vmul.f32 %v4693, %v655
        %v4710 = vmul.f32 %v4694, %v660
        %v4711 = vmul.f32 %v4695, %v665
        %v4712 = vmul.f32 %v4696, %v670
        %v4713 = vmul.f32 %v4697, %v675
        %v4714 = vmul.f32 %v4698, %v680
        %v4715 = vmul.f32 %v4699, %v685
        %v4716 = vmul.f32 %v4700, %v690
        %v4717 = vmul.f32 %v4701, %v695
        %v4718 = vmul.f32 %v4702, %v700
        %v4719 = vsel %vm364, %v4703, 0.0
        %4720 = vadd.xlane.f32.xlu0 %v4719
        %v4721 = vpop.xlane.xlu0 %4720
        %v4722 = vsel %vm364, %v4704, 0.0
        %4723 = vadd.xlane.f32.xlu0 %v4722
        %v4724 = vpop.xlane.xlu0 %4723
        %v4725 = vsel %vm364, %v4705, 0.0
        %4726 = vadd.xlane.f32.xlu0 %v4725
        %v4727 = vpop.xlane.xlu0 %4726
        %v4728 = vsel %vm364, %v4706, 0.0
        %4729 = vadd.xlane.f32.xlu0 %v4728
        %v4730 = vpop.xlane.xlu0 %4729
        %v4731 = vsel %vm364, %v4707, 0.0
        %4732 = vadd.xlane.f32.xlu0 %v4731
        %v4733 = vpop.xlane.xlu0 %4732
        %v4734 = vsel %vm364, %v4708, 0.0
        %4735 = vadd.xlane.f32.xlu0 %v4734
        %v4736 = vpop.xlane.xlu0 %4735
        %v4737 = vsel %vm364, %v4709, 0.0
        %4738 = vadd.xlane.f32.xlu0 %v4737
        %v4739 = vpop.xlane.xlu0 %4738
        %v4740 = vsel %vm364, %v4710, 0.0
        %4741 = vadd.xlane.f32.xlu0 %v4740
        %v4742 = vpop.xlane.xlu0 %4741
        %v4743 = vsel %vm364, %v4711, 0.0
        %4744 = vadd.xlane.f32.xlu0 %v4743
        %v4745 = vpop.xlane.xlu0 %4744
        %v4746 = vsel %vm364, %v4712, 0.0
        %4747 = vadd.xlane.f32.xlu0 %v4746
        %v4748 = vpop.xlane.xlu0 %4747
        %v4749 = vsel %vm364, %v4713, 0.0
        %4750 = vadd.xlane.f32.xlu0 %v4749
        %v4751 = vpop.xlane.xlu0 %4750
        %v4752 = vsel %vm364, %v4714, 0.0
        %4753 = vadd.xlane.f32.xlu0 %v4752
        %v4754 = vpop.xlane.xlu0 %4753
        %v4755 = vsel %vm364, %v4715, 0.0
        %4756 = vadd.xlane.f32.xlu0 %v4755
        %v4757 = vpop.xlane.xlu0 %4756
        %v4758 = vsel %vm364, %v4716, 0.0
        %4759 = vadd.xlane.f32.xlu0 %v4758
        %v4760 = vpop.xlane.xlu0 %4759
        %v4761 = vsel %vm364, %v4717, 0.0
        %4762 = vadd.xlane.f32.xlu0 %v4761
        %v4763 = vpop.xlane.xlu0 %4762
        %v4764 = vsel %vm364, %v4718, 0.0
        %4765 = vadd.xlane.f32.xlu0 %v4764
        %v4766 = vpop.xlane.xlu0 %4765
        %v4767 = vsub.f32 0.0, %v4721
        %v4768 = vsub.f32 0.0, %v4724
        %v4769 = vsub.f32 0.0, %v4727
        %v4770 = vsub.f32 0.0, %v4730
        %v4771 = vsub.f32 0.0, %v4733
        %v4772 = vsub.f32 0.0, %v4736
        %v4773 = vsub.f32 0.0, %v4739
        %v4774 = vsub.f32 0.0, %v4742
        %v4775 = vsub.f32 0.0, %v4745
        %v4776 = vsub.f32 0.0, %v4748
        %v4777 = vsub.f32 0.0, %v4751
        %v4778 = vsub.f32 0.0, %v4754
        %v4779 = vsub.f32 0.0, %v4757
        %v4780 = vsub.f32 0.0, %v4760
        %v4781 = vsub.f32 0.0, %v4763
        %v4782 = vsub.f32 0.0, %v4766
        %v4783 = vmin.f32 %v4767, 0.0
        %v4784 = vmin.f32 %v4768, 0.0
        %v4785 = vmin.f32 %v4769, 0.0
        %v4786 = vmin.f32 %v4770, 0.0
        %v4787 = vmin.f32 %v4771, 0.0
        %v4788 = vmin.f32 %v4772, 0.0
        %v4789 = vmin.f32 %v4773, 0.0
        %v4790 = vmin.f32 %v4774, 0.0
        %v4791 = vmin.f32 %v4775, 0.0
        %v4792 = vmin.f32 %v4776, 0.0
        %v4793 = vmin.f32 %v4777, 0.0
        %v4794 = vmin.f32 %v4778, 0.0
        %v4795 = vmin.f32 %v4779, 0.0
        %v4796 = vmin.f32 %v4780, 0.0
        %v4797 = vmin.f32 %v4781, 0.0
        %v4798 = vmin.f32 %v4782, 0.0
        %v4799 = vand.u32 2147483647, %v4767
        %v4800 = vand.u32 2147483647, %v4768
        %v4801 = vand.u32 2147483647, %v4769
        %v4802 = vand.u32 2147483647, %v4770
        %v4803 = vand.u32 2147483647, %v4771
        %v4804 = vand.u32 2147483647, %v4772
        %v4805 = vand.u32 2147483647, %v4773
        %v4806 = vand.u32 2147483647, %v4774
        %v4807 = vand.u32 2147483647, %v4775
        %v4808 = vand.u32 2147483647, %v4776
        %v4809 = vand.u32 2147483647, %v4777
        %v4810 = vand.u32 2147483647, %v4778
        %v4811 = vand.u32 2147483647, %v4779
        %v4812 = vand.u32 2147483647, %v4780
        %v4813 = vand.u32 2147483647, %v4781
        %v4814 = vand.u32 2147483647, %v4782
        %v4815 = vsub.f32 0.0, %v4799
        %v4816 = vsub.f32 0.0, %v4800
        %v4817 = vsub.f32 0.0, %v4801
        %v4818 = vsub.f32 0.0, %v4802
        %v4819 = vsub.f32 0.0, %v4803
        %v4820 = vsub.f32 0.0, %v4804
        %v4821 = vsub.f32 0.0, %v4805
        %v4822 = vsub.f32 0.0, %v4806
        %v4823 = vsub.f32 0.0, %v4807
        %v4824 = vsub.f32 0.0, %v4808
        %v4825 = vsub.f32 0.0, %v4809
        %v4826 = vsub.f32 0.0, %v4810
        %v4827 = vsub.f32 0.0, %v4811
        %v4828 = vsub.f32 0.0, %v4812
        %v4829 = vsub.f32 0.0, %v4813
        %v4830 = vsub.f32 0.0, %v4814
        %v4831 = vmul.f32 %v4815, 1.442695
        %v4832 = vpow.pop %v4831
        %v4833 = vmul.f32 %v4816, 1.442695
        %v4834 = vpow.pop %v4833
        %v4835 = vmul.f32 %v4817, 1.442695
        %v4836 = vpow.pop %v4835
        %v4837 = vmul.f32 %v4818, 1.442695
        %v4838 = vpow.pop %v4837
        %v4839 = vmul.f32 %v4819, 1.442695
        %v4840 = vpow.pop %v4839
        %v4841 = vmul.f32 %v4820, 1.442695
        %v4842 = vpow.pop %v4841
        %v4843 = vmul.f32 %v4821, 1.442695
        %v4844 = vpow.pop %v4843
        %v4845 = vmul.f32 %v4822, 1.442695
        %v4846 = vpow.pop %v4845
        %v4847 = vmul.f32 %v4823, 1.442695
        %v4848 = vpow.pop %v4847
        %v4849 = vmul.f32 %v4824, 1.442695
        %v4850 = vpow.pop %v4849
        %v4851 = vmul.f32 %v4825, 1.442695
        %v4852 = vpow.pop %v4851
        %v4853 = vmul.f32 %v4826, 1.442695
        %v4854 = vpow.pop %v4853
        %v4855 = vmul.f32 %v4827, 1.442695
        %v4856 = vpow.pop %v4855
        %v4857 = vmul.f32 %v4828, 1.442695
        %v4858 = vpow.pop %v4857
        %v4859 = vmul.f32 %v4829, 1.442695
        %v4860 = vpow.pop %v4859
        %v4861 = vmul.f32 %v4830, 1.442695
        %v4862 = vpow.pop %v4861
        %v4863 = vadd.f32 %v4832, 1.0
        %v4864 = vlog2.pop %v4863
        %v4865 = vmul.f32 %v4864, 0.6931472
        %v4866 = vmul.f32 -0.5, %v4832
        %v4867 = vadd.f32 %v4866, 1.0
        %v4868 = vmul.f32 %v4867, %v4832
        %v4869 = vand.u32 2147483647, %v4832
        %vm4870 = vcmp.lt.f32.partialorder %v4869, 0.0004427343
        %v4871 = vsel %vm4870, %v4868, %v4865
        %v4872 = vadd.f32 %v4834, 1.0
        %v4873 = vlog2.pop %v4872
        %v4874 = vmul.f32 %v4873, 0.6931472
        %v4875 = vmul.f32 -0.5, %v4834
        %v4876 = vadd.f32 %v4875, 1.0
        %v4877 = vmul.f32 %v4876, %v4834
        %v4878 = vand.u32 2147483647, %v4834
        %vm4879 = vcmp.lt.f32.partialorder %v4878, 0.0004427343
        %v4880 = vsel %vm4879, %v4877, %v4874
        %v4881 = vadd.f32 %v4836, 1.0
        %v4882 = vlog2.pop %v4881
        %v4883 = vmul.f32 %v4882, 0.6931472
        %v4884 = vmul.f32 -0.5, %v4836
        %v4885 = vadd.f32 %v4884, 1.0
        %v4886 = vmul.f32 %v4885, %v4836
        %v4887 = vand.u32 2147483647, %v4836
        %vm4888 = vcmp.lt.f32.partialorder %v4887, 0.0004427343
        %v4889 = vsel %vm4888, %v4886, %v4883
        %v4890 = vadd.f32 %v4838, 1.0
        %v4891 = vlog2.pop %v4890
        %v4892 = vmul.f32 %v4891, 0.6931472
        %v4893 = vmul.f32 -0.5, %v4838
        %v4894 = vadd.f32 %v4893, 1.0
        %v4895 = vmul.f32 %v4894, %v4838
        %v4896 = vand.u32 2147483647, %v4838
        %vm4897 = vcmp.lt.f32.partialorder %v4896, 0.0004427343
        %v4898 = vsel %vm4897, %v4895, %v4892
        %v4899 = vadd.f32 %v4840, 1.0
        %v4900 = vlog2.pop %v4899
        %v4901 = vmul.f32 %v4900, 0.6931472
        %v4902 = vmul.f32 -0.5, %v4840
        %v4903 = vadd.f32 %v4902, 1.0
        %v4904 = vmul.f32 %v4903, %v4840
        %v4905 = vand.u32 2147483647, %v4840
        %vm4906 = vcmp.lt.f32.partialorder %v4905, 0.0004427343
        %v4907 = vsel %vm4906, %v4904, %v4901
        %v4908 = vadd.f32 %v4842, 1.0
        %v4909 = vlog2.pop %v4908
        %v4910 = vmul.f32 %v4909, 0.6931472
        %v4911 = vmul.f32 -0.5, %v4842
        %v4912 = vadd.f32 %v4911, 1.0
        %v4913 = vmul.f32 %v4912, %v4842
        %v4914 = vand.u32 2147483647, %v4842
        %vm4915 = vcmp.lt.f32.partialorder %v4914, 0.0004427343
        %v4916 = vsel %vm4915, %v4913, %v4910
        %v4917 = vadd.f32 %v4844, 1.0
        %v4918 = vlog2.pop %v4917
        %v4919 = vmul.f32 %v4918, 0.6931472
        %v4920 = vmul.f32 -0.5, %v4844
        %v4921 = vadd.f32 %v4920, 1.0
        %v4922 = vmul.f32 %v4921, %v4844
        %v4923 = vand.u32 2147483647, %v4844
        %vm4924 = vcmp.lt.f32.partialorder %v4923, 0.0004427343
        %v4925 = vsel %vm4924, %v4922, %v4919
        %v4926 = vadd.f32 %v4846, 1.0
        %v4927 = vlog2.pop %v4926
        %v4928 = vmul.f32 %v4927, 0.6931472
        %v4929 = vmul.f32 -0.5, %v4846
        %v4930 = vadd.f32 %v4929, 1.0
        %v4931 = vmul.f32 %v4930, %v4846
        %v4932 = vand.u32 2147483647, %v4846
        %vm4933 = vcmp.lt.f32.partialorder %v4932, 0.0004427343
        %v4934 = vsel %vm4933, %v4931, %v4928
        %v4935 = vadd.f32 %v4848, 1.0
        %v4936 = vlog2.pop %v4935
        %v4937 = vmul.f32 %v4936, 0.6931472
        %v4938 = vmul.f32 -0.5, %v4848
        %v4939 = vadd.f32 %v4938, 1.0
        %v4940 = vmul.f32 %v4939, %v4848
        %v4941 = vand.u32 2147483647, %v4848
        %vm4942 = vcmp.lt.f32.partialorder %v4941, 0.0004427343
        %v4943 = vsel %vm4942, %v4940, %v4937
        %v4944 = vadd.f32 %v4850, 1.0
        %v4945 = vlog2.pop %v4944
        %v4946 = vmul.f32 %v4945, 0.6931472
        %v4947 = vmul.f32 -0.5, %v4850
        %v4948 = vadd.f32 %v4947, 1.0
        %v4949 = vmul.f32 %v4948, %v4850
        %v4950 = vand.u32 2147483647, %v4850
        %vm4951 = vcmp.lt.f32.partialorder %v4950, 0.0004427343
        %v4952 = vsel %vm4951, %v4949, %v4946
        %v4953 = vadd.f32 %v4852, 1.0
        %v4954 = vlog2.pop %v4953
        %v4955 = vmul.f32 %v4954, 0.6931472
        %v4956 = vmul.f32 -0.5, %v4852
        %v4957 = vadd.f32 %v4956, 1.0
        %v4958 = vmul.f32 %v4957, %v4852
        %v4959 = vand.u32 2147483647, %v4852
        %vm4960 = vcmp.lt.f32.partialorder %v4959, 0.0004427343
        %v4961 = vsel %vm4960, %v4958, %v4955
        %v4962 = vadd.f32 %v4854, 1.0
        %v4963 = vlog2.pop %v4962
        %v4964 = vmul.f32 %v4963, 0.6931472
        %v4965 = vmul.f32 -0.5, %v4854
        %v4966 = vadd.f32 %v4965, 1.0
        %v4967 = vmul.f32 %v4966, %v4854
        %v4968 = vand.u32 2147483647, %v4854
        %vm4969 = vcmp.lt.f32.partialorder %v4968, 0.0004427343
        %v4970 = vsel %vm4969, %v4967, %v4964
        %v4971 = vadd.f32 %v4856, 1.0
        %v4972 = vlog2.pop %v4971
        %v4973 = vmul.f32 %v4972, 0.6931472
        %v4974 = vmul.f32 -0.5, %v4856
        %v4975 = vadd.f32 %v4974, 1.0
        %v4976 = vmul.f32 %v4975, %v4856
        %v4977 = vand.u32 2147483647, %v4856
        %vm4978 = vcmp.lt.f32.partialorder %v4977, 0.0004427343
        %v4979 = vsel %vm4978, %v4976, %v4973
        %v4980 = vadd.f32 %v4858, 1.0
        %v4981 = vlog2.pop %v4980
        %v4982 = vmul.f32 %v4981, 0.6931472
        %v4983 = vmul.f32 -0.5, %v4858
        %v4984 = vadd.f32 %v4983, 1.0
        %v4985 = vmul.f32 %v4984, %v4858
        %v4986 = vand.u32 2147483647, %v4858
        %vm4987 = vcmp.lt.f32.partialorder %v4986, 0.0004427343
        %v4988 = vsel %vm4987, %v4985, %v4982
        %v4989 = vadd.f32 %v4860, 1.0
        %v4990 = vlog2.pop %v4989
        %v4991 = vmul.f32 %v4990, 0.6931472
        %v4992 = vmul.f32 -0.5, %v4860
        %v4993 = vadd.f32 %v4992, 1.0
        %v4994 = vmul.f32 %v4993, %v4860
        %v4995 = vand.u32 2147483647, %v4860
        %vm4996 = vcmp.lt.f32.partialorder %v4995, 0.0004427343
        %v4997 = vsel %vm4996, %v4994, %v4991
        %v4998 = vadd.f32 %v4862, 1.0
        %v4999 = vlog2.pop %v4998
        %v5000 = vmul.f32 %v4999, 0.6931472
        %v5001 = vmul.f32 -0.5, %v4862
        %v5002 = vadd.f32 %v5001, 1.0
        %v5003 = vmul.f32 %v5002, %v4862
        %v5004 = vand.u32 2147483647, %v4862
        %vm5005 = vcmp.lt.f32.partialorder %v5004, 0.0004427343
        %v5006 = vsel %vm5005, %v5003, %v5000
        %v5007 = vsub.f32 %v4783, %v4871
        %v5008 = vsub.f32 %v4784, %v4880
        %v5009 = vsub.f32 %v4785, %v4889
        %v5010 = vsub.f32 %v4786, %v4898
        %v5011 = vsub.f32 %v4787, %v4907
        %v5012 = vsub.f32 %v4788, %v4916
        %v5013 = vsub.f32 %v4789, %v4925
        %v5014 = vsub.f32 %v4790, %v4934
        %v5015 = vsub.f32 %v4791, %v4943
        %v5016 = vsub.f32 %v4792, %v4952
        %v5017 = vsub.f32 %v4793, %v4961
        %v5018 = vsub.f32 %v4794, %v4970
        %v5019 = vsub.f32 %v4795, %v4979
        %v5020 = vsub.f32 %v4796, %v4988
        %v5021 = vsub.f32 %v4797, %v4997
        %v5022 = vsub.f32 %v4798, %v5006
        %v5023 = vsub.f32 %v4591, %v5007
        %v5024 = vsub.f32 %v4592, %v5008
        %v5025 = vsub.f32 %v4593, %v5009
        %v5026 = vsub.f32 %v4594, %v5010
        %v5027 = vsub.f32 %v4595, %v5011
        %v5028 = vsub.f32 %v4596, %v5012
        %v5029 = vsub.f32 %v4597, %v5013
        %v5030 = vsub.f32 %v4598, %v5014
        %v5031 = vsub.f32 %v4599, %v5015
        %v5032 = vsub.f32 %v4600, %v5016
        %v5033 = vsub.f32 %v4601, %v5017
        %v5034 = vsub.f32 %v4602, %v5018
        %v5035 = vsub.f32 %v4603, %v5019
        %v5036 = vsub.f32 %v4604, %v5020
        %v5037 = vsub.f32 %v4605, %v5021
        %v5038 = vsub.f32 %v4606, %v5022
        %5039 = vset.pattern.permute.xlu0 9
        %5040 = vperm.xlu0 %5039, %v1135
        %v5041 = vpop.permute.xlu0 %5040
        %5042 = vset.pattern.permute.xlu0 9
        %5043 = vperm.xlu0 %5042, %v1136
        %v5044 = vpop.permute.xlu0 %5043
        %5045 = vset.pattern.permute.xlu0 9
        %5046 = vperm.xlu0 %5045, %v1137
        %v5047 = vpop.permute.xlu0 %5046
        %5048 = vset.pattern.permute.xlu0 9
        %5049 = vperm.xlu0 %5048, %v1138
        %v5050 = vpop.permute.xlu0 %5049
        %5051 = vset.pattern.permute.xlu0 9
        %5052 = vperm.xlu0 %5051, %v1139
        %v5053 = vpop.permute.xlu0 %5052
        %5054 = vset.pattern.permute.xlu0 9
        %5055 = vperm.xlu0 %5054, %v1140
        %v5056 = vpop.permute.xlu0 %5055
        %5057 = vset.pattern.permute.xlu0 9
        %5058 = vperm.xlu0 %5057, %v1141
        %v5059 = vpop.permute.xlu0 %5058
        %5060 = vset.pattern.permute.xlu0 9
        %5061 = vperm.xlu0 %5060, %v1142
        %v5062 = vpop.permute.xlu0 %5061
        %5063 = vset.pattern.permute.xlu0 9
        %5064 = vperm.xlu0 %5063, %v1143
        %v5065 = vpop.permute.xlu0 %5064
        %5066 = vset.pattern.permute.xlu0 9
        %5067 = vperm.xlu0 %5066, %v1144
        %v5068 = vpop.permute.xlu0 %5067
        %5069 = vset.pattern.permute.xlu0 9
        %5070 = vperm.xlu0 %5069, %v1145
        %v5071 = vpop.permute.xlu0 %5070
        %5072 = vset.pattern.permute.xlu0 9
        %5073 = vperm.xlu0 %5072, %v1146
        %v5074 = vpop.permute.xlu0 %5073
        %5075 = vset.pattern.permute.xlu0 9
        %5076 = vperm.xlu0 %5075, %v1147
        %v5077 = vpop.permute.xlu0 %5076
        %5078 = vset.pattern.permute.xlu0 9
        %5079 = vperm.xlu0 %5078, %v1148
        %v5080 = vpop.permute.xlu0 %5079
        %5081 = vset.pattern.permute.xlu0 9
        %5082 = vperm.xlu0 %5081, %v1149
        %v5083 = vpop.permute.xlu0 %5082
        %5084 = vset.pattern.permute.xlu0 9
        %5085 = vperm.xlu0 %5084, %v1150
        %v5086 = vpop.permute.xlu0 %5085
        %vm5087 = vcmp.eq.s32.totalorder %v5041, %v251
        %vm5088 = vcmp.eq.s32.totalorder %v5044, %v251
        %vm5089 = vcmp.eq.s32.totalorder %v5047, %v251
        %vm5090 = vcmp.eq.s32.totalorder %v5050, %v251
        %vm5091 = vcmp.eq.s32.totalorder %v5053, %v251
        %vm5092 = vcmp.eq.s32.totalorder %v5056, %v251
        %vm5093 = vcmp.eq.s32.totalorder %v5059, %v251
        %vm5094 = vcmp.eq.s32.totalorder %v5062, %v251
        %vm5095 = vcmp.eq.s32.totalorder %v5065, %v251
        %vm5096 = vcmp.eq.s32.totalorder %v5068, %v251
        %vm5097 = vcmp.eq.s32.totalorder %v5071, %v251
        %vm5098 = vcmp.eq.s32.totalorder %v5074, %v251
        %vm5099 = vcmp.eq.s32.totalorder %v5077, %v251
        %vm5100 = vcmp.eq.s32.totalorder %v5080, %v251
        %vm5101 = vcmp.eq.s32.totalorder %v5083, %v251
        %vm5102 = vcmp.eq.s32.totalorder %v5086, %v251
        %v5103 = vsel %vm5087, 1, 0
        %v5104 = vsel %vm5088, 1, 0
        %v5105 = vsel %vm5089, 1, 0
        %v5106 = vsel %vm5090, 1, 0
        %v5107 = vsel %vm5091, 1, 0
        %v5108 = vsel %vm5092, 1, 0
        %v5109 = vsel %vm5093, 1, 0
        %v5110 = vsel %vm5094, 1, 0
        %v5111 = vsel %vm5095, 1, 0
        %v5112 = vsel %vm5096, 1, 0
        %v5113 = vsel %vm5097, 1, 0
        %v5114 = vsel %vm5098, 1, 0
        %v5115 = vsel %vm5099, 1, 0
        %v5116 = vsel %vm5100, 1, 0
        %v5117 = vsel %vm5101, 1, 0
        %v5118 = vsel %vm5102, 1, 0
        %v5119 = vcvt.s32.f32 %v5103
        %v5120 = vcvt.s32.f32 %v5104
        %v5121 = vcvt.s32.f32 %v5105
        %v5122 = vcvt.s32.f32 %v5106
        %v5123 = vcvt.s32.f32 %v5107
        %v5124 = vcvt.s32.f32 %v5108
        %v5125 = vcvt.s32.f32 %v5109
        %v5126 = vcvt.s32.f32 %v5110
        %v5127 = vcvt.s32.f32 %v5111
        %v5128 = vcvt.s32.f32 %v5112
        %v5129 = vcvt.s32.f32 %v5113
        %v5130 = vcvt.s32.f32 %v5114
        %v5131 = vcvt.s32.f32 %v5115
        %v5132 = vcvt.s32.f32 %v5116
        %v5133 = vcvt.s32.f32 %v5117
        %v5134 = vcvt.s32.f32 %v5118
        %v5135 = vmul.f32 %v5119, %v625
        %v5136 = vmul.f32 %v5120, %v630
        %v5137 = vmul.f32 %v5121, %v635
        %v5138 = vmul.f32 %v5122, %v640
        %v5139 = vmul.f32 %v5123, %v645
        %v5140 = vmul.f32 %v5124, %v650
        %v5141 = vmul.f32 %v5125, %v655
        %v5142 = vmul.f32 %v5126, %v660
        %v5143 = vmul.f32 %v5127, %v665
        %v5144 = vmul.f32 %v5128, %v670
        %v5145 = vmul.f32 %v5129, %v675
        %v5146 = vmul.f32 %v5130, %v680
        %v5147 = vmul.f32 %v5131, %v685
        %v5148 = vmul.f32 %v5132, %v690
        %v5149 = vmul.f32 %v5133, %v695
        %v5150 = vmul.f32 %v5134, %v700
        %v5151 = vsel %vm364, %v5135, 0.0
        %5152 = vadd.xlane.f32.xlu0 %v5151
        %v5153 = vpop.xlane.xlu0 %5152
        %v5154 = vsel %vm364, %v5136, 0.0
        %5155 = vadd.xlane.f32.xlu0 %v5154
        %v5156 = vpop.xlane.xlu0 %5155
        %v5157 = vsel %vm364, %v5137, 0.0
        %5158 = vadd.xlane.f32.xlu0 %v5157
        %v5159 = vpop.xlane.xlu0 %5158
        %v5160 = vsel %vm364, %v5138, 0.0
        %5161 = vadd.xlane.f32.xlu0 %v5160
        %v5162 = vpop.xlane.xlu0 %5161
        %v5163 = vsel %vm364, %v5139, 0.0
        %5164 = vadd.xlane.f32.xlu0 %v5163
        %v5165 = vpop.xlane.xlu0 %5164
        %v5166 = vsel %vm364, %v5140, 0.0
        %5167 = vadd.xlane.f32.xlu0 %v5166
        %v5168 = vpop.xlane.xlu0 %5167
        %v5169 = vsel %vm364, %v5141, 0.0
        %5170 = vadd.xlane.f32.xlu0 %v5169
        %v5171 = vpop.xlane.xlu0 %5170
        %v5172 = vsel %vm364, %v5142, 0.0
        %5173 = vadd.xlane.f32.xlu0 %v5172
        %v5174 = vpop.xlane.xlu0 %5173
        %v5175 = vsel %vm364, %v5143, 0.0
        %5176 = vadd.xlane.f32.xlu0 %v5175
        %v5177 = vpop.xlane.xlu0 %5176
        %v5178 = vsel %vm364, %v5144, 0.0
        %5179 = vadd.xlane.f32.xlu0 %v5178
        %v5180 = vpop.xlane.xlu0 %5179
        %v5181 = vsel %vm364, %v5145, 0.0
        %5182 = vadd.xlane.f32.xlu0 %v5181
        %v5183 = vpop.xlane.xlu0 %5182
        %v5184 = vsel %vm364, %v5146, 0.0
        %5185 = vadd.xlane.f32.xlu0 %v5184
        %v5186 = vpop.xlane.xlu0 %5185
        %v5187 = vsel %vm364, %v5147, 0.0
        %5188 = vadd.xlane.f32.xlu0 %v5187
        %v5189 = vpop.xlane.xlu0 %5188
        %v5190 = vsel %vm364, %v5148, 0.0
        %5191 = vadd.xlane.f32.xlu0 %v5190
        %v5192 = vpop.xlane.xlu0 %5191
        %v5193 = vsel %vm364, %v5149, 0.0
        %5194 = vadd.xlane.f32.xlu0 %v5193
        %v5195 = vpop.xlane.xlu0 %5194
        %v5196 = vsel %vm364, %v5150, 0.0
        %5197 = vadd.xlane.f32.xlu0 %v5196
        %v5198 = vpop.xlane.xlu0 %5197
        %v5199 = vsub.f32 0.0, %v5153
        %v5200 = vsub.f32 0.0, %v5156
        %v5201 = vsub.f32 0.0, %v5159
        %v5202 = vsub.f32 0.0, %v5162
        %v5203 = vsub.f32 0.0, %v5165
        %v5204 = vsub.f32 0.0, %v5168
        %v5205 = vsub.f32 0.0, %v5171
        %v5206 = vsub.f32 0.0, %v5174
        %v5207 = vsub.f32 0.0, %v5177
        %v5208 = vsub.f32 0.0, %v5180
        %v5209 = vsub.f32 0.0, %v5183
        %v5210 = vsub.f32 0.0, %v5186
        %v5211 = vsub.f32 0.0, %v5189
        %v5212 = vsub.f32 0.0, %v5192
        %v5213 = vsub.f32 0.0, %v5195
        %v5214 = vsub.f32 0.0, %v5198
        %v5215 = vmin.f32 %v5199, 0.0
        %v5216 = vmin.f32 %v5200, 0.0
        %v5217 = vmin.f32 %v5201, 0.0
        %v5218 = vmin.f32 %v5202, 0.0
        %v5219 = vmin.f32 %v5203, 0.0
        %v5220 = vmin.f32 %v5204, 0.0
        %v5221 = vmin.f32 %v5205, 0.0
        %v5222 = vmin.f32 %v5206, 0.0
        %v5223 = vmin.f32 %v5207, 0.0
        %v5224 = vmin.f32 %v5208, 0.0
        %v5225 = vmin.f32 %v5209, 0.0
        %v5226 = vmin.f32 %v5210, 0.0
        %v5227 = vmin.f32 %v5211, 0.0
        %v5228 = vmin.f32 %v5212, 0.0
        %v5229 = vmin.f32 %v5213, 0.0
        %v5230 = vmin.f32 %v5214, 0.0
        %v5231 = vand.u32 2147483647, %v5199
        %v5232 = vand.u32 2147483647, %v5200
        %v5233 = vand.u32 2147483647, %v5201
        %v5234 = vand.u32 2147483647, %v5202
        %v5235 = vand.u32 2147483647, %v5203
        %v5236 = vand.u32 2147483647, %v5204
        %v5237 = vand.u32 2147483647, %v5205
        %v5238 = vand.u32 2147483647, %v5206
        %v5239 = vand.u32 2147483647, %v5207
        %v5240 = vand.u32 2147483647, %v5208
        %v5241 = vand.u32 2147483647, %v5209
        %v5242 = vand.u32 2147483647, %v5210
        %v5243 = vand.u32 2147483647, %v5211
        %v5244 = vand.u32 2147483647, %v5212
        %v5245 = vand.u32 2147483647, %v5213
        %v5246 = vand.u32 2147483647, %v5214
        %v5247 = vsub.f32 0.0, %v5231
        %v5248 = vsub.f32 0.0, %v5232
        %v5249 = vsub.f32 0.0, %v5233
        %v5250 = vsub.f32 0.0, %v5234
        %v5251 = vsub.f32 0.0, %v5235
        %v5252 = vsub.f32 0.0, %v5236
        %v5253 = vsub.f32 0.0, %v5237
        %v5254 = vsub.f32 0.0, %v5238
        %v5255 = vsub.f32 0.0, %v5239
        %v5256 = vsub.f32 0.0, %v5240
        %v5257 = vsub.f32 0.0, %v5241
        %v5258 = vsub.f32 0.0, %v5242
        %v5259 = vsub.f32 0.0, %v5243
        %v5260 = vsub.f32 0.0, %v5244
        %v5261 = vsub.f32 0.0, %v5245
        %v5262 = vsub.f32 0.0, %v5246
        %v5263 = vmul.f32 %v5247, 1.442695
        %v5264 = vpow.pop %v5263
        %v5265 = vmul.f32 %v5248, 1.442695
        %v5266 = vpow.pop %v5265
        %v5267 = vmul.f32 %v5249, 1.442695
        %v5268 = vpow.pop %v5267
        %v5269 = vmul.f32 %v5250, 1.442695
        %v5270 = vpow.pop %v5269
        %v5271 = vmul.f32 %v5251, 1.442695
        %v5272 = vpow.pop %v5271
        %v5273 = vmul.f32 %v5252, 1.442695
        %v5274 = vpow.pop %v5273
        %v5275 = vmul.f32 %v5253, 1.442695
        %v5276 = vpow.pop %v5275
        %v5277 = vmul.f32 %v5254, 1.442695
        %v5278 = vpow.pop %v5277
        %v5279 = vmul.f32 %v5255, 1.442695
        %v5280 = vpow.pop %v5279
        %v5281 = vmul.f32 %v5256, 1.442695
        %v5282 = vpow.pop %v5281
        %v5283 = vmul.f32 %v5257, 1.442695
        %v5284 = vpow.pop %v5283
        %v5285 = vmul.f32 %v5258, 1.442695
        %v5286 = vpow.pop %v5285
        %v5287 = vmul.f32 %v5259, 1.442695
        %v5288 = vpow.pop %v5287
        %v5289 = vmul.f32 %v5260, 1.442695
        %v5290 = vpow.pop %v5289
        %v5291 = vmul.f32 %v5261, 1.442695
        %v5292 = vpow.pop %v5291
        %v5293 = vmul.f32 %v5262, 1.442695
        %v5294 = vpow.pop %v5293
        %v5295 = vadd.f32 %v5264, 1.0
        %v5296 = vlog2.pop %v5295
        %v5297 = vmul.f32 %v5296, 0.6931472
        %v5298 = vmul.f32 -0.5, %v5264
        %v5299 = vadd.f32 %v5298, 1.0
        %v5300 = vmul.f32 %v5299, %v5264
        %v5301 = vand.u32 2147483647, %v5264
        %vm5302 = vcmp.lt.f32.partialorder %v5301, 0.0004427343
        %v5303 = vsel %vm5302, %v5300, %v5297
        %v5304 = vadd.f32 %v5266, 1.0
        %v5305 = vlog2.pop %v5304
        %v5306 = vmul.f32 %v5305, 0.6931472
        %v5307 = vmul.f32 -0.5, %v5266
        %v5308 = vadd.f32 %v5307, 1.0
        %v5309 = vmul.f32 %v5308, %v5266
        %v5310 = vand.u32 2147483647, %v5266
        %vm5311 = vcmp.lt.f32.partialorder %v5310, 0.0004427343
        %v5312 = vsel %vm5311, %v5309, %v5306
        %v5313 = vadd.f32 %v5268, 1.0
        %v5314 = vlog2.pop %v5313
        %v5315 = vmul.f32 %v5314, 0.6931472
        %v5316 = vmul.f32 -0.5, %v5268
        %v5317 = vadd.f32 %v5316, 1.0
        %v5318 = vmul.f32 %v5317, %v5268
        %v5319 = vand.u32 2147483647, %v5268
        %vm5320 = vcmp.lt.f32.partialorder %v5319, 0.0004427343
        %v5321 = vsel %vm5320, %v5318, %v5315
        %v5322 = vadd.f32 %v5270, 1.0
        %v5323 = vlog2.pop %v5322
        %v5324 = vmul.f32 %v5323, 0.6931472
        %v5325 = vmul.f32 -0.5, %v5270
        %v5326 = vadd.f32 %v5325, 1.0
        %v5327 = vmul.f32 %v5326, %v5270
        %v5328 = vand.u32 2147483647, %v5270
        %vm5329 = vcmp.lt.f32.partialorder %v5328, 0.0004427343
        %v5330 = vsel %vm5329, %v5327, %v5324
        %v5331 = vadd.f32 %v5272, 1.0
        %v5332 = vlog2.pop %v5331
        %v5333 = vmul.f32 %v5332, 0.6931472
        %v5334 = vmul.f32 -0.5, %v5272
        %v5335 = vadd.f32 %v5334, 1.0
        %v5336 = vmul.f32 %v5335, %v5272
        %v5337 = vand.u32 2147483647, %v5272
        %vm5338 = vcmp.lt.f32.partialorder %v5337, 0.0004427343
        %v5339 = vsel %vm5338, %v5336, %v5333
        %v5340 = vadd.f32 %v5274, 1.0
        %v5341 = vlog2.pop %v5340
        %v5342 = vmul.f32 %v5341, 0.6931472
        %v5343 = vmul.f32 -0.5, %v5274
        %v5344 = vadd.f32 %v5343, 1.0
        %v5345 = vmul.f32 %v5344, %v5274
        %v5346 = vand.u32 2147483647, %v5274
        %vm5347 = vcmp.lt.f32.partialorder %v5346, 0.0004427343
        %v5348 = vsel %vm5347, %v5345, %v5342
        %v5349 = vadd.f32 %v5276, 1.0
        %v5350 = vlog2.pop %v5349
        %v5351 = vmul.f32 %v5350, 0.6931472
        %v5352 = vmul.f32 -0.5, %v5276
        %v5353 = vadd.f32 %v5352, 1.0
        %v5354 = vmul.f32 %v5353, %v5276
        %v5355 = vand.u32 2147483647, %v5276
        %vm5356 = vcmp.lt.f32.partialorder %v5355, 0.0004427343
        %v5357 = vsel %vm5356, %v5354, %v5351
        %v5358 = vadd.f32 %v5278, 1.0
        %v5359 = vlog2.pop %v5358
        %v5360 = vmul.f32 %v5359, 0.6931472
        %v5361 = vmul.f32 -0.5, %v5278
        %v5362 = vadd.f32 %v5361, 1.0
        %v5363 = vmul.f32 %v5362, %v5278
        %v5364 = vand.u32 2147483647, %v5278
        %vm5365 = vcmp.lt.f32.partialorder %v5364, 0.0004427343
        %v5366 = vsel %vm5365, %v5363, %v5360
        %v5367 = vadd.f32 %v5280, 1.0
        %v5368 = vlog2.pop %v5367
        %v5369 = vmul.f32 %v5368, 0.6931472
        %v5370 = vmul.f32 -0.5, %v5280
        %v5371 = vadd.f32 %v5370, 1.0
        %v5372 = vmul.f32 %v5371, %v5280
        %v5373 = vand.u32 2147483647, %v5280
        %vm5374 = vcmp.lt.f32.partialorder %v5373, 0.0004427343
        %v5375 = vsel %vm5374, %v5372, %v5369
        %v5376 = vadd.f32 %v5282, 1.0
        %v5377 = vlog2.pop %v5376
        %v5378 = vmul.f32 %v5377, 0.6931472
        %v5379 = vmul.f32 -0.5, %v5282
        %v5380 = vadd.f32 %v5379, 1.0
        %v5381 = vmul.f32 %v5380, %v5282
        %v5382 = vand.u32 2147483647, %v5282
        %vm5383 = vcmp.lt.f32.partialorder %v5382, 0.0004427343
        %v5384 = vsel %vm5383, %v5381, %v5378
        %v5385 = vadd.f32 %v5284, 1.0
        %v5386 = vlog2.pop %v5385
        %v5387 = vmul.f32 %v5386, 0.6931472
        %v5388 = vmul.f32 -0.5, %v5284
        %v5389 = vadd.f32 %v5388, 1.0
        %v5390 = vmul.f32 %v5389, %v5284
        %v5391 = vand.u32 2147483647, %v5284
        %vm5392 = vcmp.lt.f32.partialorder %v5391, 0.0004427343
        %v5393 = vsel %vm5392, %v5390, %v5387
        %v5394 = vadd.f32 %v5286, 1.0
        %v5395 = vlog2.pop %v5394
        %v5396 = vmul.f32 %v5395, 0.6931472
        %v5397 = vmul.f32 -0.5, %v5286
        %v5398 = vadd.f32 %v5397, 1.0
        %v5399 = vmul.f32 %v5398, %v5286
        %v5400 = vand.u32 2147483647, %v5286
        %vm5401 = vcmp.lt.f32.partialorder %v5400, 0.0004427343
        %v5402 = vsel %vm5401, %v5399, %v5396
        %v5403 = vadd.f32 %v5288, 1.0
        %v5404 = vlog2.pop %v5403
        %v5405 = vmul.f32 %v5404, 0.6931472
        %v5406 = vmul.f32 -0.5, %v5288
        %v5407 = vadd.f32 %v5406, 1.0
        %v5408 = vmul.f32 %v5407, %v5288
        %v5409 = vand.u32 2147483647, %v5288
        %vm5410 = vcmp.lt.f32.partialorder %v5409, 0.0004427343
        %v5411 = vsel %vm5410, %v5408, %v5405
        %v5412 = vadd.f32 %v5290, 1.0
        %v5413 = vlog2.pop %v5412
        %v5414 = vmul.f32 %v5413, 0.6931472
        %v5415 = vmul.f32 -0.5, %v5290
        %v5416 = vadd.f32 %v5415, 1.0
        %v5417 = vmul.f32 %v5416, %v5290
        %v5418 = vand.u32 2147483647, %v5290
        %vm5419 = vcmp.lt.f32.partialorder %v5418, 0.0004427343
        %v5420 = vsel %vm5419, %v5417, %v5414
        %v5421 = vadd.f32 %v5292, 1.0
        %v5422 = vlog2.pop %v5421
        %v5423 = vmul.f32 %v5422, 0.6931472
        %v5424 = vmul.f32 -0.5, %v5292
        %v5425 = vadd.f32 %v5424, 1.0
        %v5426 = vmul.f32 %v5425, %v5292
        %v5427 = vand.u32 2147483647, %v5292
        %vm5428 = vcmp.lt.f32.partialorder %v5427, 0.0004427343
        %v5429 = vsel %vm5428, %v5426, %v5423
        %v5430 = vadd.f32 %v5294, 1.0
        %v5431 = vlog2.pop %v5430
        %v5432 = vmul.f32 %v5431, 0.6931472
        %v5433 = vmul.f32 -0.5, %v5294
        %v5434 = vadd.f32 %v5433, 1.0
        %v5435 = vmul.f32 %v5434, %v5294
        %v5436 = vand.u32 2147483647, %v5294
        %vm5437 = vcmp.lt.f32.partialorder %v5436, 0.0004427343
        %v5438 = vsel %vm5437, %v5435, %v5432
        %v5439 = vsub.f32 %v5215, %v5303
        %v5440 = vsub.f32 %v5216, %v5312
        %v5441 = vsub.f32 %v5217, %v5321
        %v5442 = vsub.f32 %v5218, %v5330
        %v5443 = vsub.f32 %v5219, %v5339
        %v5444 = vsub.f32 %v5220, %v5348
        %v5445 = vsub.f32 %v5221, %v5357
        %v5446 = vsub.f32 %v5222, %v5366
        %v5447 = vsub.f32 %v5223, %v5375
        %v5448 = vsub.f32 %v5224, %v5384
        %v5449 = vsub.f32 %v5225, %v5393
        %v5450 = vsub.f32 %v5226, %v5402
        %v5451 = vsub.f32 %v5227, %v5411
        %v5452 = vsub.f32 %v5228, %v5420
        %v5453 = vsub.f32 %v5229, %v5429
        %v5454 = vsub.f32 %v5230, %v5438
        %v5455 = vsub.f32 %v5023, %v5439
        %v5456 = vsub.f32 %v5024, %v5440
        %v5457 = vsub.f32 %v5025, %v5441
        %v5458 = vsub.f32 %v5026, %v5442
        %v5459 = vsub.f32 %v5027, %v5443
        %v5460 = vsub.f32 %v5028, %v5444
        %v5461 = vsub.f32 %v5029, %v5445
        %v5462 = vsub.f32 %v5030, %v5446
        %v5463 = vsub.f32 %v5031, %v5447
        %v5464 = vsub.f32 %v5032, %v5448
        %v5465 = vsub.f32 %v5033, %v5449
        %v5466 = vsub.f32 %v5034, %v5450
        %v5467 = vsub.f32 %v5035, %v5451
        %v5468 = vsub.f32 %v5036, %v5452
        %v5469 = vsub.f32 %v5037, %v5453
        %v5470 = vsub.f32 %v5038, %v5454
        %vm5471 = vcmask 7168
        %v5472 = vsel %vm5471, %v5455, 0.0
        %v5473 = vsel %vm5471, %v5456, 0.0
        %v5474 = vadd.f32 %v5472, %v5473
        %v5475 = vsel %vm5471, %v5457, 0.0
        %v5476 = vadd.f32 %v5474, %v5475
        %v5477 = vsel %vm5471, %v5458, 0.0
        %v5478 = vadd.f32 %v5476, %v5477
        %v5479 = vsel %vm5471, %v5459, 0.0
        %v5480 = vadd.f32 %v5478, %v5479
        %v5481 = vsel %vm5471, %v5460, 0.0
        %v5482 = vadd.f32 %v5480, %v5481
        %v5483 = vsel %vm5471, %v5461, 0.0
        %v5484 = vadd.f32 %v5482, %v5483
        %v5485 = vsel %vm5471, %v5462, 0.0
        %v5486 = vadd.f32 %v5484, %v5485
        %v5487 = vsel %vm5471, %v5463, 0.0
        %v5488 = vadd.f32 %v5486, %v5487
        %v5489 = vsel %vm5471, %v5464, 0.0
        %v5490 = vadd.f32 %v5488, %v5489
        %v5491 = vsel %vm5471, %v5465, 0.0
        %v5492 = vadd.f32 %v5490, %v5491
        %v5493 = vsel %vm5471, %v5466, 0.0
        %v5494 = vadd.f32 %v5492, %v5493
        %v5495 = vsel %vm5471, %v5467, 0.0
        %v5496 = vadd.f32 %v5494, %v5495
        %v5497 = vsel %vm5471, %v5468, 0.0
        %v5498 = vadd.f32 %v5496, %v5497
        %v5499 = vsel %vm5471, %v5469, 0.0
        %v5500 = vadd.f32 %v5498, %v5499
        %v5501 = vsel %vm5471, %v5470, 0.0
        %v5502 = vadd.f32 %v5500, %v5501
        %5503 = vadd.xlane.f32.xlu0 %v5502
        %v5504 = vpop.xlane.xlu0 %5503
        %v5505 = vrot.slane %v5504, 4
        %v5506 = vadd.f32 %v5504, %v5505
        %v5507 = vrot.slane %v5506, 2
        %v5508 = vadd.f32 %v5506, %v5507
        %v5509 = vrot.slane %v5508, 1
        %v5510 = vadd.f32 %v5508, %v5509
        %s5511 = vtos %v5510
        %v5512 = vstv %s5511
        %5513 = vst [vmem:[%s223] sm:$0xff] %v5512
        %s5514 = sand.u32 %s125, 1
        %s5515 = scalar_lea.sflag [#allocation3], %s5514
        %s5516 = sand.u32 %s125, 1
        %s5517 = smul.addr %s5516, 8
        %s5518 = scalar_lea.vmem [#allocation2], %s5517
        // Predicated region
        $region37: #{tpu_custom_call.1} parent=35 // pred_check
          %p5519 = pneg %p135
        $region38: #{tpu_custom_call.1} parent=35 // pred_check_branch
          %5521 = sbr.rel (%p5519) target = $region40
        $region39: #{tpu_custom_call.1} parent=35 // pred_region
          %s5523 = ssub.s32 128, 128
          %5524 = vsyncadd %s5515, %s5523
          %s5525 = smul.addr %s18, 128
          %s5526 = scalar_lea.hbm %s4, %s5525
          %s5528 = sshll.u32 %s5518, 4
          %s5529 = int_to_ptr.vmem [resolvable:$true] %s5528
          %5531 = dma.vmem_to_hbm [thread:$0]  %s5529, 128, %s5526, %s5515
        $region40: #{tpu_custom_call.1} parent=35 // pred_fallthru
          _
      $region36: #{tpu_custom_call.1} parent=5 // pred_fallthru
        _
      %p5532 = scmp.le.s32.totalorder 2, %s13
      // Predicated region
      $region41: #{tpu_custom_call.1} parent=5 // pred_check
        %p5533 = pneg %p5532
      $region42: #{tpu_custom_call.1} parent=5 // pred_check_branch
        %5535 = sbr.rel (%p5533) target = $region44
      $region43: #{tpu_custom_call.1} parent=5 // pred_region
        %s5536 = ssub.s32 %s13, 2
        // Predicated region
        $region45: #{tpu_custom_call.1} parent=43 // pred_check
          %p5537 = pneg %p141
        $region46: #{tpu_custom_call.1} parent=43 // pred_check_branch
          %5539 = sbr.rel (%p5537) target = $region48
        $region47: #{tpu_custom_call.1} parent=43 // pred_region
          %s5540 = sand.u32 %s126, 1
          %s5541 = scalar_lea.sflag [#allocation3], %s5540
          %s5542 = sand.u32 %s126, 1
          %s5543 = smul.addr %s5542, 8
          %s5544 = scalar_lea.vmem [#allocation2], %s5543
          %5545 = dma.done %s5541, 128
        $region48: #{tpu_custom_call.1} parent=43 // pred_fallthru
          _
      $region44: #{tpu_custom_call.1} parent=5 // pred_fallthru
        _
    $region6: #{tpu_custom_call.1} parent=1 // loop_footer
      %s17 = sadd.s32 1, %s13
    $region7: #{tpu_custom_call.1} parent=1 // loop_footer_branch
      %12 = sbr.rel target = $region3
    $region8: #{tpu_custom_call.1} parent=1 // loop_exit
      _
    %5546 = vsyncpa [#allocation3], 1
    %s5547 = scalar_lea.sflag [#allocation3], 1
    %5548 = vsyncpa %s5547, 1

</llo_original>
